<compile_context>
chip_gen: v5e
topology: v5e:2x2
jax: 0.10.0
libtpu: 0.0.40
codegen_flags: <defaults>
</compile_context>

<pallas_src>
import jax
import jax.numpy as jnp
from jax import lax
from jax.experimental import pallas as pl
from jax.experimental.pallas import tpu as pltpu

HIDDEN = 10    # hidden_size fixed to 10 in the reference module
HP = 128       # per-gate lane padding (one full 128-lane block per gate)
GP = 4 * HP    # padded gate width (i|f|g|o blocks)


def lstm_fc_kernel(idx_ref, table_ref, w_ih1_ref, w_hh1_ref, b1_ref,
                   w_ih2_ref, w_hh2_ref, b2_ref, w_fc_ref, b_fc_ref, out_ref):
    TB = idx_ref.shape[0]                 # T*B, row = t*B + b (time-major)
    V, E = table_ref.shape
    B, H = out_ref.shape
    T = TB // B

    # ---- Fused embedding gather: one-hot compare + MXU matmul (off the chain) ----
    idx = idx_ref[...]                                            # (T*B, 1) int32
    vocab_iota = lax.broadcasted_iota(jnp.int32, (TB, V), 1)
    onehot = (vocab_iota == idx).astype(jnp.float32)              # (T*B, V)
    x = jnp.dot(onehot, table_ref[...],
                preferred_element_type=jnp.float32)               # (T*B, E), time-major

    # ---- Hoisted layer-1 input projection (bias folded), time-major ----
    g1_2d = (jnp.dot(x, w_ih1_ref[...], preferred_element_type=jnp.float32)
             + b1_ref[...])                                       # (T*B, 4*HP)
    # Pre-slice per-step slabs ONCE (static row slices, independent of the recurrence).
    g1_steps = [g1_2d[t * B:(t + 1) * B, :] for t in range(T)]

    w_hh1 = w_hh1_ref[...]                                        # (HP, 4*HP)
    w_ih2 = w_ih2_ref[...]                                        # (HP, 4*HP)
    w_hh2 = w_hh2_ref[...]                                        # (HP, 4*HP)
    b2b = jnp.broadcast_to(b2_ref[...], (B, GP))                  # hoisted broadcast

    def gates_to_hc(gates, c):
        # One sigmoid over the full padded gate vector + one tanh on the g block:
        # 2 dependent EUP round-trips instead of 4; all slices are 128-lane aligned.
        s = jax.nn.sigmoid(gates)
        i = s[:, 0 * HP:1 * HP]
        f = s[:, 1 * HP:2 * HP]
        o = s[:, 3 * HP:4 * HP]
        g = jnp.tanh(gates[:, 2 * HP:3 * HP])
        c_new = f * c + i * g
        h_new = o * jnp.tanh(c_new)
        return h_new, c_new

    h1 = jnp.zeros((B, HP), jnp.float32)
    c1 = jnp.zeros((B, HP), jnp.float32)
    h2 = jnp.zeros((B, HP), jnp.float32)
    c2 = jnp.zeros((B, HP), jnp.float32)
    m = None

    # Fully unrolled time recurrence (T small & static) so the scheduler interleaves
    # MXU pushes / EUP transcendentals / VPU work across steps.
    # TODO(synk): if a bundle dump shows spill vst/vld at larger T, switch to
    # lax.fori_loop(..., unroll=True) to bound live ranges.
    for t in range(T):
        # Layer 1: only the recurrent matmul + add remain on the serial chain.
        gates1 = g1_steps[t] + jnp.dot(h1, w_hh1, preferred_element_type=jnp.float32)
        h1, c1 = gates_to_hc(gates1, c1)
        # Layer 2: two independent MXU pushes (no per-step concat on the chain).
        gates2 = (jnp.dot(h1, w_ih2, preferred_element_type=jnp.float32)
                  + jnp.dot(h2, w_hh2, preferred_element_type=jnp.float32)
                  + b2b)
        h2, c2 = gates_to_hc(gates2, c2)
        # Running max over time == AdaptiveMaxPool1d(1); padded lanes stay 0.
        m = h2 if m is None else jnp.maximum(m, h2)

    # TODO(synk): Dropout(0.5) omitted — identity (inference/eval semantics only).
    out_ref[...] = (jnp.dot(m, w_fc_ref[...], preferred_element_type=jnp.float32)
                    + b_fc_ref[...]).astype(out_ref.dtype)


def init_params(key, vocab_size, embed_dim, num_class):
    # num_class is unused by the reference forward (fc is hidden -> hidden).
    # NOTE: weights are stored in math layout (in, 4H) and biases pre-summed
    # (b_ih + b_hh); a raw PyTorch state_dict needs the same transpose/fold.
    H = HIDDEN
    ks = jax.random.split(key, 9)

    def u(k, shape, scale=0.1):
        return jax.random.uniform(k, shape, jnp.float32, -scale, scale)

    return {
        "embedding": u(ks[0], (vocab_size, embed_dim), 1.0),
        "w_ih1": u(ks[1], (embed_dim, 4 * H)),
        "w_hh1": u(ks[2], (H, 4 * H)),
        "b1":    u(ks[3], (1, 4 * H)),      # b_ih_l0 + b_hh_l0 folded
        "w_ih2": u(ks[4], (H, 4 * H)),
        "w_hh2": u(ks[5], (H, 4 * H)),
        "b2":    u(ks[6], (1, 4 * H)),      # b_ih_l1 + b_hh_l1 folded
        "w_fc":  u(ks[7], (H, H)),
        "b_fc":  u(ks[8], (1, H)),
    }


def prepare_kernel_params(params):
    """One-time packing: pad each gate into its own 128-lane block and pad the
    hidden (row) dimension of recurrent / layer-2 / fc weights to 128.
    Padded rows/cols are zero, so padded h/c lanes stay exactly zero."""
    H = HIDDEN

    def pad_gate_cols(w):                       # (in, 4H) -> (in, 4*HP)
        out = jnp.zeros((w.shape[0], GP), jnp.float32)
        for g in range(4):
            out = out.at[:, g * HP:g * HP + H].set(w[:, g * H:(g + 1) * H])
        return out

    def pad_rows(w):                            # (H, n) -> (HP, n)
        out = jnp.zeros((HP,) + w.shape[1:], jnp.float32)
        return out.at[:w.shape[0]].set(w)

    return {
        "table": params["embedding"].astype(jnp.float32),      # (V, E)
        "w_ih1": pad_gate_cols(params["w_ih1"]),               # (E, 512)
        "w_hh1": pad_rows(pad_gate_cols(params["w_hh1"])),     # (128, 512)
        "b1":    pad_gate_cols(params["b1"]),                  # (1, 512)
        "w_ih2": pad_rows(pad_gate_cols(params["w_ih2"])),     # (128, 512)
        "w_hh2": pad_rows(pad_gate_cols(params["w_hh2"])),     # (128, 512)
        "b2":    pad_gate_cols(params["b2"]),                  # (1, 512)
        "w_fc":  pad_rows(params["w_fc"]),                     # (128, 10)
        "b_fc":  params["b_fc"].astype(jnp.float32),           # (1, 10)
    }


@jax.jit
def lstm_model_forward(text, kparams):
    B, T = text.shape
    H = HIDDEN
    # Time-major flat indices (row = t*B + b): the kernel's per-step slab becomes a
    # hoisted static row slice instead of a per-step sublane gather.
    idx = jnp.transpose(text).reshape(T * B, 1).astype(jnp.int32)

    args = (idx, kparams["table"],
            kparams["w_ih1"], kparams["w_hh1"], kparams["b1"],
            kparams["w_ih2"], kparams["w_hh2"], kparams["b2"],
            kparams["w_fc"], kparams["b_fc"])

    vmem = pl.BlockSpec(memory_space=pltpu.MemorySpace.VMEM)
    # TODO(synk): at real batch sizes add a batch grid axis with
    # dimension_semantics=("parallel",) (uses both v7x TensorCores and tiles the
    # hoisted projection for the 64 MiB VMEM budget); gridless is right at B*T=16.
    return pl.pallas_call(
        lstm_fc_kernel,
        out_shape=jax.ShapeDtypeStruct((B, H), jnp.float32),
        in_specs=[vmem] * len(args),
        out_specs=vmem,
    )(*args)


def lstm_model_reference(text, params):
    """Pure-JAX reference (unpadded math layout) for correctness checking."""
    H = HIDDEN
    emb = params["embedding"][text].astype(jnp.float32)      # (B, T, E)
    B, T, E = emb.shape

    def cell(x, h, c, w_ih, w_hh, b):
        gates = x @ w_ih + h @ w_hh + b
        i = jax.nn.sigmoid(gates[:, 0 * H:1 * H])
        f = jax.nn.sigmoid(gates[:, 1 * H:2 * H])
        g = jnp.tanh(gates[:, 2 * H:3 * H])
        o = jax.nn.sigmoid(gates[:, 3 * H:4 * H])
        c = f * c + i * g
        return o * jnp.tanh(c), c

    h1 = c1 = h2 = c2 = jnp.zeros((B, H), jnp.float32)
    outs = []
    for t in range(T):
        h1, c1 = cell(emb[:, t, :], h1, c1, params["w_ih1"], params["w_hh1"], params["b1"])
        h2, c2 = cell(h1, h2, c2, params["w_ih2"], params["w_hh2"], params["b2"])
        outs.append(h2)
    m = jnp.max(jnp.stack(outs, axis=1), axis=1)             # AdaptiveMaxPool1d(1)
    return m @ params["w_fc"] + params["b_fc"]


if __name__ == "__main__":
    vocab_size, embed_dim, num_class = 50, 16, 4
    B, T = 2, 8

    key = jax.random.PRNGKey(0)
    pkey, tkey = jax.random.split(key)
    params = init_params(pkey, vocab_size, embed_dim, num_class)
    kparams = prepare_kernel_params(params)        # one-time padding / packing
    text = jax.random.randint(tkey, (B, T), 0, vocab_size, dtype=jnp.int32)

    out = lstm_model_forward(text, kparams)
    jax.block_until_ready(out)

    assert out.shape == (B, HIDDEN) and out.dtype == jnp.float32
    assert bool(jnp.all(jnp.isfinite(out)))

    ref = lstm_model_reference(text, params)
    assert bool(jnp.allclose(out, ref, atol=1e-2, rtol=1e-2))

    print("KERNEL_OK")
</pallas_src>

<mosaic_0001>
module attributes {stable_mosaic.version = 11 : i64} {
  func.func @lstm_fc_kernel(%arg0: memref<16x1xi32, #tpu.memory_space<vmem>>, %arg1: memref<50x16xf32, #tpu.memory_space<vmem>>, %arg2: memref<16x512xf32, #tpu.memory_space<vmem>>, %arg3: memref<128x512xf32, #tpu.memory_space<vmem>>, %arg4: memref<1x512xf32, #tpu.memory_space<vmem>>, %arg5: memref<128x512xf32, #tpu.memory_space<vmem>>, %arg6: memref<128x512xf32, #tpu.memory_space<vmem>>, %arg7: memref<1x512xf32, #tpu.memory_space<vmem>>, %arg8: memref<128x10xf32, #tpu.memory_space<vmem>>, %arg9: memref<1x10xf32, #tpu.memory_space<vmem>>, %arg10: memref<2x10xf32, #tpu.memory_space<vmem>>) attributes {dimension_semantics = [], scalar_prefetch = 0 : i64, scratch_operands = 0 : i64, tpu.core_type = #tpu.core_type<tc>} {
    %c0 = arith.constant 0 : index
    %c0_0 = arith.constant 0 : index
    %0 = vector.load %arg0[%c0, %c0_0] : memref<16x1xi32, #tpu.memory_space<vmem>>, vector<16x1xi32>
    %1 = tpu.iota {dimensions = array<i32: 1>} : vector<16x50xi32>
    %2 = vector.broadcast %0 : vector<16x1xi32> to vector<16x50xi32>
    %3 = arith.cmpi eq, %1, %2 : vector<16x50xi32>
    %4 = arith.extui %3 : vector<16x50xi1> to vector<16x50xi32>
    %5 = arith.sitofp %4 : vector<16x50xi32> to vector<16x50xf32>
    %c0_1 = arith.constant 0 : index
    %c0_2 = arith.constant 0 : index
    %6 = vector.load %arg1[%c0_1, %c0_2] : memref<50x16xf32, #tpu.memory_space<vmem>>, vector<50x16xf32>
    %cst = arith.constant dense<0.000000e+00> : vector<16x16xf32>
    %7 = tpu.matmul %5, %6, %cst {dimension_numbers = #tpu.dot_dimension_numbers<[1], [0], [0], [1], [0, 0, 1, 1], [], []>} : vector<16x50xf32>, vector<50x16xf32>, vector<16x16xf32> -> vector<16x16xf32>
    %c0_3 = arith.constant 0 : index
    %c0_4 = arith.constant 0 : index
    %8 = vector.load %arg2[%c0_3, %c0_4] : memref<16x512xf32, #tpu.memory_space<vmem>>, vector<16x512xf32>
    %cst_5 = arith.constant dense<0.000000e+00> : vector<16x512xf32>
    %9 = tpu.matmul %7, %8, %cst_5 {dimension_numbers = #tpu.dot_dimension_numbers<[1], [0], [0], [1], [0, 0, 1, 1], [], []>} : vector<16x16xf32>, vector<16x512xf32>, vector<16x512xf32> -> vector<16x512xf32>
    %c0_6 = arith.constant 0 : index
    %c0_7 = arith.constant 0 : index
    %10 = vector.load %arg4[%c0_6, %c0_7] : memref<1x512xf32, #tpu.memory_space<vmem>>, vector<1x512xf32>
    %11 = vector.broadcast %10 : vector<1x512xf32> to vector<16x512xf32>
    %12 = arith.addf %9, %11 : vector<16x512xf32>
    %13 = vector.extract_strided_slice %12 {offsets = [0, 0], sizes = [2, 512], strides = [1, 1]} : vector<16x512xf32> to vector<2x512xf32>
    %14 = vector.extract_strided_slice %12 {offsets = [2, 0], sizes = [2, 512], strides = [1, 1]} : vector<16x512xf32> to vector<2x512xf32>
    %15 = vector.extract_strided_slice %12 {offsets = [4, 0], sizes = [2, 512], strides = [1, 1]} : vector<16x512xf32> to vector<2x512xf32>
    %16 = vector.extract_strided_slice %12 {offsets = [6, 0], sizes = [2, 512], strides = [1, 1]} : vector<16x512xf32> to vector<2x512xf32>
    %17 = vector.extract_strided_slice %12 {offsets = [8, 0], sizes = [2, 512], strides = [1, 1]} : vector<16x512xf32> to vector<2x512xf32>
    %18 = vector.extract_strided_slice %12 {offsets = [10, 0], sizes = [2, 512], strides = [1, 1]} : vector<16x512xf32> to vector<2x512xf32>
    %19 = vector.extract_strided_slice %12 {offsets = [12, 0], sizes = [2, 512], strides = [1, 1]} : vector<16x512xf32> to vector<2x512xf32>
    %20 = vector.extract_strided_slice %12 {offsets = [14, 0], sizes = [2, 512], strides = [1, 1]} : vector<16x512xf32> to vector<2x512xf32>
    %c0_8 = arith.constant 0 : index
    %c0_9 = arith.constant 0 : index
    %21 = vector.load %arg3[%c0_8, %c0_9] : memref<128x512xf32, #tpu.memory_space<vmem>>, vector<128x512xf32>
    %c0_10 = arith.constant 0 : index
    %c0_11 = arith.constant 0 : index
    %22 = vector.load %arg5[%c0_10, %c0_11] : memref<128x512xf32, #tpu.memory_space<vmem>>, vector<128x512xf32>
    %c0_12 = arith.constant 0 : index
    %c0_13 = arith.constant 0 : index
    %23 = vector.load %arg6[%c0_12, %c0_13] : memref<128x512xf32, #tpu.memory_space<vmem>>, vector<128x512xf32>
    %c0_14 = arith.constant 0 : index
    %c0_15 = arith.constant 0 : index
    %24 = vector.load %arg7[%c0_14, %c0_15] : memref<1x512xf32, #tpu.memory_space<vmem>>, vector<1x512xf32>
    %25 = vector.shape_cast %24 : vector<1x512xf32> to vector<1x512xf32>
    %26 = vector.broadcast %25 : vector<1x512xf32> to vector<2x512xf32>
    %cst_16 = arith.constant 0.000000e+00 : f32
    %27 = vector.broadcast %cst_16 : f32 to vector<2x128xf32>
    %cst_17 = arith.constant 0.000000e+00 : f32
    %28 = vector.broadcast %cst_17 : f32 to vector<2x128xf32>
    %cst_18 = arith.constant 0.000000e+00 : f32
    %29 = vector.broadcast %cst_18 : f32 to vector<2x128xf32>
    %cst_19 = arith.constant 0.000000e+00 : f32
    %30 = vector.broadcast %cst_19 : f32 to vector<2x128xf32>
    %cst_20 = arith.constant dense<0.000000e+00> : vector<2x512xf32>
    %31 = tpu.matmul %27, %21, %cst_20 {dimension_numbers = #tpu.dot_dimension_numbers<[1], [0], [0], [1], [0, 0, 1, 1], [], []>} : vector<2x128xf32>, vector<128x512xf32>, vector<2x512xf32> -> vector<2x512xf32>
    %32 = arith.addf %13, %31 : vector<2x512xf32>
    %33 = arith.negf %32 : vector<2x512xf32>
    %34 = math.exp %33 : vector<2x512xf32>
    %cst_21 = arith.constant 1.000000e+00 : f32
    %35 = vector.broadcast %cst_21 : f32 to vector<2x512xf32>
    %36 = arith.addf %35, %34 : vector<2x512xf32>
    %37 = arith.divf %35, %36 : vector<2x512xf32>
    %38 = vector.extract_strided_slice %37 {offsets = [0, 0], sizes = [2, 128], strides = [1, 1]} : vector<2x512xf32> to vector<2x128xf32>
    %39 = vector.extract_strided_slice %37 {offsets = [0, 128], sizes = [2, 128], strides = [1, 1]} : vector<2x512xf32> to vector<2x128xf32>
    %40 = vector.extract_strided_slice %37 {offsets = [0, 384], sizes = [2, 128], strides = [1, 1]} : vector<2x512xf32> to vector<2x128xf32>
    %41 = vector.extract_strided_slice %32 {offsets = [0, 256], sizes = [2, 128], strides = [1, 1]} : vector<2x512xf32> to vector<2x128xf32>
    %42 = math.tanh %41 : vector<2x128xf32>
    %43 = arith.mulf %39, %28 : vector<2x128xf32>
    %44 = arith.mulf %38, %42 : vector<2x128xf32>
    %45 = arith.addf %43, %44 : vector<2x128xf32>
    %46 = math.tanh %45 : vector<2x128xf32>
    %47 = arith.mulf %40, %46 : vector<2x128xf32>
    %cst_22 = arith.constant dense<0.000000e+00> : vector<2x512xf32>
    %48 = tpu.matmul %47, %22, %cst_22 {dimension_numbers = #tpu.dot_dimension_numbers<[1], [0], [0], [1], [0, 0, 1, 1], [], []>} : vector<2x128xf32>, vector<128x512xf32>, vector<2x512xf32> -> vector<2x512xf32>
    %cst_23 = arith.constant dense<0.000000e+00> : vector<2x512xf32>
    %49 = tpu.matmul %29, %23, %cst_23 {dimension_numbers = #tpu.dot_dimension_numbers<[1], [0], [0], [1], [0, 0, 1, 1], [], []>} : vector<2x128xf32>, vector<128x512xf32>, vector<2x512xf32> -> vector<2x512xf32>
    %50 = arith.addf %48, %49 : vector<2x512xf32>
    %51 = arith.addf %50, %26 : vector<2x512xf32>
    %52 = arith.negf %51 : vector<2x512xf32>
    %53 = math.exp %52 : vector<2x512xf32>
    %cst_24 = arith.constant 1.000000e+00 : f32
    %54 = vector.broadcast %cst_24 : f32 to vector<2x512xf32>
    %55 = arith.addf %54, %53 : vector<2x512xf32>
    %56 = arith.divf %54, %55 : vector<2x512xf32>
    %57 = vector.extract_strided_slice %56 {offsets = [0, 0], sizes = [2, 128], strides = [1, 1]} : vector<2x512xf32> to vector<2x128xf32>
    %58 = vector.extract_strided_slice %56 {offsets = [0, 128], sizes = [2, 128], strides = [1, 1]} : vector<2x512xf32> to vector<2x128xf32>
    %59 = vector.extract_strided_slice %56 {offsets = [0, 384], sizes = [2, 128], strides = [1, 1]} : vector<2x512xf32> to vector<2x128xf32>
    %60 = vector.extract_strided_slice %51 {offsets = [0, 256], sizes = [2, 128], strides = [1, 1]} : vector<2x512xf32> to vector<2x128xf32>
    %61 = math.tanh %60 : vector<2x128xf32>
    %62 = arith.mulf %58, %30 : vector<2x128xf32>
    %63 = arith.mulf %57, %61 : vector<2x128xf32>
    %64 = arith.addf %62, %63 : vector<2x128xf32>
    %65 = math.tanh %64 : vector<2x128xf32>
    %66 = arith.mulf %59, %65 : vector<2x128xf32>
    %cst_25 = arith.constant dense<0.000000e+00> : vector<2x512xf32>
    %67 = tpu.matmul %47, %21, %cst_25 {dimension_numbers = #tpu.dot_dimension_numbers<[1], [0], [0], [1], [0, 0, 1, 1], [], []>} : vector<2x128xf32>, vector<128x512xf32>, vector<2x512xf32> -> vector<2x512xf32>
    %68 = arith.addf %14, %67 : vector<2x512xf32>
    %69 = arith.negf %68 : vector<2x512xf32>
    %70 = math.exp %69 : vector<2x512xf32>
    %cst_26 = arith.constant 1.000000e+00 : f32
    %71 = vector.broadcast %cst_26 : f32 to vector<2x512xf32>
    %72 = arith.addf %71, %70 : vector<2x512xf32>
    %73 = arith.divf %71, %72 : vector<2x512xf32>
    %74 = vector.extract_strided_slice %73 {offsets = [0, 0], sizes = [2, 128], strides = [1, 1]} : vector<2x512xf32> to vector<2x128xf32>
    %75 = vector.extract_strided_slice %73 {offsets = [0, 128], sizes = [2, 128], strides = [1, 1]} : vector<2x512xf32> to vector<2x128xf32>
    %76 = vector.extract_strided_slice %73 {offsets = [0, 384], sizes = [2, 128], strides = [1, 1]} : vector<2x512xf32> to vector<2x128xf32>
    %77 = vector.extract_strided_slice %68 {offsets = [0, 256], sizes = [2, 128], strides = [1, 1]} : vector<2x512xf32> to vector<2x128xf32>
    %78 = math.tanh %77 : vector<2x128xf32>
    %79 = arith.mulf %75, %45 : vector<2x128xf32>
    %80 = arith.mulf %74, %78 : vector<2x128xf32>
    %81 = arith.addf %79, %80 : vector<2x128xf32>
    %82 = math.tanh %81 : vector<2x128xf32>
    %83 = arith.mulf %76, %82 : vector<2x128xf32>
    %cst_27 = arith.constant dense<0.000000e+00> : vector<2x512xf32>
    %84 = tpu.matmul %83, %22, %cst_27 {dimension_numbers = #tpu.dot_dimension_numbers<[1], [0], [0], [1], [0, 0, 1, 1], [], []>} : vector<2x128xf32>, vector<128x512xf32>, vector<2x512xf32> -> vector<2x512xf32>
    %cst_28 = arith.constant dense<0.000000e+00> : vector<2x512xf32>
    %85 = tpu.matmul %66, %23, %cst_28 {dimension_numbers = #tpu.dot_dimension_numbers<[1], [0], [0], [1], [0, 0, 1, 1], [], []>} : vector<2x128xf32>, vector<128x512xf32>, vector<2x512xf32> -> vector<2x512xf32>
    %86 = arith.addf %84, %85 : vector<2x512xf32>
    %87 = arith.addf %86, %26 : vector<2x512xf32>
    %88 = arith.negf %87 : vector<2x512xf32>
    %89 = math.exp %88 : vector<2x512xf32>
    %cst_29 = arith.constant 1.000000e+00 : f32
    %90 = vector.broadcast %cst_29 : f32 to vector<2x512xf32>
    %91 = arith.addf %90, %89 : vector<2x512xf32>
    %92 = arith.divf %90, %91 : vector<2x512xf32>
    %93 = vector.extract_strided_slice %92 {offsets = [0, 0], sizes = [2, 128], strides = [1, 1]} : vector<2x512xf32> to vector<2x128xf32>
    %94 = vector.extract_strided_slice %92 {offsets = [0, 128], sizes = [2, 128], strides = [1, 1]} : vector<2x512xf32> to vector<2x128xf32>
    %95 = vector.extract_strided_slice %92 {offsets = [0, 384], sizes = [2, 128], strides = [1, 1]} : vector<2x512xf32> to vector<2x128xf32>
    %96 = vector.extract_strided_slice %87 {offsets = [0, 256], sizes = [2, 128], strides = [1, 1]} : vector<2x512xf32> to vector<2x128xf32>
    %97 = math.tanh %96 : vector<2x128xf32>
    %98 = arith.mulf %94, %64 : vector<2x128xf32>
    %99 = arith.mulf %93, %97 : vector<2x128xf32>
    %100 = arith.addf %98, %99 : vector<2x128xf32>
    %101 = math.tanh %100 : vector<2x128xf32>
    %102 = arith.mulf %95, %101 : vector<2x128xf32>
    %103 = arith.maximumf %66, %102 : vector<2x128xf32>
    %cst_30 = arith.constant dense<0.000000e+00> : vector<2x512xf32>
    %104 = tpu.matmul %83, %21, %cst_30 {dimension_numbers = #tpu.dot_dimension_numbers<[1], [0], [0], [1], [0, 0, 1, 1], [], []>} : vector<2x128xf32>, vector<128x512xf32>, vector<2x512xf32> -> vector<2x512xf32>
    %105 = arith.addf %15, %104 : vector<2x512xf32>
    %106 = arith.negf %105 : vector<2x512xf32>
    %107 = math.exp %106 : vector<2x512xf32>
    %cst_31 = arith.constant 1.000000e+00 : f32
    %108 = vector.broadcast %cst_31 : f32 to vector<2x512xf32>
    %109 = arith.addf %108, %107 : vector<2x512xf32>
    %110 = arith.divf %108, %109 : vector<2x512xf32>
    %111 = vector.extract_strided_slice %110 {offsets = [0, 0], sizes = [2, 128], strides = [1, 1]} : vector<2x512xf32> to vector<2x128xf32>
    %112 = vector.extract_strided_slice %110 {offsets = [0, 128], sizes = [2, 128], strides = [1, 1]} : vector<2x512xf32> to vector<2x128xf32>
    %113 = vector.extract_strided_slice %110 {offsets = [0, 384], sizes = [2, 128], strides = [1, 1]} : vector<2x512xf32> to vector<2x128xf32>
    %114 = vector.extract_strided_slice %105 {offsets = [0, 256], sizes = [2, 128], strides = [1, 1]} : vector<2x512xf32> to vector<2x128xf32>
    %115 = math.tanh %114 : vector<2x128xf32>
    %116 = arith.mulf %112, %81 : vector<2x128xf32>
    %117 = arith.mulf %111, %115 : vector<2x128xf32>
    %118 = arith.addf %116, %117 : vector<2x128xf32>
    %119 = math.tanh %118 : vector<2x128xf32>
    %120 = arith.mulf %113, %119 : vector<2x128xf32>
    %cst_32 = arith.constant dense<0.000000e+00> : vector<2x512xf32>
    %121 = tpu.matmul %120, %22, %cst_32 {dimension_numbers = #tpu.dot_dimension_numbers<[1], [0], [0], [1], [0, 0, 1, 1], [], []>} : vector<2x128xf32>, vector<128x512xf32>, vector<2x512xf32> -> vector<2x512xf32>
    %cst_33 = arith.constant dense<0.000000e+00> : vector<2x512xf32>
    %122 = tpu.matmul %102, %23, %cst_33 {dimension_numbers = #tpu.dot_dimension_numbers<[1], [0], [0], [1], [0, 0, 1, 1], [], []>} : vector<2x128xf32>, vector<128x512xf32>, vector<2x512xf32> -> vector<2x512xf32>
    %123 = arith.addf %121, %122 : vector<2x512xf32>
    %124 = arith.addf %123, %26 : vector<2x512xf32>
    %125 = arith.negf %124 : vector<2x512xf32>
    %126 = math.exp %125 : vector<2x512xf32>
    %cst_34 = arith.constant 1.000000e+00 : f32
    %127 = vector.broadcast %cst_34 : f32 to vector<2x512xf32>
    %128 = arith.addf %127, %126 : vector<2x512xf32>
    %129 = arith.divf %127, %128 : vector<2x512xf32>
    %130 = vector.extract_strided_slice %129 {offsets = [0, 0], sizes = [2, 128], strides = [1, 1]} : vector<2x512xf32> to vector<2x128xf32>
    %131 = vector.extract_strided_slice %129 {offsets = [0, 128], sizes = [2, 128], strides = [1, 1]} : vector<2x512xf32> to vector<2x128xf32>
    %132 = vector.extract_strided_slice %129 {offsets = [0, 384], sizes = [2, 128], strides = [1, 1]} : vector<2x512xf32> to vector<2x128xf32>
    %133 = vector.extract_strided_slice %124 {offsets = [0, 256], sizes = [2, 128], strides = [1, 1]} : vector<2x512xf32> to vector<2x128xf32>
    %134 = math.tanh %133 : vector<2x128xf32>
    %135 = arith.mulf %131, %100 : vector<2x128xf32>
    %136 = arith.mulf %130, %134 : vector<2x128xf32>
    %137 = arith.addf %135, %136 : vector<2x128xf32>
    %138 = math.tanh %137 : vector<2x128xf32>
    %139 = arith.mulf %132, %138 : vector<2x128xf32>
    %140 = arith.maximumf %103, %139 : vector<2x128xf32>
    %cst_35 = arith.constant dense<0.000000e+00> : vector<2x512xf32>
    %141 = tpu.matmul %120, %21, %cst_35 {dimension_numbers = #tpu.dot_dimension_numbers<[1], [0], [0], [1], [0, 0, 1, 1], [], []>} : vector<2x128xf32>, vector<128x512xf32>, vector<2x512xf32> -> vector<2x512xf32>
    %142 = arith.addf %16, %141 : vector<2x512xf32>
    %143 = arith.negf %142 : vector<2x512xf32>
    %144 = math.exp %143 : vector<2x512xf32>
    %cst_36 = arith.constant 1.000000e+00 : f32
    %145 = vector.broadcast %cst_36 : f32 to vector<2x512xf32>
    %146 = arith.addf %145, %144 : vector<2x512xf32>
    %147 = arith.divf %145, %146 : vector<2x512xf32>
    %148 = vector.extract_strided_slice %147 {offsets = [0, 0], sizes = [2, 128], strides = [1, 1]} : vector<2x512xf32> to vector<2x128xf32>
    %149 = vector.extract_strided_slice %147 {offsets = [0, 128], sizes = [2, 128], strides = [1, 1]} : vector<2x512xf32> to vector<2x128xf32>
    %150 = vector.extract_strided_slice %147 {offsets = [0, 384], sizes = [2, 128], strides = [1, 1]} : vector<2x512xf32> to vector<2x128xf32>
    %151 = vector.extract_strided_slice %142 {offsets = [0, 256], sizes = [2, 128], strides = [1, 1]} : vector<2x512xf32> to vector<2x128xf32>
    %152 = math.tanh %151 : vector<2x128xf32>
    %153 = arith.mulf %149, %118 : vector<2x128xf32>
    %154 = arith.mulf %148, %152 : vector<2x128xf32>
    %155 = arith.addf %153, %154 : vector<2x128xf32>
    %156 = math.tanh %155 : vector<2x128xf32>
    %157 = arith.mulf %150, %156 : vector<2x128xf32>
    %cst_37 = arith.constant dense<0.000000e+00> : vector<2x512xf32>
    %158 = tpu.matmul %157, %22, %cst_37 {dimension_numbers = #tpu.dot_dimension_numbers<[1], [0], [0], [1], [0, 0, 1, 1], [], []>} : vector<2x128xf32>, vector<128x512xf32>, vector<2x512xf32> -> vector<2x512xf32>
    %cst_38 = arith.constant dense<0.000000e+00> : vector<2x512xf32>
    %159 = tpu.matmul %139, %23, %cst_38 {dimension_numbers = #tpu.dot_dimension_numbers<[1], [0], [0], [1], [0, 0, 1, 1], [], []>} : vector<2x128xf32>, vector<128x512xf32>, vector<2x512xf32> -> vector<2x512xf32>
    %160 = arith.addf %158, %159 : vector<2x512xf32>
    %161 = arith.addf %160, %26 : vector<2x512xf32>
    %162 = arith.negf %161 : vector<2x512xf32>
    %163 = math.exp %162 : vector<2x512xf32>
    %cst_39 = arith.constant 1.000000e+00 : f32
    %164 = vector.broadcast %cst_39 : f32 to vector<2x512xf32>
    %165 = arith.addf %164, %163 : vector<2x512xf32>
    %166 = arith.divf %164, %165 : vector<2x512xf32>
    %167 = vector.extract_strided_slice %166 {offsets = [0, 0], sizes = [2, 128], strides = [1, 1]} : vector<2x512xf32> to vector<2x128xf32>
    %168 = vector.extract_strided_slice %166 {offsets = [0, 128], sizes = [2, 128], strides = [1, 1]} : vector<2x512xf32> to vector<2x128xf32>
    %169 = vector.extract_strided_slice %166 {offsets = [0, 384], sizes = [2, 128], strides = [1, 1]} : vector<2x512xf32> to vector<2x128xf32>
    %170 = vector.extract_strided_slice %161 {offsets = [0, 256], sizes = [2, 128], strides = [1, 1]} : vector<2x512xf32> to vector<2x128xf32>
    %171 = math.tanh %170 : vector<2x128xf32>
    %172 = arith.mulf %168, %137 : vector<2x128xf32>
    %173 = arith.mulf %167, %171 : vector<2x128xf32>
    %174 = arith.addf %172, %173 : vector<2x128xf32>
    %175 = math.tanh %174 : vector<2x128xf32>
    %176 = arith.mulf %169, %175 : vector<2x128xf32>
    %177 = arith.maximumf %140, %176 : vector<2x128xf32>
    %cst_40 = arith.constant dense<0.000000e+00> : vector<2x512xf32>
    %178 = tpu.matmul %157, %21, %cst_40 {dimension_numbers = #tpu.dot_dimension_numbers<[1], [0], [0], [1], [0, 0, 1, 1], [], []>} : vector<2x128xf32>, vector<128x512xf32>, vector<2x512xf32> -> vector<2x512xf32>
    %179 = arith.addf %17, %178 : vector<2x512xf32>
    %180 = arith.negf %179 : vector<2x512xf32>
    %181 = math.exp %180 : vector<2x512xf32>
    %cst_41 = arith.constant 1.000000e+00 : f32
    %182 = vector.broadcast %cst_41 : f32 to vector<2x512xf32>
    %183 = arith.addf %182, %181 : vector<2x512xf32>
    %184 = arith.divf %182, %183 : vector<2x512xf32>
    %185 = vector.extract_strided_slice %184 {offsets = [0, 0], sizes = [2, 128], strides = [1, 1]} : vector<2x512xf32> to vector<2x128xf32>
    %186 = vector.extract_strided_slice %184 {offsets = [0, 128], sizes = [2, 128], strides = [1, 1]} : vector<2x512xf32> to vector<2x128xf32>
    %187 = vector.extract_strided_slice %184 {offsets = [0, 384], sizes = [2, 128], strides = [1, 1]} : vector<2x512xf32> to vector<2x128xf32>
    %188 = vector.extract_strided_slice %179 {offsets = [0, 256], sizes = [2, 128], strides = [1, 1]} : vector<2x512xf32> to vector<2x128xf32>
    %189 = math.tanh %188 : vector<2x128xf32>
    %190 = arith.mulf %186, %155 : vector<2x128xf32>
    %191 = arith.mulf %185, %189 : vector<2x128xf32>
    %192 = arith.addf %190, %191 : vector<2x128xf32>
    %193 = math.tanh %192 : vector<2x128xf32>
    %194 = arith.mulf %187, %193 : vector<2x128xf32>
    %cst_42 = arith.constant dense<0.000000e+00> : vector<2x512xf32>
    %195 = tpu.matmul %194, %22, %cst_42 {dimension_numbers = #tpu.dot_dimension_numbers<[1], [0], [0], [1], [0, 0, 1, 1], [], []>} : vector<2x128xf32>, vector<128x512xf32>, vector<2x512xf32> -> vector<2x512xf32>
    %cst_43 = arith.constant dense<0.000000e+00> : vector<2x512xf32>
    %196 = tpu.matmul %176, %23, %cst_43 {dimension_numbers = #tpu.dot_dimension_numbers<[1], [0], [0], [1], [0, 0, 1, 1], [], []>} : vector<2x128xf32>, vector<128x512xf32>, vector<2x512xf32> -> vector<2x512xf32>
    %197 = arith.addf %195, %196 : vector<2x512xf32>
    %198 = arith.addf %197, %26 : vector<2x512xf32>
    %199 = arith.negf %198 : vector<2x512xf32>
    %200 = math.exp %199 : vector<2x512xf32>
    %cst_44 = arith.constant 1.000000e+00 : f32
    %201 = vector.broadcast %cst_44 : f32 to vector<2x512xf32>
    %202 = arith.addf %201, %200 : vector<2x512xf32>
    %203 = arith.divf %201, %202 : vector<2x512xf32>
    %204 = vector.extract_strided_slice %203 {offsets = [0, 0], sizes = [2, 128], strides = [1, 1]} : vector<2x512xf32> to vector<2x128xf32>
    %205 = vector.extract_strided_slice %203 {offsets = [0, 128], sizes = [2, 128], strides = [1, 1]} : vector<2x512xf32> to vector<2x128xf32>
    %206 = vector.extract_strided_slice %203 {offsets = [0, 384], sizes = [2, 128], strides = [1, 1]} : vector<2x512xf32> to vector<2x128xf32>
    %207 = vector.extract_strided_slice %198 {offsets = [0, 256], sizes = [2, 128], strides = [1, 1]} : vector<2x512xf32> to vector<2x128xf32>
    %208 = math.tanh %207 : vector<2x128xf32>
    %209 = arith.mulf %205, %174 : vector<2x128xf32>
    %210 = arith.mulf %204, %208 : vector<2x128xf32>
    %211 = arith.addf %209, %210 : vector<2x128xf32>
    %212 = math.tanh %211 : vector<2x128xf32>
    %213 = arith.mulf %206, %212 : vector<2x128xf32>
    %214 = arith.maximumf %177, %213 : vector<2x128xf32>
    %cst_45 = arith.constant dense<0.000000e+00> : vector<2x512xf32>
    %215 = tpu.matmul %194, %21, %cst_45 {dimension_numbers = #tpu.dot_dimension_numbers<[1], [0], [0], [1], [0, 0, 1, 1], [], []>} : vector<2x128xf32>, vector<128x512xf32>, vector<2x512xf32> -> vector<2x512xf32>
    %216 = arith.addf %18, %215 : vector<2x512xf32>
    %217 = arith.negf %216 : vector<2x512xf32>
    %218 = math.exp %217 : vector<2x512xf32>
    %cst_46 = arith.constant 1.000000e+00 : f32
    %219 = vector.broadcast %cst_46 : f32 to vector<2x512xf32>
    %220 = arith.addf %219, %218 : vector<2x512xf32>
    %221 = arith.divf %219, %220 : vector<2x512xf32>
    %222 = vector.extract_strided_slice %221 {offsets = [0, 0], sizes = [2, 128], strides = [1, 1]} : vector<2x512xf32> to vector<2x128xf32>
    %223 = vector.extract_strided_slice %221 {offsets = [0, 128], sizes = [2, 128], strides = [1, 1]} : vector<2x512xf32> to vector<2x128xf32>
    %224 = vector.extract_strided_slice %221 {offsets = [0, 384], sizes = [2, 128], strides = [1, 1]} : vector<2x512xf32> to vector<2x128xf32>
    %225 = vector.extract_strided_slice %216 {offsets = [0, 256], sizes = [2, 128], strides = [1, 1]} : vector<2x512xf32> to vector<2x128xf32>
    %226 = math.tanh %225 : vector<2x128xf32>
    %227 = arith.mulf %223, %192 : vector<2x128xf32>
    %228 = arith.mulf %222, %226 : vector<2x128xf32>
    %229 = arith.addf %227, %228 : vector<2x128xf32>
    %230 = math.tanh %229 : vector<2x128xf32>
    %231 = arith.mulf %224, %230 : vector<2x128xf32>
    %cst_47 = arith.constant dense<0.000000e+00> : vector<2x512xf32>
    %232 = tpu.matmul %231, %22, %cst_47 {dimension_numbers = #tpu.dot_dimension_numbers<[1], [0], [0], [1], [0, 0, 1, 1], [], []>} : vector<2x128xf32>, vector<128x512xf32>, vector<2x512xf32> -> vector<2x512xf32>
    %cst_48 = arith.constant dense<0.000000e+00> : vector<2x512xf32>
    %233 = tpu.matmul %213, %23, %cst_48 {dimension_numbers = #tpu.dot_dimension_numbers<[1], [0], [0], [1], [0, 0, 1, 1], [], []>} : vector<2x128xf32>, vector<128x512xf32>, vector<2x512xf32> -> vector<2x512xf32>
    %234 = arith.addf %232, %233 : vector<2x512xf32>
    %235 = arith.addf %234, %26 : vector<2x512xf32>
    %236 = arith.negf %235 : vector<2x512xf32>
    %237 = math.exp %236 : vector<2x512xf32>
    %cst_49 = arith.constant 1.000000e+00 : f32
    %238 = vector.broadcast %cst_49 : f32 to vector<2x512xf32>
    %239 = arith.addf %238, %237 : vector<2x512xf32>
    %240 = arith.divf %238, %239 : vector<2x512xf32>
    %241 = vector.extract_strided_slice %240 {offsets = [0, 0], sizes = [2, 128], strides = [1, 1]} : vector<2x512xf32> to vector<2x128xf32>
    %242 = vector.extract_strided_slice %240 {offsets = [0, 128], sizes = [2, 128], strides = [1, 1]} : vector<2x512xf32> to vector<2x128xf32>
    %243 = vector.extract_strided_slice %240 {offsets = [0, 384], sizes = [2, 128], strides = [1, 1]} : vector<2x512xf32> to vector<2x128xf32>
    %244 = vector.extract_strided_slice %235 {offsets = [0, 256], sizes = [2, 128], strides = [1, 1]} : vector<2x512xf32> to vector<2x128xf32>
    %245 = math.tanh %244 : vector<2x128xf32>
    %246 = arith.mulf %242, %211 : vector<2x128xf32>
    %247 = arith.mulf %241, %245 : vector<2x128xf32>
    %248 = arith.addf %246, %247 : vector<2x128xf32>
    %249 = math.tanh %248 : vector<2x128xf32>
    %250 = arith.mulf %243, %249 : vector<2x128xf32>
    %251 = arith.maximumf %214, %250 : vector<2x128xf32>
    %cst_50 = arith.constant dense<0.000000e+00> : vector<2x512xf32>
    %252 = tpu.matmul %231, %21, %cst_50 {dimension_numbers = #tpu.dot_dimension_numbers<[1], [0], [0], [1], [0, 0, 1, 1], [], []>} : vector<2x128xf32>, vector<128x512xf32>, vector<2x512xf32> -> vector<2x512xf32>
    %253 = arith.addf %19, %252 : vector<2x512xf32>
    %254 = arith.negf %253 : vector<2x512xf32>
    %255 = math.exp %254 : vector<2x512xf32>
    %cst_51 = arith.constant 1.000000e+00 : f32
    %256 = vector.broadcast %cst_51 : f32 to vector<2x512xf32>
    %257 = arith.addf %256, %255 : vector<2x512xf32>
    %258 = arith.divf %256, %257 : vector<2x512xf32>
    %259 = vector.extract_strided_slice %258 {offsets = [0, 0], sizes = [2, 128], strides = [1, 1]} : vector<2x512xf32> to vector<2x128xf32>
    %260 = vector.extract_strided_slice %258 {offsets = [0, 128], sizes = [2, 128], strides = [1, 1]} : vector<2x512xf32> to vector<2x128xf32>
    %261 = vector.extract_strided_slice %258 {offsets = [0, 384], sizes = [2, 128], strides = [1, 1]} : vector<2x512xf32> to vector<2x128xf32>
    %262 = vector.extract_strided_slice %253 {offsets = [0, 256], sizes = [2, 128], strides = [1, 1]} : vector<2x512xf32> to vector<2x128xf32>
    %263 = math.tanh %262 : vector<2x128xf32>
    %264 = arith.mulf %260, %229 : vector<2x128xf32>
    %265 = arith.mulf %259, %263 : vector<2x128xf32>
    %266 = arith.addf %264, %265 : vector<2x128xf32>
    %267 = math.tanh %266 : vector<2x128xf32>
    %268 = arith.mulf %261, %267 : vector<2x128xf32>
    %cst_52 = arith.constant dense<0.000000e+00> : vector<2x512xf32>
    %269 = tpu.matmul %268, %22, %cst_52 {dimension_numbers = #tpu.dot_dimension_numbers<[1], [0], [0], [1], [0, 0, 1, 1], [], []>} : vector<2x128xf32>, vector<128x512xf32>, vector<2x512xf32> -> vector<2x512xf32>
    %cst_53 = arith.constant dense<0.000000e+00> : vector<2x512xf32>
    %270 = tpu.matmul %250, %23, %cst_53 {dimension_numbers = #tpu.dot_dimension_numbers<[1], [0], [0], [1], [0, 0, 1, 1], [], []>} : vector<2x128xf32>, vector<128x512xf32>, vector<2x512xf32> -> vector<2x512xf32>
    %271 = arith.addf %269, %270 : vector<2x512xf32>
    %272 = arith.addf %271, %26 : vector<2x512xf32>
    %273 = arith.negf %272 : vector<2x512xf32>
    %274 = math.exp %273 : vector<2x512xf32>
    %cst_54 = arith.constant 1.000000e+00 : f32
    %275 = vector.broadcast %cst_54 : f32 to vector<2x512xf32>
    %276 = arith.addf %275, %274 : vector<2x512xf32>
    %277 = arith.divf %275, %276 : vector<2x512xf32>
    %278 = vector.extract_strided_slice %277 {offsets = [0, 0], sizes = [2, 128], strides = [1, 1]} : vector<2x512xf32> to vector<2x128xf32>
    %279 = vector.extract_strided_slice %277 {offsets = [0, 128], sizes = [2, 128], strides = [1, 1]} : vector<2x512xf32> to vector<2x128xf32>
    %280 = vector.extract_strided_slice %277 {offsets = [0, 384], sizes = [2, 128], strides = [1, 1]} : vector<2x512xf32> to vector<2x128xf32>
    %281 = vector.extract_strided_slice %272 {offsets = [0, 256], sizes = [2, 128], strides = [1, 1]} : vector<2x512xf32> to vector<2x128xf32>
    %282 = math.tanh %281 : vector<2x128xf32>
    %283 = arith.mulf %279, %248 : vector<2x128xf32>
    %284 = arith.mulf %278, %282 : vector<2x128xf32>
    %285 = arith.addf %283, %284 : vector<2x128xf32>
    %286 = math.tanh %285 : vector<2x128xf32>
    %287 = arith.mulf %280, %286 : vector<2x128xf32>
    %288 = arith.maximumf %251, %287 : vector<2x128xf32>
    %cst_55 = arith.constant dense<0.000000e+00> : vector<2x512xf32>
    %289 = tpu.matmul %268, %21, %cst_55 {dimension_numbers = #tpu.dot_dimension_numbers<[1], [0], [0], [1], [0, 0, 1, 1], [], []>} : vector<2x128xf32>, vector<128x512xf32>, vector<2x512xf32> -> vector<2x512xf32>
    %290 = arith.addf %20, %289 : vector<2x512xf32>
    %291 = arith.negf %290 : vector<2x512xf32>
    %292 = math.exp %291 : vector<2x512xf32>
    %cst_56 = arith.constant 1.000000e+00 : f32
    %293 = vector.broadcast %cst_56 : f32 to vector<2x512xf32>
    %294 = arith.addf %293, %292 : vector<2x512xf32>
    %295 = arith.divf %293, %294 : vector<2x512xf32>
    %296 = vector.extract_strided_slice %295 {offsets = [0, 0], sizes = [2, 128], strides = [1, 1]} : vector<2x512xf32> to vector<2x128xf32>
    %297 = vector.extract_strided_slice %295 {offsets = [0, 128], sizes = [2, 128], strides = [1, 1]} : vector<2x512xf32> to vector<2x128xf32>
    %298 = vector.extract_strided_slice %295 {offsets = [0, 384], sizes = [2, 128], strides = [1, 1]} : vector<2x512xf32> to vector<2x128xf32>
    %299 = vector.extract_strided_slice %290 {offsets = [0, 256], sizes = [2, 128], strides = [1, 1]} : vector<2x512xf32> to vector<2x128xf32>
    %300 = math.tanh %299 : vector<2x128xf32>
    %301 = arith.mulf %297, %266 : vector<2x128xf32>
    %302 = arith.mulf %296, %300 : vector<2x128xf32>
    %303 = arith.addf %301, %302 : vector<2x128xf32>
    %304 = math.tanh %303 : vector<2x128xf32>
    %305 = arith.mulf %298, %304 : vector<2x128xf32>
    %cst_57 = arith.constant dense<0.000000e+00> : vector<2x512xf32>
    %306 = tpu.matmul %305, %22, %cst_57 {dimension_numbers = #tpu.dot_dimension_numbers<[1], [0], [0], [1], [0, 0, 1, 1], [], []>} : vector<2x128xf32>, vector<128x512xf32>, vector<2x512xf32> -> vector<2x512xf32>
    %cst_58 = arith.constant dense<0.000000e+00> : vector<2x512xf32>
    %307 = tpu.matmul %287, %23, %cst_58 {dimension_numbers = #tpu.dot_dimension_numbers<[1], [0], [0], [1], [0, 0, 1, 1], [], []>} : vector<2x128xf32>, vector<128x512xf32>, vector<2x512xf32> -> vector<2x512xf32>
    %308 = arith.addf %306, %307 : vector<2x512xf32>
    %309 = arith.addf %308, %26 : vector<2x512xf32>
    %310 = arith.negf %309 : vector<2x512xf32>
    %311 = math.exp %310 : vector<2x512xf32>
    %cst_59 = arith.constant 1.000000e+00 : f32
    %312 = vector.broadcast %cst_59 : f32 to vector<2x512xf32>
    %313 = arith.addf %312, %311 : vector<2x512xf32>
    %314 = arith.divf %312, %313 : vector<2x512xf32>
    %315 = vector.extract_strided_slice %314 {offsets = [0, 0], sizes = [2, 128], strides = [1, 1]} : vector<2x512xf32> to vector<2x128xf32>
    %316 = vector.extract_strided_slice %314 {offsets = [0, 128], sizes = [2, 128], strides = [1, 1]} : vector<2x512xf32> to vector<2x128xf32>
    %317 = vector.extract_strided_slice %314 {offsets = [0, 384], sizes = [2, 128], strides = [1, 1]} : vector<2x512xf32> to vector<2x128xf32>
    %318 = vector.extract_strided_slice %309 {offsets = [0, 256], sizes = [2, 128], strides = [1, 1]} : vector<2x512xf32> to vector<2x128xf32>
    %319 = math.tanh %318 : vector<2x128xf32>
    %320 = arith.mulf %316, %285 : vector<2x128xf32>
    %321 = arith.mulf %315, %319 : vector<2x128xf32>
    %322 = arith.addf %320, %321 : vector<2x128xf32>
    %323 = math.tanh %322 : vector<2x128xf32>
    %324 = arith.mulf %317, %323 : vector<2x128xf32>
    %325 = arith.maximumf %288, %324 : vector<2x128xf32>
    %c0_60 = arith.constant 0 : index
    %c0_61 = arith.constant 0 : index
    %326 = vector.load %arg8[%c0_60, %c0_61] : memref<128x10xf32, #tpu.memory_space<vmem>>, vector<128x10xf32>
    %cst_62 = arith.constant dense<0.000000e+00> : vector<2x10xf32>
    %327 = tpu.matmul %325, %326, %cst_62 {dimension_numbers = #tpu.dot_dimension_numbers<[1], [0], [0], [1], [0, 0, 1, 1], [], []>} : vector<2x128xf32>, vector<128x10xf32>, vector<2x10xf32> -> vector<2x10xf32>
    %c0_63 = arith.constant 0 : index
    %c0_64 = arith.constant 0 : index
    %328 = vector.load %arg9[%c0_63, %c0_64] : memref<1x10xf32, #tpu.memory_space<vmem>>, vector<1x10xf32>
    %329 = vector.broadcast %328 : vector<1x10xf32> to vector<2x10xf32>
    %330 = arith.addf %327, %329 : vector<2x10xf32>
    %c0_65 = arith.constant 0 : index
    %c0_66 = arith.constant 0 : index
    %331 = vector.load %arg10[%c0_65, %c0_66] : memref<2x10xf32, #tpu.memory_space<vmem>>, vector<2x10xf32>
    tpu.vector_store %arg10[%c0_65, %c0_66], %330 {strides = array<i32>} : memref<2x10xf32, #tpu.memory_space<vmem>>, vector<2x10xf32>,
    return
  }
}

</mosaic_0001>

<llo_original>
// kernel: lstm_model_forward.1
$region0: #{lstm_model_forward.1}
  #allocation0 [shape = 'u32[]', space=smem, size = 0x4, offset = 0x4, fixed_abs, tag = 'smem constant byte address 0x4 - core index']
  #allocation1 [shape = 'u32[72,128]{1,0:T(1,128)}', space=vmem, size = 0x9000, scoped, tag = 'internal scratch']
  %s0 = inlined_call_operand.vmem [shape: s32[16,1], index: 0, kind: input, shape index: {}]
  %s1 = inlined_call_operand.vmem [shape: f32[50,16], index: 1, kind: input, shape index: {}]
  %s2 = inlined_call_operand.vmem [shape: f32[16,512], index: 2, kind: input, shape index: {}]
  %s3 = inlined_call_operand.hbm [shape: f32[128,512], index: 3, kind: input, shape index: {}]
  %s4 = inlined_call_operand.vmem [shape: f32[1,512], index: 4, kind: input, shape index: {}]
  %s5 = inlined_call_operand.hbm [shape: f32[128,512], index: 5, kind: input, shape index: {}]
  %s6 = inlined_call_operand.hbm [shape: f32[128,512], index: 6, kind: input, shape index: {}]
  %s7 = inlined_call_operand.vmem [shape: f32[1,512], index: 7, kind: input, shape index: {}]
  %s8 = inlined_call_operand.vmem [shape: f32[128,10], index: 8, kind: input, shape index: {}]
  %s9 = inlined_call_operand.vmem [shape: f32[1,10], index: 9, kind: input, shape index: {}]
  %s10 = inlined_call_operand.hbm [shape: f32[2,10], index: 10, kind: output, shape index: {}]
  %s11 = sld [smem:[#allocation0]]
  $region62: #{lstm_model_forward.1} parent=0
    _
  %s13 = ssub.s32 1, %s11
  %s14 = scalar_select 0, %s13, %s11
  $region1: #{lstm_model_forward.1} parent=0
    #allocation2 [shape = 'u8[262144]{0}', space=vmem, size = 0x40000, scoped, tag = 'input window, operand 3, single buffered']
    #allocation3 [shape = 's32[1]{0}', space=sflag, size = 0x4, scoped, tag = 'scoped memory for lstm_model_forward.1']
    #allocation4 [shape = 's32[1]{0}', space=sflag, size = 0x4, scoped, tag = 'scoped memory for lstm_model_forward.1']
    #allocation5 [shape = 'u8[262144]{0}', space=vmem, size = 0x40000, scoped, tag = 'input window, operand 5, single buffered']
    #allocation6 [shape = 's32[1]{0}', space=sflag, size = 0x4, scoped, tag = 'scoped memory for lstm_model_forward.1']
    #allocation7 [shape = 'u8[262144]{0}', space=vmem, size = 0x40000, scoped, tag = 'input window, operand 6, single buffered']
    #allocation8 [shape = 'u8[1024]{0}', space=vmem, size = 0x400, scoped, tag = 'output window, operand 0, single buffered']
    %15 = vsyncpa [#allocation3], 0
    %16 = vsyncpa [#allocation6], 0
    %17 = vsyncpa [#allocation4], 0
    // Predicated region
    $region2: #{lstm_model_forward.1} parent=1 // pred_check
      _
    $region3: #{lstm_model_forward.1} parent=1 // pred_check_branch
      %19 = sbr.rel (0) target = $region5
    $region4: #{lstm_model_forward.1} parent=1 // pred_region
      _
    $region5: #{lstm_model_forward.1} parent=1 // pred_fallthru
      _
    // Predicated region
    $region6: #{lstm_model_forward.1} parent=1 // pred_check
      _
    $region7: #{lstm_model_forward.1} parent=1 // pred_check_branch
      %21 = sbr.rel (0) target = $region9
    $region8: #{lstm_model_forward.1} parent=1 // pred_region
      _
    $region9: #{lstm_model_forward.1} parent=1 // pred_fallthru
      _
    // Predicated region
    $region10: #{lstm_model_forward.1} parent=1 // pred_check
      _
    $region11: #{lstm_model_forward.1} parent=1 // pred_check_branch
      %23 = sbr.rel (0) target = $region13
    $region12: #{lstm_model_forward.1} parent=1 // pred_region
      _
    $region13: #{lstm_model_forward.1} parent=1 // pred_fallthru
      _
    // Predicated region
    $region14: #{lstm_model_forward.1} parent=1 // pred_check
      _
    $region15: #{lstm_model_forward.1} parent=1 // pred_check_branch
      %25 = sbr.rel (0) target = $region17
    $region16: #{lstm_model_forward.1} parent=1 // pred_region
      %27 = vsyncadd [#allocation3], 0
      %s28 = sshll.u32 %s3, 4
      %s29 = int_to_ptr.hbm [resolvable:$true] %s28
      %s30 = sshll.u32 [#allocation2], 4
      %s31 = int_to_ptr.vmem [resolvable:$true] %s30
      %36 = dma.hbm_to_vmem [thread:$0]  %s29, 8192, %s31, [#allocation3], 512, 512, 32
    $region17: #{lstm_model_forward.1} parent=1 // pred_fallthru
      _
    // Predicated region
    $region18: #{lstm_model_forward.1} parent=1 // pred_check
      _
    $region19: #{lstm_model_forward.1} parent=1 // pred_check_branch
      %38 = sbr.rel (0) target = $region21
    $region20: #{lstm_model_forward.1} parent=1 // pred_region
      _
    $region21: #{lstm_model_forward.1} parent=1 // pred_fallthru
      _
    // Predicated region
    $region22: #{lstm_model_forward.1} parent=1 // pred_check
      _
    $region23: #{lstm_model_forward.1} parent=1 // pred_check_branch
      %40 = sbr.rel (0) target = $region25
    $region24: #{lstm_model_forward.1} parent=1 // pred_region
      %42 = vsyncadd [#allocation6], 0
      %s43 = sshll.u32 %s5, 4
      %s44 = int_to_ptr.hbm [resolvable:$true] %s43
      %s45 = sshll.u32 [#allocation5], 4
      %s46 = int_to_ptr.vmem [resolvable:$true] %s45
      %51 = dma.hbm_to_vmem [thread:$0]  %s44, 8192, %s46, [#allocation6], 512, 512, 32
    $region25: #{lstm_model_forward.1} parent=1 // pred_fallthru
      _
    // Predicated region
    $region26: #{lstm_model_forward.1} parent=1 // pred_check
      _
    $region27: #{lstm_model_forward.1} parent=1 // pred_check_branch
      %53 = sbr.rel (0) target = $region29
    $region28: #{lstm_model_forward.1} parent=1 // pred_region
      %55 = vsyncadd [#allocation6], 0
      %s56 = sshll.u32 %s6, 4
      %s57 = int_to_ptr.hbm [resolvable:$true] %s56
      %s58 = sshll.u32 [#allocation7], 4
      %s59 = int_to_ptr.vmem [resolvable:$true] %s58
      %64 = dma.hbm_to_vmem [thread:$0]  %s57, 8192, %s59, [#allocation6], 512, 512, 32
    $region29: #{lstm_model_forward.1} parent=1 // pred_fallthru
      _
    // Predicated region
    $region30: #{lstm_model_forward.1} parent=1 // pred_check
      _
    $region31: #{lstm_model_forward.1} parent=1 // pred_check_branch
      %66 = sbr.rel (0) target = $region33
    $region32: #{lstm_model_forward.1} parent=1 // pred_region
      _
    $region33: #{lstm_model_forward.1} parent=1 // pred_fallthru
      _
    // Predicated region
    $region34: #{lstm_model_forward.1} parent=1 // pred_check
      _
    $region35: #{lstm_model_forward.1} parent=1 // pred_check_branch
      %68 = sbr.rel (0) target = $region37
    $region36: #{lstm_model_forward.1} parent=1 // pred_region
      _
    $region37: #{lstm_model_forward.1} parent=1 // pred_fallthru
      _
    // Predicated region
    $region38: #{lstm_model_forward.1} parent=1 // pred_check
      _
    $region39: #{lstm_model_forward.1} parent=1 // pred_check_branch
      %70 = sbr.rel (0) target = $region41
    $region40: #{lstm_model_forward.1} parent=1 // pred_region
      _
    $region41: #{lstm_model_forward.1} parent=1 // pred_fallthru
      _
    // Predicated region
    $region42: #{lstm_model_forward.1} parent=1 // pred_check
      _
    $region43: #{lstm_model_forward.1} parent=1 // pred_check_branch
      %72 = sbr.rel (0) target = $region45
    $region44: #{lstm_model_forward.1} parent=1 // pred_region
      %74 = dma.done [#allocation3], 8192
    $region45: #{lstm_model_forward.1} parent=1 // pred_fallthru
      _
    // Predicated region
    $region46: #{lstm_model_forward.1} parent=1 // pred_check
      _
    $region47: #{lstm_model_forward.1} parent=1 // pred_check_branch
      %76 = sbr.rel (0) target = $region49
    $region48: #{lstm_model_forward.1} parent=1 // pred_region
      %78 = dma.done [#allocation6], 8192
    $region49: #{lstm_model_forward.1} parent=1 // pred_fallthru
      _
    // Predicated region
    $region50: #{lstm_model_forward.1} parent=1 // pred_check
      _
    $region51: #{lstm_model_forward.1} parent=1 // pred_check_branch
      %80 = sbr.rel (0) target = $region53
    $region52: #{lstm_model_forward.1} parent=1 // pred_region
      %82 = dma.done [#allocation6], 8192
    $region53: #{lstm_model_forward.1} parent=1 // pred_fallthru
      _
    %v83 = vld [vmem:[%s0] sm:$0xff]
    %v84 = vld [vmem:[%s0 + $0x8] sm:$0xff]
    %v85 = vlaneseq
    %v86 = vand.u32 %v85, 127
    %87 = vset.pattern.permute.xlu0 0
    %88 = vperm.xlu0 %87, %v83
    %v89 = vpop.permute.xlu0 %88
    %90 = vset.pattern.permute.xlu0 0
    %91 = vperm.xlu0 %90, %v84
    %v92 = vpop.permute.xlu0 %91
    %vm93 = vcmp.eq.s32.totalorder %v86, %v89
    %vm94 = vcmp.eq.s32.totalorder %v86, %v92
    %v95 = vsel %vm93, 1, 0
    %v96 = vsel %vm94, 1, 0
    %v97 = vcvt.s32.f32 %v95
    %v98 = vcvt.s32.f32 %v96
    %v99 = vld [vmem:[%s1] sm:$0xff]
    %v100 = vld [vmem:[%s1 + $0x8] sm:$0xff]
    %v101 = vld [vmem:[%s1 + $0x10] sm:$0xff]
    %v102 = vld [vmem:[%s1 + $0x18] sm:$0xff]
    %v103 = vld [vmem:[%s1 + $0x20] sm:$0xff]
    %v104 = vld [vmem:[%s1 + $0x28] sm:$0xff]
    %v105 = vld [vmem:[%s1 + $0x30] sm:$0x3]
    %vm106 = vcmask 408576
    %v108 = vsel %vm106, %v97, 0
    %v111 = vsel %vm106, %v98, 0
    %vm113 = vcmask 1041408
    %v115 = vsel %vm113, %v105, 0
    %117 = vmatpush.msra.mxu0 0.0
    %118 = vmatpush.msra.mxu0 0.0
    %119 = vmatpush.msra.mxu0 0.0
    %120 = vmatpush.msra.mxu0 0.0
    %121 = vmatpush.msra.mxu0 0.0
    %122 = vmatpush.msra.mxu0 0.0
    %123 = vmatpush.msra.mxu0 0.0
    %124 = vmatpush.msra.mxu0 0.0
    %125 = vmatpush.msra.mxu0 0.0
    %126 = vmatpush.msra.mxu0 %v115
    %127 = vmatpush.msra.mxu0 %v104
    %128 = vmatpush.msra.mxu0 %v103
    %129 = vmatpush.msra.mxu0 %v102
    %130 = vmatpush.msra.mxu0 %v101
    %131 = vmatpush.msra.mxu0 %v100
    %132 = vmatpush.msra.mxu0 %v99
    %133 = vmatmul.f32.gmra.mxu0 %v108
    %v134 = vpop.f32.mrf.mxu0
    %v135 = vadd.f32 0.0, %v134
    %136 = vmatmul.f32.gmra.mxu0 %v111
    %v137 = vpop.f32.mrf.mxu0
    %v138 = vadd.f32 0.0, %v137
    %139 = vdwg.mxu0
    %v140 = vld [vmem:[%s2] sm:$0xff]
    %v141 = vld [vmem:[%s2 + $0x8] sm:$0xff]
    %v142 = vld [vmem:[%s2 + $0x10] sm:$0xff]
    %v143 = vld [vmem:[%s2 + $0x18] sm:$0xff]
    %v144 = vld [vmem:[%s2 + $0x20] sm:$0xff]
    %v145 = vld [vmem:[%s2 + $0x28] sm:$0xff]
    %v146 = vld [vmem:[%s2 + $0x30] sm:$0xff]
    %v147 = vld [vmem:[%s2 + $0x38] sm:$0xff]
    %v148 = vld [vmem:[%s4] sm:$0xf]
    %v150 = vperm.slane %v148, 0
    %v151 = vperm.slane %v148, 1
    %v152 = vperm.slane %v148, 2
    %v153 = vperm.slane %v148, 3
    %vm158 = vcmask 130048
    %v160 = vsel %vm158, %v135, 0
    %v163 = vsel %vm158, %v138, 0
    %165 = vmatpush.msra.mxu0 0.0
    %166 = vmatpush.msra.mxu0 0.0
    %167 = vmatpush.msra.mxu0 0.0
    %168 = vmatpush.msra.mxu0 0.0
    %169 = vmatpush.msra.mxu0 0.0
    %170 = vmatpush.msra.mxu0 0.0
    %171 = vmatpush.msra.mxu0 0.0
    %172 = vmatpush.msra.mxu0 0.0
    %173 = vmatpush.msra.mxu0 0.0
    %174 = vmatpush.msra.mxu0 0.0
    %175 = vmatpush.msra.mxu0 0.0
    %176 = vmatpush.msra.mxu0 0.0
    %177 = vmatpush.msra.mxu0 0.0
    %178 = vmatpush.msra.mxu0 0.0
    %179 = vmatpush.msra.mxu0 %v144
    %180 = vmatpush.msra.mxu0 %v140
    %181 = vmatmul.f32.gmra.mxu0 %v160
    %v182 = vpop.f32.mrf.mxu0
    %v183 = vadd.f32 %v150, %v182
    %184 = vmatmul.f32.gmra.mxu0 %v163
    %v185 = vpop.f32.mrf.mxu0
    %v186 = vadd.f32 %v150, %v185
    %187 = vdwg.mxu0
    %188 = vmatpush.msra.mxu0 0.0
    %189 = vmatpush.msra.mxu0 0.0
    %190 = vmatpush.msra.mxu0 0.0
    %191 = vmatpush.msra.mxu0 0.0
    %192 = vmatpush.msra.mxu0 0.0
    %193 = vmatpush.msra.mxu0 0.0
    %194 = vmatpush.msra.mxu0 0.0
    %195 = vmatpush.msra.mxu0 0.0
    %196 = vmatpush.msra.mxu0 0.0
    %197 = vmatpush.msra.mxu0 0.0
    %198 = vmatpush.msra.mxu0 0.0
    %199 = vmatpush.msra.mxu0 0.0
    %200 = vmatpush.msra.mxu0 0.0
    %201 = vmatpush.msra.mxu0 0.0
    %202 = vmatpush.msra.mxu0 %v145
    %203 = vmatpush.msra.mxu0 %v141
    %204 = vmatmul.f32.gmra.mxu0 %v160
    %v205 = vpop.f32.mrf.mxu0
    %v206 = vadd.f32 %v151, %v205
    %207 = vmatmul.f32.gmra.mxu0 %v163
    %v208 = vpop.f32.mrf.mxu0
    %v209 = vadd.f32 %v151, %v208
    %210 = vdwg.mxu0
    %211 = vmatpush.msra.mxu0 0.0
    %212 = vmatpush.msra.mxu0 0.0
    %213 = vmatpush.msra.mxu0 0.0
    %214 = vmatpush.msra.mxu0 0.0
    %215 = vmatpush.msra.mxu0 0.0
    %216 = vmatpush.msra.mxu0 0.0
    %217 = vmatpush.msra.mxu0 0.0
    %218 = vmatpush.msra.mxu0 0.0
    %219 = vmatpush.msra.mxu0 0.0
    %220 = vmatpush.msra.mxu0 0.0
    %221 = vmatpush.msra.mxu0 0.0
    %222 = vmatpush.msra.mxu0 0.0
    %223 = vmatpush.msra.mxu0 0.0
    %224 = vmatpush.msra.mxu0 0.0
    %225 = vmatpush.msra.mxu0 %v146
    %226 = vmatpush.msra.mxu0 %v142
    %227 = vmatmul.f32.gmra.mxu0 %v160
    %v228 = vpop.f32.mrf.mxu0
    %v229 = vadd.f32 %v152, %v228
    %230 = vmatmul.f32.gmra.mxu0 %v163
    %v231 = vpop.f32.mrf.mxu0
    %v232 = vadd.f32 %v152, %v231
    %233 = vdwg.mxu0
    %234 = vmatpush.msra.mxu0 0.0
    %235 = vmatpush.msra.mxu0 0.0
    %236 = vmatpush.msra.mxu0 0.0
    %237 = vmatpush.msra.mxu0 0.0
    %238 = vmatpush.msra.mxu0 0.0
    %239 = vmatpush.msra.mxu0 0.0
    %240 = vmatpush.msra.mxu0 0.0
    %241 = vmatpush.msra.mxu0 0.0
    %242 = vmatpush.msra.mxu0 0.0
    %243 = vmatpush.msra.mxu0 0.0
    %244 = vmatpush.msra.mxu0 0.0
    %245 = vmatpush.msra.mxu0 0.0
    %246 = vmatpush.msra.mxu0 0.0
    %247 = vmatpush.msra.mxu0 0.0
    %248 = vmatpush.msra.mxu0 %v147
    %249 = vmatpush.msra.mxu0 %v143
    %250 = vmatmul.f32.gmra.mxu0 %v160
    %v251 = vpop.f32.mrf.mxu0
    %v252 = vadd.f32 %v153, %v251
    %253 = vmatmul.f32.gmra.mxu0 %v163
    %v254 = vpop.f32.mrf.mxu0
    %v255 = vadd.f32 %v153, %v254
    %256 = vdwg.mxu0
    %v257 = vld [vmem:[#allocation2] sm:$0xff]
    %v258 = vld [vmem:[#allocation2 + $0x8] sm:$0xff]
    %v259 = vld [vmem:[#allocation2 + $0x10] sm:$0xff]
    %v260 = vld [vmem:[#allocation2 + $0x18] sm:$0xff]
    %v261 = vld [vmem:[#allocation2 + $0x20] sm:$0xff]
    %v262 = vld [vmem:[#allocation2 + $0x28] sm:$0xff]
    %v263 = vld [vmem:[#allocation2 + $0x30] sm:$0xff]
    %v264 = vld [vmem:[#allocation2 + $0x38] sm:$0xff]
    %v265 = vld [vmem:[#allocation2 + $0x40] sm:$0xff]
    %v266 = vld [vmem:[#allocation2 + $0x48] sm:$0xff]
    %v267 = vld [vmem:[#allocation2 + $0x50] sm:$0xff]
    %v268 = vld [vmem:[#allocation2 + $0x58] sm:$0xff]
    %v269 = vld [vmem:[#allocation2 + $0x60] sm:$0xff]
    %v270 = vld [vmem:[#allocation2 + $0x68] sm:$0xff]
    %v271 = vld [vmem:[#allocation2 + $0x70] sm:$0xff]
    %v272 = vld [vmem:[#allocation2 + $0x78] sm:$0xff]
    %v273 = vld [vmem:[#allocation2 + $0x80] sm:$0xff]
    %v274 = vld [vmem:[#allocation2 + $0x88] sm:$0xff]
    %v275 = vld [vmem:[#allocation2 + $0x90] sm:$0xff]
    %v276 = vld [vmem:[#allocation2 + $0x98] sm:$0xff]
    %v277 = vld [vmem:[#allocation2 + $0xa0] sm:$0xff]
    %v278 = vld [vmem:[#allocation2 + $0xa8] sm:$0xff]
    %v279 = vld [vmem:[#allocation2 + $0xb0] sm:$0xff]
    %v280 = vld [vmem:[#allocation2 + $0xb8] sm:$0xff]
    %v281 = vld [vmem:[#allocation2 + $0xc0] sm:$0xff]
    %v282 = vld [vmem:[#allocation2 + $0xc8] sm:$0xff]
    %v283 = vld [vmem:[#allocation2 + $0xd0] sm:$0xff]
    %v284 = vld [vmem:[#allocation2 + $0xd8] sm:$0xff]
    %v285 = vld [vmem:[#allocation2 + $0xe0] sm:$0xff]
    %v286 = vld [vmem:[#allocation2 + $0xe8] sm:$0xff]
    %v287 = vld [vmem:[#allocation2 + $0xf0] sm:$0xff]
    %v288 = vld [vmem:[#allocation2 + $0xf8] sm:$0xff]
    %v289 = vld [vmem:[#allocation2 + $0x100] sm:$0xff]
    %v290 = vld [vmem:[#allocation2 + $0x108] sm:$0xff]
    %v291 = vld [vmem:[#allocation2 + $0x110] sm:$0xff]
    %v292 = vld [vmem:[#allocation2 + $0x118] sm:$0xff]
    %v293 = vld [vmem:[#allocation2 + $0x120] sm:$0xff]
    %v294 = vld [vmem:[#allocation2 + $0x128] sm:$0xff]
    %v295 = vld [vmem:[#allocation2 + $0x130] sm:$0xff]
    %v296 = vld [vmem:[#allocation2 + $0x138] sm:$0xff]
    %v297 = vld [vmem:[#allocation2 + $0x140] sm:$0xff]
    %v298 = vld [vmem:[#allocation2 + $0x148] sm:$0xff]
    %v299 = vld [vmem:[#allocation2 + $0x150] sm:$0xff]
    %v300 = vld [vmem:[#allocation2 + $0x158] sm:$0xff]
    %v301 = vld [vmem:[#allocation2 + $0x160] sm:$0xff]
    %v302 = vld [vmem:[#allocation2 + $0x168] sm:$0xff]
    %v303 = vld [vmem:[#allocation2 + $0x170] sm:$0xff]
    %v304 = vld [vmem:[#allocation2 + $0x178] sm:$0xff]
    %v305 = vld [vmem:[#allocation2 + $0x180] sm:$0xff]
    %v306 = vld [vmem:[#allocation2 + $0x188] sm:$0xff]
    %v307 = vld [vmem:[#allocation2 + $0x190] sm:$0xff]
    %v308 = vld [vmem:[#allocation2 + $0x198] sm:$0xff]
    %v309 = vld [vmem:[#allocation2 + $0x1a0] sm:$0xff]
    %v310 = vld [vmem:[#allocation2 + $0x1a8] sm:$0xff]
    %v311 = vld [vmem:[#allocation2 + $0x1b0] sm:$0xff]
    %v312 = vld [vmem:[#allocation2 + $0x1b8] sm:$0xff]
    %v313 = vld [vmem:[#allocation2 + $0x1c0] sm:$0xff]
    %v314 = vld [vmem:[#allocation2 + $0x1c8] sm:$0xff]
    %v315 = vld [vmem:[#allocation2 + $0x1d0] sm:$0xff]
    %v316 = vld [vmem:[#allocation2 + $0x1d8] sm:$0xff]
    %v317 = vld [vmem:[#allocation2 + $0x1e0] sm:$0xff]
    %v318 = vld [vmem:[#allocation2 + $0x1e8] sm:$0xff]
    %v319 = vld [vmem:[#allocation2 + $0x1f0] sm:$0xff]
    %v320 = vld [vmem:[#allocation2 + $0x1f8] sm:$0xff]
    %v321 = vld [vmem:[#allocation5] sm:$0xff]
    %v322 = vld [vmem:[#allocation5 + $0x8] sm:$0xff]
    %v323 = vld [vmem:[#allocation5 + $0x10] sm:$0xff]
    %v324 = vld [vmem:[#allocation5 + $0x18] sm:$0xff]
    %v325 = vld [vmem:[#allocation5 + $0x20] sm:$0xff]
    %v326 = vld [vmem:[#allocation5 + $0x28] sm:$0xff]
    %v327 = vld [vmem:[#allocation5 + $0x30] sm:$0xff]
    %v328 = vld [vmem:[#allocation5 + $0x38] sm:$0xff]
    %v329 = vld [vmem:[#allocation5 + $0x40] sm:$0xff]
    %v330 = vld [vmem:[#allocation5 + $0x48] sm:$0xff]
    %v331 = vld [vmem:[#allocation5 + $0x50] sm:$0xff]
    %v332 = vld [vmem:[#allocation5 + $0x58] sm:$0xff]
    %v333 = vld [vmem:[#allocation5 + $0x60] sm:$0xff]
    %v334 = vld [vmem:[#allocation5 + $0x68] sm:$0xff]
    %v335 = vld [vmem:[#allocation5 + $0x70] sm:$0xff]
    %v336 = vld [vmem:[#allocation5 + $0x78] sm:$0xff]
    %v337 = vld [vmem:[#allocation5 + $0x80] sm:$0xff]
    %v338 = vld [vmem:[#allocation5 + $0x88] sm:$0xff]
    %v339 = vld [vmem:[#allocation5 + $0x90] sm:$0xff]
    %v340 = vld [vmem:[#allocation5 + $0x98] sm:$0xff]
    %v341 = vld [vmem:[#allocation5 + $0xa0] sm:$0xff]
    %v342 = vld [vmem:[#allocation5 + $0xa8] sm:$0xff]
    %v343 = vld [vmem:[#allocation5 + $0xb0] sm:$0xff]
    %v344 = vld [vmem:[#allocation5 + $0xb8] sm:$0xff]
    %v345 = vld [vmem:[#allocation5 + $0xc0] sm:$0xff]
    %v346 = vld [vmem:[#allocation5 + $0xc8] sm:$0xff]
    %v347 = vld [vmem:[#allocation5 + $0xd0] sm:$0xff]
    %v348 = vld [vmem:[#allocation5 + $0xd8] sm:$0xff]
    %v349 = vld [vmem:[#allocation5 + $0xe0] sm:$0xff]
    %v350 = vld [vmem:[#allocation5 + $0xe8] sm:$0xff]
    %v351 = vld [vmem:[#allocation5 + $0xf0] sm:$0xff]
    %v352 = vld [vmem:[#allocation5 + $0xf8] sm:$0xff]
    %v353 = vld [vmem:[#allocation5 + $0x100] sm:$0xff]
    %v354 = vld [vmem:[#allocation5 + $0x108] sm:$0xff]
    %v355 = vld [vmem:[#allocation5 + $0x110] sm:$0xff]
    %v356 = vld [vmem:[#allocation5 + $0x118] sm:$0xff]
    %v357 = vld [vmem:[#allocation5 + $0x120] sm:$0xff]
    %v358 = vld [vmem:[#allocation5 + $0x128] sm:$0xff]
    %v359 = vld [vmem:[#allocation5 + $0x130] sm:$0xff]
    %v360 = vld [vmem:[#allocation5 + $0x138] sm:$0xff]
    %v361 = vld [vmem:[#allocation5 + $0x140] sm:$0xff]
    %v362 = vld [vmem:[#allocation5 + $0x148] sm:$0xff]
    %v363 = vld [vmem:[#allocation5 + $0x150] sm:$0xff]
    %v364 = vld [vmem:[#allocation5 + $0x158] sm:$0xff]
    %v365 = vld [vmem:[#allocation5 + $0x160] sm:$0xff]
    %v366 = vld [vmem:[#allocation5 + $0x168] sm:$0xff]
    %v367 = vld [vmem:[#allocation5 + $0x170] sm:$0xff]
    %v368 = vld [vmem:[#allocation5 + $0x178] sm:$0xff]
    %v369 = vld [vmem:[#allocation5 + $0x180] sm:$0xff]
    %v370 = vld [vmem:[#allocation5 + $0x188] sm:$0xff]
    %v371 = vld [vmem:[#allocation5 + $0x190] sm:$0xff]
    %v372 = vld [vmem:[#allocation5 + $0x198] sm:$0xff]
    %v373 = vld [vmem:[#allocation5 + $0x1a0] sm:$0xff]
    %v374 = vld [vmem:[#allocation5 + $0x1a8] sm:$0xff]
    %v375 = vld [vmem:[#allocation5 + $0x1b0] sm:$0xff]
    %v376 = vld [vmem:[#allocation5 + $0x1b8] sm:$0xff]
    %v377 = vld [vmem:[#allocation5 + $0x1c0] sm:$0xff]
    %v378 = vld [vmem:[#allocation5 + $0x1c8] sm:$0xff]
    %v379 = vld [vmem:[#allocation5 + $0x1d0] sm:$0xff]
    %v380 = vld [vmem:[#allocation5 + $0x1d8] sm:$0xff]
    %v381 = vld [vmem:[#allocation5 + $0x1e0] sm:$0xff]
    %v382 = vld [vmem:[#allocation5 + $0x1e8] sm:$0xff]
    %v383 = vld [vmem:[#allocation5 + $0x1f0] sm:$0xff]
    %v384 = vld [vmem:[#allocation5 + $0x1f8] sm:$0xff]
    %v385 = vld [vmem:[#allocation7] sm:$0xff]
    %v386 = vld [vmem:[#allocation7 + $0x8] sm:$0xff]
    %v387 = vld [vmem:[#allocation7 + $0x10] sm:$0xff]
    %v388 = vld [vmem:[#allocation7 + $0x18] sm:$0xff]
    %v389 = vld [vmem:[#allocation7 + $0x20] sm:$0xff]
    %v390 = vld [vmem:[#allocation7 + $0x28] sm:$0xff]
    %v391 = vld [vmem:[#allocation7 + $0x30] sm:$0xff]
    %v392 = vld [vmem:[#allocation7 + $0x38] sm:$0xff]
    %v393 = vld [vmem:[#allocation7 + $0x40] sm:$0xff]
    %v394 = vld [vmem:[#allocation7 + $0x48] sm:$0xff]
    %v395 = vld [vmem:[#allocation7 + $0x50] sm:$0xff]
    %v396 = vld [vmem:[#allocation7 + $0x58] sm:$0xff]
    %v397 = vld [vmem:[#allocation7 + $0x60] sm:$0xff]
    %v398 = vld [vmem:[#allocation7 + $0x68] sm:$0xff]
    %v399 = vld [vmem:[#allocation7 + $0x70] sm:$0xff]
    %v400 = vld [vmem:[#allocation7 + $0x78] sm:$0xff]
    %v401 = vld [vmem:[#allocation7 + $0x80] sm:$0xff]
    %v402 = vld [vmem:[#allocation7 + $0x88] sm:$0xff]
    %v403 = vld [vmem:[#allocation7 + $0x90] sm:$0xff]
    %v404 = vld [vmem:[#allocation7 + $0x98] sm:$0xff]
    %v405 = vld [vmem:[#allocation7 + $0xa0] sm:$0xff]
    %v406 = vld [vmem:[#allocation7 + $0xa8] sm:$0xff]
    %v407 = vld [vmem:[#allocation7 + $0xb0] sm:$0xff]
    %v408 = vld [vmem:[#allocation7 + $0xb8] sm:$0xff]
    %v409 = vld [vmem:[#allocation7 + $0xc0] sm:$0xff]
    %v410 = vld [vmem:[#allocation7 + $0xc8] sm:$0xff]
    %v411 = vld [vmem:[#allocation7 + $0xd0] sm:$0xff]
    %v412 = vld [vmem:[#allocation7 + $0xd8] sm:$0xff]
    %v413 = vld [vmem:[#allocation7 + $0xe0] sm:$0xff]
    %v414 = vld [vmem:[#allocation7 + $0xe8] sm:$0xff]
    %v415 = vld [vmem:[#allocation7 + $0xf0] sm:$0xff]
    %v416 = vld [vmem:[#allocation7 + $0xf8] sm:$0xff]
    %v417 = vld [vmem:[#allocation7 + $0x100] sm:$0xff]
    %v418 = vld [vmem:[#allocation7 + $0x108] sm:$0xff]
    %v419 = vld [vmem:[#allocation7 + $0x110] sm:$0xff]
    %v420 = vld [vmem:[#allocation7 + $0x118] sm:$0xff]
    %v421 = vld [vmem:[#allocation7 + $0x120] sm:$0xff]
    %v422 = vld [vmem:[#allocation7 + $0x128] sm:$0xff]
    %v423 = vld [vmem:[#allocation7 + $0x130] sm:$0xff]
    %v424 = vld [vmem:[#allocation7 + $0x138] sm:$0xff]
    %v425 = vld [vmem:[#allocation7 + $0x140] sm:$0xff]
    %v426 = vld [vmem:[#allocation7 + $0x148] sm:$0xff]
    %v427 = vld [vmem:[#allocation7 + $0x150] sm:$0xff]
    %v428 = vld [vmem:[#allocation7 + $0x158] sm:$0xff]
    %v429 = vld [vmem:[#allocation7 + $0x160] sm:$0xff]
    %v430 = vld [vmem:[#allocation7 + $0x168] sm:$0xff]
    %v431 = vld [vmem:[#allocation7 + $0x170] sm:$0xff]
    %v432 = vld [vmem:[#allocation7 + $0x178] sm:$0xff]
    %v433 = vld [vmem:[#allocation7 + $0x180] sm:$0xff]
    %v434 = vld [vmem:[#allocation7 + $0x188] sm:$0xff]
    %v435 = vld [vmem:[#allocation7 + $0x190] sm:$0xff]
    %v436 = vld [vmem:[#allocation7 + $0x198] sm:$0xff]
    %v437 = vld [vmem:[#allocation7 + $0x1a0] sm:$0xff]
    %v438 = vld [vmem:[#allocation7 + $0x1a8] sm:$0xff]
    %v439 = vld [vmem:[#allocation7 + $0x1b0] sm:$0xff]
    %v440 = vld [vmem:[#allocation7 + $0x1b8] sm:$0xff]
    %v441 = vld [vmem:[#allocation7 + $0x1c0] sm:$0xff]
    %v442 = vld [vmem:[#allocation7 + $0x1c8] sm:$0xff]
    %v443 = vld [vmem:[#allocation7 + $0x1d0] sm:$0xff]
    %v444 = vld [vmem:[#allocation7 + $0x1d8] sm:$0xff]
    %v445 = vld [vmem:[#allocation7 + $0x1e0] sm:$0xff]
    %v446 = vld [vmem:[#allocation7 + $0x1e8] sm:$0xff]
    %v447 = vld [vmem:[#allocation7 + $0x1f0] sm:$0xff]
    %v448 = vld [vmem:[#allocation7 + $0x1f8] sm:$0xff]
    %v449 = vld [vmem:[%s7] sm:$0xf]
    %v451 = vperm.slane %v449, 0
    %v452 = vperm.slane %v449, 1
    %v453 = vperm.slane %v449, 2
    %v454 = vperm.slane %v449, 3
    %459 = vmatpush.msra.mxu0 %v317
    %460 = vmatpush.msra.mxu0 %v313
    %461 = vmatpush.msra.mxu0 %v309
    %462 = vmatpush.msra.mxu0 %v305
    %463 = vmatpush.msra.mxu0 %v301
    %464 = vmatpush.msra.mxu0 %v297
    %465 = vmatpush.msra.mxu0 %v293
    %466 = vmatpush.msra.mxu0 %v289
    %467 = vmatpush.msra.mxu0 %v285
    %468 = vmatpush.msra.mxu0 %v281
    %469 = vmatpush.msra.mxu0 %v277
    %470 = vmatpush.msra.mxu0 %v273
    %471 = vmatpush.msra.mxu0 %v269
    %472 = vmatpush.msra.mxu0 %v265
    %473 = vmatpush.msra.mxu0 %v261
    %474 = vmatpush.msra.mxu0 %v257
    %475 = vmatmul.f32.gmra.mxu0 0.0
    %v476 = vpop.f32.mrf.mxu0
    %v477 = vadd.f32 0.0, %v476
    %478 = vdwg.mxu0
    %479 = vmatpush.msra.mxu0 %v318
    %480 = vmatpush.msra.mxu0 %v314
    %481 = vmatpush.msra.mxu0 %v310
    %482 = vmatpush.msra.mxu0 %v306
    %483 = vmatpush.msra.mxu0 %v302
    %484 = vmatpush.msra.mxu0 %v298
    %485 = vmatpush.msra.mxu0 %v294
    %486 = vmatpush.msra.mxu0 %v290
    %487 = vmatpush.msra.mxu0 %v286
    %488 = vmatpush.msra.mxu0 %v282
    %489 = vmatpush.msra.mxu0 %v278
    %490 = vmatpush.msra.mxu0 %v274
    %491 = vmatpush.msra.mxu0 %v270
    %492 = vmatpush.msra.mxu0 %v266
    %493 = vmatpush.msra.mxu0 %v262
    %494 = vmatpush.msra.mxu0 %v258
    %495 = vmatmul.f32.gmra.mxu0 0.0
    %v496 = vpop.f32.mrf.mxu0
    %v497 = vadd.f32 0.0, %v496
    %498 = vdwg.mxu0
    %499 = vmatpush.msra.mxu0 %v319
    %500 = vmatpush.msra.mxu0 %v315
    %501 = vmatpush.msra.mxu0 %v311
    %502 = vmatpush.msra.mxu0 %v307
    %503 = vmatpush.msra.mxu0 %v303
    %504 = vmatpush.msra.mxu0 %v299
    %505 = vmatpush.msra.mxu0 %v295
    %506 = vmatpush.msra.mxu0 %v291
    %507 = vmatpush.msra.mxu0 %v287
    %508 = vmatpush.msra.mxu0 %v283
    %509 = vmatpush.msra.mxu0 %v279
    %510 = vmatpush.msra.mxu0 %v275
    %511 = vmatpush.msra.mxu0 %v271
    %512 = vmatpush.msra.mxu0 %v267
    %513 = vmatpush.msra.mxu0 %v263
    %514 = vmatpush.msra.mxu0 %v259
    %515 = vmatmul.f32.gmra.mxu0 0.0
    %v516 = vpop.f32.mrf.mxu0
    %v517 = vadd.f32 0.0, %v516
    %518 = vdwg.mxu0
    %519 = vmatpush.msra.mxu0 %v320
    %520 = vmatpush.msra.mxu0 %v316
    %521 = vmatpush.msra.mxu0 %v312
    %522 = vmatpush.msra.mxu0 %v308
    %523 = vmatpush.msra.mxu0 %v304
    %524 = vmatpush.msra.mxu0 %v300
    %525 = vmatpush.msra.mxu0 %v296
    %526 = vmatpush.msra.mxu0 %v292
    %527 = vmatpush.msra.mxu0 %v288
    %528 = vmatpush.msra.mxu0 %v284
    %529 = vmatpush.msra.mxu0 %v280
    %530 = vmatpush.msra.mxu0 %v276
    %531 = vmatpush.msra.mxu0 %v272
    %532 = vmatpush.msra.mxu0 %v268
    %533 = vmatpush.msra.mxu0 %v264
    %534 = vmatpush.msra.mxu0 %v260
    %535 = vmatmul.f32.gmra.mxu0 0.0
    %v536 = vpop.f32.mrf.mxu0
    %v537 = vadd.f32 0.0, %v536
    %538 = vdwg.mxu0
    %v539 = vadd.f32 %v183, %v477
    %v540 = vadd.f32 %v206, %v497
    %v541 = vadd.f32 %v229, %v517
    %v542 = vadd.f32 %v252, %v537
    %v543 = vxor.u32 %v539, 2147483648
    %v544 = vxor.u32 %v540, 2147483648
    %v545 = vxor.u32 %v542, 2147483648
    %v546 = vmul.f32 %v543, 1.442695
    %v547 = vpow.pop %v546
    %v548 = vmul.f32 %v544, 1.442695
    %v549 = vpow.pop %v548
    %v550 = vmul.f32 %v545, 1.442695
    %v551 = vpow.pop %v550
    %v552 = vadd.f32 %v547, 1.0
    %v553 = vadd.f32 %v549, 1.0
    %v554 = vadd.f32 %v551, 1.0
    %v555 = vrcp.pop %v552
    %v556 = vmul.f32 %v552, %v555
    %v557 = vsub.f32 1.0, %v556
    %v558 = vmul.f32 %v555, %v557
    %v559 = vadd.f32 %v555, %v558
    %vm560 = vweird.f32 %v552
    %vm561 = vweird.f32 %v555
    %vm562 = vmor %vm560, %vm561
    %v563 = vsel %vm562, %v555, %v559
    %v564 = vand.u32 2147483647, %v552
    %vm565 = vcmp.eq.f32.partialorder %v564, 8.507059e+37
    %v566 = vand.u32 %v552, 2147483648
    %v567 = vor.u32 1.1754944e-38, %v566
    %v568 = vsel %vm565, %v567, %v563
    %v569 = vmul.f32 1.0, %v568
    %v570 = vrcp.pop %v553
    %v571 = vmul.f32 %v553, %v570
    %v572 = vsub.f32 1.0, %v571
    %v573 = vmul.f32 %v570, %v572
    %v574 = vadd.f32 %v570, %v573
    %vm575 = vweird.f32 %v553
    %vm576 = vweird.f32 %v570
    %vm577 = vmor %vm575, %vm576
    %v578 = vsel %vm577, %v570, %v574
    %v579 = vand.u32 2147483647, %v553
    %vm580 = vcmp.eq.f32.partialorder %v579, 8.507059e+37
    %v581 = vand.u32 %v553, 2147483648
    %v582 = vor.u32 1.1754944e-38, %v581
    %v583 = vsel %vm580, %v582, %v578
    %v584 = vmul.f32 1.0, %v583
    %v585 = vrcp.pop %v554
    %v586 = vmul.f32 %v554, %v585
    %v587 = vsub.f32 1.0, %v586
    %v588 = vmul.f32 %v585, %v587
    %v589 = vadd.f32 %v585, %v588
    %vm590 = vweird.f32 %v554
    %vm591 = vweird.f32 %v585
    %vm592 = vmor %vm590, %vm591
    %v593 = vsel %vm592, %v585, %v589
    %v594 = vand.u32 2147483647, %v554
    %vm595 = vcmp.eq.f32.partialorder %v594, 8.507059e+37
    %v596 = vand.u32 %v554, 2147483648
    %v597 = vor.u32 1.1754944e-38, %v596
    %v598 = vsel %vm595, %v597, %v593
    %v599 = vmul.f32 1.0, %v598
    %v600 = vtanh.pop %v541
    %v601 = vmul.f32 %v584, 0.0
    %v602 = vmul.f32 %v569, %v600
    %v603 = vadd.f32 %v601, %v602
    %v604 = vtanh.pop %v603
    %v605 = vmul.f32 %v599, %v604
    %606 = vmatpush.msra.mxu0 %v445
    %607 = vmatpush.msra.mxu0 %v441
    %608 = vmatpush.msra.mxu0 %v437
    %609 = vmatpush.msra.mxu0 %v433
    %610 = vmatpush.msra.mxu0 %v429
    %611 = vmatpush.msra.mxu0 %v425
    %612 = vmatpush.msra.mxu0 %v421
    %613 = vmatpush.msra.mxu0 %v417
    %614 = vmatpush.msra.mxu0 %v413
    %615 = vmatpush.msra.mxu0 %v409
    %616 = vmatpush.msra.mxu0 %v405
    %617 = vmatpush.msra.mxu0 %v401
    %618 = vmatpush.msra.mxu0 %v397
    %619 = vmatpush.msra.mxu0 %v393
    %620 = vmatpush.msra.mxu0 %v389
    %621 = vmatpush.msra.mxu0 %v385
    %622 = vmatmul.f32.gmra.mxu0 0.0
    %v623 = vpop.f32.mrf.mxu0
    %v624 = vadd.f32 0.0, %v623
    %625 = vdwg.mxu0
    %626 = vmatpush.msra.mxu0 %v446
    %627 = vmatpush.msra.mxu0 %v442
    %628 = vmatpush.msra.mxu0 %v438
    %629 = vmatpush.msra.mxu0 %v434
    %630 = vmatpush.msra.mxu0 %v430
    %631 = vmatpush.msra.mxu0 %v426
    %632 = vmatpush.msra.mxu0 %v422
    %633 = vmatpush.msra.mxu0 %v418
    %634 = vmatpush.msra.mxu0 %v414
    %635 = vmatpush.msra.mxu0 %v410
    %636 = vmatpush.msra.mxu0 %v406
    %637 = vmatpush.msra.mxu0 %v402
    %638 = vmatpush.msra.mxu0 %v398
    %639 = vmatpush.msra.mxu0 %v394
    %640 = vmatpush.msra.mxu0 %v390
    %641 = vmatpush.msra.mxu0 %v386
    %642 = vmatmul.f32.gmra.mxu0 0.0
    %v643 = vpop.f32.mrf.mxu0
    %v644 = vadd.f32 0.0, %v643
    %645 = vdwg.mxu0
    %646 = vmatpush.msra.mxu0 %v447
    %647 = vmatpush.msra.mxu0 %v443
    %648 = vmatpush.msra.mxu0 %v439
    %649 = vmatpush.msra.mxu0 %v435
    %650 = vmatpush.msra.mxu0 %v431
    %651 = vmatpush.msra.mxu0 %v427
    %652 = vmatpush.msra.mxu0 %v423
    %653 = vmatpush.msra.mxu0 %v419
    %654 = vmatpush.msra.mxu0 %v415
    %655 = vmatpush.msra.mxu0 %v411
    %656 = vmatpush.msra.mxu0 %v407
    %657 = vmatpush.msra.mxu0 %v403
    %658 = vmatpush.msra.mxu0 %v399
    %659 = vmatpush.msra.mxu0 %v395
    %660 = vmatpush.msra.mxu0 %v391
    %661 = vmatpush.msra.mxu0 %v387
    %662 = vmatmul.f32.gmra.mxu0 0.0
    %v663 = vpop.f32.mrf.mxu0
    %v664 = vadd.f32 0.0, %v663
    %665 = vdwg.mxu0
    %666 = vmatpush.msra.mxu0 %v448
    %667 = vmatpush.msra.mxu0 %v444
    %668 = vmatpush.msra.mxu0 %v440
    %669 = vmatpush.msra.mxu0 %v436
    %670 = vmatpush.msra.mxu0 %v432
    %671 = vmatpush.msra.mxu0 %v428
    %672 = vmatpush.msra.mxu0 %v424
    %673 = vmatpush.msra.mxu0 %v420
    %674 = vmatpush.msra.mxu0 %v416
    %675 = vmatpush.msra.mxu0 %v412
    %676 = vmatpush.msra.mxu0 %v408
    %677 = vmatpush.msra.mxu0 %v404
    %678 = vmatpush.msra.mxu0 %v400
    %679 = vmatpush.msra.mxu0 %v396
    %680 = vmatpush.msra.mxu0 %v392
    %681 = vmatpush.msra.mxu0 %v388
    %682 = vmatmul.f32.gmra.mxu0 0.0
    %v683 = vpop.f32.mrf.mxu0
    %v684 = vadd.f32 0.0, %v683
    %685 = vdwg.mxu0
    %686 = vmatpush.msra.mxu0 %v381
    %687 = vmatpush.msra.mxu0 %v377
    %688 = vmatpush.msra.mxu0 %v373
    %689 = vmatpush.msra.mxu0 %v369
    %690 = vmatpush.msra.mxu0 %v365
    %691 = vmatpush.msra.mxu0 %v361
    %692 = vmatpush.msra.mxu0 %v357
    %693 = vmatpush.msra.mxu0 %v353
    %694 = vmatpush.msra.mxu0 %v349
    %695 = vmatpush.msra.mxu0 %v345
    %696 = vmatpush.msra.mxu0 %v341
    %697 = vmatpush.msra.mxu0 %v337
    %698 = vmatpush.msra.mxu0 %v333
    %699 = vmatpush.msra.mxu0 %v329
    %700 = vmatpush.msra.mxu0 %v325
    %701 = vmatpush.msra.mxu0 %v321
    %702 = vmatmul.f32.gmra.mxu0 %v605
    %v703 = vpop.f32.mrf.mxu0
    %v704 = vadd.f32 %v624, %v703
    %705 = vdwg.mxu0
    %706 = vmatpush.msra.mxu0 %v382
    %707 = vmatpush.msra.mxu0 %v378
    %708 = vmatpush.msra.mxu0 %v374
    %709 = vmatpush.msra.mxu0 %v370
    %710 = vmatpush.msra.mxu0 %v366
    %711 = vmatpush.msra.mxu0 %v362
    %712 = vmatpush.msra.mxu0 %v358
    %713 = vmatpush.msra.mxu0 %v354
    %714 = vmatpush.msra.mxu0 %v350
    %715 = vmatpush.msra.mxu0 %v346
    %716 = vmatpush.msra.mxu0 %v342
    %717 = vmatpush.msra.mxu0 %v338
    %718 = vmatpush.msra.mxu0 %v334
    %719 = vmatpush.msra.mxu0 %v330
    %720 = vmatpush.msra.mxu0 %v326
    %721 = vmatpush.msra.mxu0 %v322
    %722 = vmatmul.f32.gmra.mxu0 %v605
    %v723 = vpop.f32.mrf.mxu0
    %v724 = vadd.f32 %v644, %v723
    %725 = vdwg.mxu0
    %726 = vmatpush.msra.mxu0 %v383
    %727 = vmatpush.msra.mxu0 %v379
    %728 = vmatpush.msra.mxu0 %v375
    %729 = vmatpush.msra.mxu0 %v371
    %730 = vmatpush.msra.mxu0 %v367
    %731 = vmatpush.msra.mxu0 %v363
    %732 = vmatpush.msra.mxu0 %v359
    %733 = vmatpush.msra.mxu0 %v355
    %734 = vmatpush.msra.mxu0 %v351
    %735 = vmatpush.msra.mxu0 %v347
    %736 = vmatpush.msra.mxu0 %v343
    %737 = vmatpush.msra.mxu0 %v339
    %738 = vmatpush.msra.mxu0 %v335
    %739 = vmatpush.msra.mxu0 %v331
    %740 = vmatpush.msra.mxu0 %v327
    %741 = vmatpush.msra.mxu0 %v323
    %742 = vmatmul.f32.gmra.mxu0 %v605
    %v743 = vpop.f32.mrf.mxu0
    %v744 = vadd.f32 %v664, %v743
    %745 = vdwg.mxu0
    %746 = vmatpush.msra.mxu0 %v384
    %747 = vmatpush.msra.mxu0 %v380
    %748 = vmatpush.msra.mxu0 %v376
    %749 = vmatpush.msra.mxu0 %v372
    %750 = vmatpush.msra.mxu0 %v368
    %751 = vmatpush.msra.mxu0 %v364
    %752 = vmatpush.msra.mxu0 %v360
    %753 = vmatpush.msra.mxu0 %v356
    %754 = vmatpush.msra.mxu0 %v352
    %755 = vmatpush.msra.mxu0 %v348
    %756 = vmatpush.msra.mxu0 %v344
    %757 = vmatpush.msra.mxu0 %v340
    %758 = vmatpush.msra.mxu0 %v336
    %759 = vmatpush.msra.mxu0 %v332
    %760 = vmatpush.msra.mxu0 %v328
    %761 = vmatpush.msra.mxu0 %v324
    %762 = vmatmul.f32.gmra.mxu0 %v605
    %v763 = vpop.f32.mrf.mxu0
    %v764 = vadd.f32 %v684, %v763
    %765 = vdwg.mxu0
    %v766 = vadd.f32 %v704, %v451
    %v767 = vadd.f32 %v724, %v452
    %v768 = vadd.f32 %v744, %v453
    %v769 = vadd.f32 %v764, %v454
    %v770 = vxor.u32 %v766, 2147483648
    %v771 = vxor.u32 %v767, 2147483648
    %v772 = vxor.u32 %v769, 2147483648
    %v773 = vmul.f32 %v770, 1.442695
    %v774 = vpow.pop %v773
    %v775 = vmul.f32 %v771, 1.442695
    %v776 = vpow.pop %v775
    %v777 = vmul.f32 %v772, 1.442695
    %v778 = vpow.pop %v777
    %v779 = vadd.f32 %v774, 1.0
    %v780 = vadd.f32 %v776, 1.0
    %v781 = vadd.f32 %v778, 1.0
    %v782 = vrcp.pop %v779
    %v783 = vmul.f32 %v779, %v782
    %v784 = vsub.f32 1.0, %v783
    %v785 = vmul.f32 %v782, %v784
    %v786 = vadd.f32 %v782, %v785
    %vm787 = vweird.f32 %v779
    %vm788 = vweird.f32 %v782
    %vm789 = vmor %vm787, %vm788
    %v790 = vsel %vm789, %v782, %v786
    %v791 = vand.u32 2147483647, %v779
    %vm792 = vcmp.eq.f32.partialorder %v791, 8.507059e+37
    %v793 = vand.u32 %v779, 2147483648
    %v794 = vor.u32 1.1754944e-38, %v793
    %v795 = vsel %vm792, %v794, %v790
    %v796 = vmul.f32 1.0, %v795
    %v797 = vrcp.pop %v780
    %v798 = vmul.f32 %v780, %v797
    %v799 = vsub.f32 1.0, %v798
    %v800 = vmul.f32 %v797, %v799
    %v801 = vadd.f32 %v797, %v800
    %vm802 = vweird.f32 %v780
    %vm803 = vweird.f32 %v797
    %vm804 = vmor %vm802, %vm803
    %v805 = vsel %vm804, %v797, %v801
    %v806 = vand.u32 2147483647, %v780
    %vm807 = vcmp.eq.f32.partialorder %v806, 8.507059e+37
    %v808 = vand.u32 %v780, 2147483648
    %v809 = vor.u32 1.1754944e-38, %v808
    %v810 = vsel %vm807, %v809, %v805
    %v811 = vmul.f32 1.0, %v810
    %v812 = vrcp.pop %v781
    %v813 = vmul.f32 %v781, %v812
    %v814 = vsub.f32 1.0, %v813
    %v815 = vmul.f32 %v812, %v814
    %v816 = vadd.f32 %v812, %v815
    %vm817 = vweird.f32 %v781
    %vm818 = vweird.f32 %v812
    %vm819 = vmor %vm817, %vm818
    %v820 = vsel %vm819, %v812, %v816
    %v821 = vand.u32 2147483647, %v781
    %vm822 = vcmp.eq.f32.partialorder %v821, 8.507059e+37
    %v823 = vand.u32 %v781, 2147483648
    %v824 = vor.u32 1.1754944e-38, %v823
    %v825 = vsel %vm822, %v824, %v820
    %v826 = vmul.f32 1.0, %v825
    %v827 = vtanh.pop %v768
    %v828 = vmul.f32 %v811, 0.0
    %v829 = vmul.f32 %v796, %v827
    %v830 = vadd.f32 %v828, %v829
    %v831 = vtanh.pop %v830
    %v832 = vmul.f32 %v826, %v831
    %833 = vmatpush.msra.mxu0 %v317
    %834 = vmatpush.msra.mxu0 %v313
    %835 = vmatpush.msra.mxu0 %v309
    %836 = vmatpush.msra.mxu0 %v305
    %837 = vmatpush.msra.mxu0 %v301
    %838 = vmatpush.msra.mxu0 %v297
    %839 = vmatpush.msra.mxu0 %v293
    %840 = vmatpush.msra.mxu0 %v289
    %841 = vmatpush.msra.mxu0 %v285
    %842 = vmatpush.msra.mxu0 %v281
    %843 = vmatpush.msra.mxu0 %v277
    %844 = vmatpush.msra.mxu0 %v273
    %845 = vmatpush.msra.mxu0 %v269
    %846 = vmatpush.msra.mxu0 %v265
    %847 = vmatpush.msra.mxu0 %v261
    %848 = vmatpush.msra.mxu0 %v257
    %849 = vmatmul.f32.gmra.mxu0 %v605
    %v850 = vpop.f32.mrf.mxu0
    %v851 = vadd.f32 0.0, %v850
    %852 = vdwg.mxu0
    %853 = vmatpush.msra.mxu0 %v318
    %854 = vmatpush.msra.mxu0 %v314
    %855 = vmatpush.msra.mxu0 %v310
    %856 = vmatpush.msra.mxu0 %v306
    %857 = vmatpush.msra.mxu0 %v302
    %858 = vmatpush.msra.mxu0 %v298
    %859 = vmatpush.msra.mxu0 %v294
    %860 = vmatpush.msra.mxu0 %v290
    %861 = vmatpush.msra.mxu0 %v286
    %862 = vmatpush.msra.mxu0 %v282
    %863 = vmatpush.msra.mxu0 %v278
    %864 = vmatpush.msra.mxu0 %v274
    %865 = vmatpush.msra.mxu0 %v270
    %866 = vmatpush.msra.mxu0 %v266
    %867 = vmatpush.msra.mxu0 %v262
    %868 = vmatpush.msra.mxu0 %v258
    %869 = vmatmul.f32.gmra.mxu0 %v605
    %v870 = vpop.f32.mrf.mxu0
    %v871 = vadd.f32 0.0, %v870
    %872 = vdwg.mxu0
    %873 = vmatpush.msra.mxu0 %v319
    %874 = vmatpush.msra.mxu0 %v315
    %875 = vmatpush.msra.mxu0 %v311
    %876 = vmatpush.msra.mxu0 %v307
    %877 = vmatpush.msra.mxu0 %v303
    %878 = vmatpush.msra.mxu0 %v299
    %879 = vmatpush.msra.mxu0 %v295
    %880 = vmatpush.msra.mxu0 %v291
    %881 = vmatpush.msra.mxu0 %v287
    %882 = vmatpush.msra.mxu0 %v283
    %883 = vmatpush.msra.mxu0 %v279
    %884 = vmatpush.msra.mxu0 %v275
    %885 = vmatpush.msra.mxu0 %v271
    %886 = vmatpush.msra.mxu0 %v267
    %887 = vmatpush.msra.mxu0 %v263
    %888 = vmatpush.msra.mxu0 %v259
    %889 = vmatmul.f32.gmra.mxu0 %v605
    %v890 = vpop.f32.mrf.mxu0
    %v891 = vadd.f32 0.0, %v890
    %892 = vdwg.mxu0
    %893 = vmatpush.msra.mxu0 %v320
    %894 = vmatpush.msra.mxu0 %v316
    %895 = vmatpush.msra.mxu0 %v312
    %896 = vmatpush.msra.mxu0 %v308
    %897 = vmatpush.msra.mxu0 %v304
    %898 = vmatpush.msra.mxu0 %v300
    %899 = vmatpush.msra.mxu0 %v296
    %900 = vmatpush.msra.mxu0 %v292
    %901 = vmatpush.msra.mxu0 %v288
    %902 = vmatpush.msra.mxu0 %v284
    %903 = vmatpush.msra.mxu0 %v280
    %904 = vmatpush.msra.mxu0 %v276
    %905 = vmatpush.msra.mxu0 %v272
    %906 = vmatpush.msra.mxu0 %v268
    %907 = vmatpush.msra.mxu0 %v264
    %908 = vmatpush.msra.mxu0 %v260
    %909 = vmatmul.f32.gmra.mxu0 %v605
    %v910 = vpop.f32.mrf.mxu0
    %v911 = vadd.f32 0.0, %v910
    %912 = vdwg.mxu0
    %v917 = vrot.slane %v851, 6
    %v918 = vrot.slane %v871, 6
    %v919 = vrot.slane %v891, 6
    %v920 = vrot.slane %v911, 6
    %v925 = vadd.f32 %v183, %v917
    %v926 = vadd.f32 %v206, %v918
    %v927 = vadd.f32 %v229, %v919
    %v928 = vadd.f32 %v252, %v920
    %v929 = vxor.u32 %v925, 2147483648
    %v930 = vxor.u32 %v926, 2147483648
    %v931 = vxor.u32 %v928, 2147483648
    %v932 = vmul.f32 %v929, 1.442695
    %v933 = vpow.pop %v932
    %v934 = vmul.f32 %v930, 1.442695
    %v935 = vpow.pop %v934
    %v936 = vmul.f32 %v931, 1.442695
    %v937 = vpow.pop %v936
    %v938 = vadd.f32 %v933, 1.0
    %v939 = vadd.f32 %v935, 1.0
    %v940 = vadd.f32 %v937, 1.0
    %v941 = vrcp.pop %v938
    %v942 = vmul.f32 %v938, %v941
    %v943 = vsub.f32 1.0, %v942
    %v944 = vmul.f32 %v941, %v943
    %v945 = vadd.f32 %v941, %v944
    %vm946 = vweird.f32 %v938
    %vm947 = vweird.f32 %v941
    %vm948 = vmor %vm946, %vm947
    %v949 = vsel %vm948, %v941, %v945
    %v950 = vand.u32 2147483647, %v938
    %vm951 = vcmp.eq.f32.partialorder %v950, 8.507059e+37
    %v952 = vand.u32 %v938, 2147483648
    %v953 = vor.u32 1.1754944e-38, %v952
    %v954 = vsel %vm951, %v953, %v949
    %v955 = vmul.f32 1.0, %v954
    %v956 = vrcp.pop %v939
    %v957 = vmul.f32 %v939, %v956
    %v958 = vsub.f32 1.0, %v957
    %v959 = vmul.f32 %v956, %v958
    %v960 = vadd.f32 %v956, %v959
    %vm961 = vweird.f32 %v939
    %vm962 = vweird.f32 %v956
    %vm963 = vmor %vm961, %vm962
    %v964 = vsel %vm963, %v956, %v960
    %v965 = vand.u32 2147483647, %v939
    %vm966 = vcmp.eq.f32.partialorder %v965, 8.507059e+37
    %v967 = vand.u32 %v939, 2147483648
    %v968 = vor.u32 1.1754944e-38, %v967
    %v969 = vsel %vm966, %v968, %v964
    %v970 = vmul.f32 1.0, %v969
    %v971 = vrcp.pop %v940
    %v972 = vmul.f32 %v940, %v971
    %v973 = vsub.f32 1.0, %v972
    %v974 = vmul.f32 %v971, %v973
    %v975 = vadd.f32 %v971, %v974
    %vm976 = vweird.f32 %v940
    %vm977 = vweird.f32 %v971
    %vm978 = vmor %vm976, %vm977
    %v979 = vsel %vm978, %v971, %v975
    %v980 = vand.u32 2147483647, %v940
    %vm981 = vcmp.eq.f32.partialorder %v980, 8.507059e+37
    %v982 = vand.u32 %v940, 2147483648
    %v983 = vor.u32 1.1754944e-38, %v982
    %v984 = vsel %vm981, %v983, %v979
    %v985 = vmul.f32 1.0, %v984
    %v986 = vtanh.pop %v927
    %v988 = vrot.slane %v603, 6
    %v990 = vmul.f32 %v970, %v988
    %v991 = vmul.f32 %v955, %v986
    %v992 = vadd.f32 %v990, %v991
    %v993 = vtanh.pop %v992
    %v994 = vmul.f32 %v985, %v993
    %995 = vmatpush.msra.mxu0 %v445
    %996 = vmatpush.msra.mxu0 %v441
    %997 = vmatpush.msra.mxu0 %v437
    %998 = vmatpush.msra.mxu0 %v433
    %999 = vmatpush.msra.mxu0 %v429
    %1000 = vmatpush.msra.mxu0 %v425
    %1001 = vmatpush.msra.mxu0 %v421
    %1002 = vmatpush.msra.mxu0 %v417
    %1003 = vmatpush.msra.mxu0 %v413
    %1004 = vmatpush.msra.mxu0 %v409
    %1005 = vmatpush.msra.mxu0 %v405
    %1006 = vmatpush.msra.mxu0 %v401
    %1007 = vmatpush.msra.mxu0 %v397
    %1008 = vmatpush.msra.mxu0 %v393
    %1009 = vmatpush.msra.mxu0 %v389
    %1010 = vmatpush.msra.mxu0 %v385
    %1011 = vmatmul.f32.gmra.mxu0 %v832
    %v1012 = vpop.f32.mrf.mxu0
    %v1013 = vadd.f32 0.0, %v1012
    %1014 = vdwg.mxu0
    %1015 = vmatpush.msra.mxu0 %v446
    %1016 = vmatpush.msra.mxu0 %v442
    %1017 = vmatpush.msra.mxu0 %v438
    %1018 = vmatpush.msra.mxu0 %v434
    %1019 = vmatpush.msra.mxu0 %v430
    %1020 = vmatpush.msra.mxu0 %v426
    %1021 = vmatpush.msra.mxu0 %v422
    %1022 = vmatpush.msra.mxu0 %v418
    %1023 = vmatpush.msra.mxu0 %v414
    %1024 = vmatpush.msra.mxu0 %v410
    %1025 = vmatpush.msra.mxu0 %v406
    %1026 = vmatpush.msra.mxu0 %v402
    %1027 = vmatpush.msra.mxu0 %v398
    %1028 = vmatpush.msra.mxu0 %v394
    %1029 = vmatpush.msra.mxu0 %v390
    %1030 = vmatpush.msra.mxu0 %v386
    %1031 = vmatmul.f32.gmra.mxu0 %v832
    %v1032 = vpop.f32.mrf.mxu0
    %v1033 = vadd.f32 0.0, %v1032
    %1034 = vdwg.mxu0
    %1035 = vmatpush.msra.mxu0 %v447
    %1036 = vmatpush.msra.mxu0 %v443
    %1037 = vmatpush.msra.mxu0 %v439
    %1038 = vmatpush.msra.mxu0 %v435
    %1039 = vmatpush.msra.mxu0 %v431
    %1040 = vmatpush.msra.mxu0 %v427
    %1041 = vmatpush.msra.mxu0 %v423
    %1042 = vmatpush.msra.mxu0 %v419
    %1043 = vmatpush.msra.mxu0 %v415
    %1044 = vmatpush.msra.mxu0 %v411
    %1045 = vmatpush.msra.mxu0 %v407
    %1046 = vmatpush.msra.mxu0 %v403
    %1047 = vmatpush.msra.mxu0 %v399
    %1048 = vmatpush.msra.mxu0 %v395
    %1049 = vmatpush.msra.mxu0 %v391
    %1050 = vmatpush.msra.mxu0 %v387
    %1051 = vmatmul.f32.gmra.mxu0 %v832
    %v1052 = vpop.f32.mrf.mxu0
    %v1053 = vadd.f32 0.0, %v1052
    %1054 = vdwg.mxu0
    %1055 = vmatpush.msra.mxu0 %v448
    %1056 = vmatpush.msra.mxu0 %v444
    %1057 = vmatpush.msra.mxu0 %v440
    %1058 = vmatpush.msra.mxu0 %v436
    %1059 = vmatpush.msra.mxu0 %v432
    %1060 = vmatpush.msra.mxu0 %v428
    %1061 = vmatpush.msra.mxu0 %v424
    %1062 = vmatpush.msra.mxu0 %v420
    %1063 = vmatpush.msra.mxu0 %v416
    %1064 = vmatpush.msra.mxu0 %v412
    %1065 = vmatpush.msra.mxu0 %v408
    %1066 = vmatpush.msra.mxu0 %v404
    %1067 = vmatpush.msra.mxu0 %v400
    %1068 = vmatpush.msra.mxu0 %v396
    %1069 = vmatpush.msra.mxu0 %v392
    %1070 = vmatpush.msra.mxu0 %v388
    %1071 = vmatmul.f32.gmra.mxu0 %v832
    %v1072 = vpop.f32.mrf.mxu0
    %v1073 = vadd.f32 0.0, %v1072
    %1074 = vdwg.mxu0
    %v1076 = vrot.slane %v994, 2
    %1078 = vmatpush.msra.mxu0 %v381
    %1079 = vmatpush.msra.mxu0 %v377
    %1080 = vmatpush.msra.mxu0 %v373
    %1081 = vmatpush.msra.mxu0 %v369
    %1082 = vmatpush.msra.mxu0 %v365
    %1083 = vmatpush.msra.mxu0 %v361
    %1084 = vmatpush.msra.mxu0 %v357
    %1085 = vmatpush.msra.mxu0 %v353
    %1086 = vmatpush.msra.mxu0 %v349
    %1087 = vmatpush.msra.mxu0 %v345
    %1088 = vmatpush.msra.mxu0 %v341
    %1089 = vmatpush.msra.mxu0 %v337
    %1090 = vmatpush.msra.mxu0 %v333
    %1091 = vmatpush.msra.mxu0 %v329
    %1092 = vmatpush.msra.mxu0 %v325
    %1093 = vmatpush.msra.mxu0 %v321
    %1094 = vmatmul.f32.gmra.mxu0 %v1076
    %v1095 = vpop.f32.mrf.mxu0
    %v1096 = vadd.f32 %v1013, %v1095
    %1097 = vdwg.mxu0
    %1098 = vmatpush.msra.mxu0 %v382
    %1099 = vmatpush.msra.mxu0 %v378
    %1100 = vmatpush.msra.mxu0 %v374
    %1101 = vmatpush.msra.mxu0 %v370
    %1102 = vmatpush.msra.mxu0 %v366
    %1103 = vmatpush.msra.mxu0 %v362
    %1104 = vmatpush.msra.mxu0 %v358
    %1105 = vmatpush.msra.mxu0 %v354
    %1106 = vmatpush.msra.mxu0 %v350
    %1107 = vmatpush.msra.mxu0 %v346
    %1108 = vmatpush.msra.mxu0 %v342
    %1109 = vmatpush.msra.mxu0 %v338
    %1110 = vmatpush.msra.mxu0 %v334
    %1111 = vmatpush.msra.mxu0 %v330
    %1112 = vmatpush.msra.mxu0 %v326
    %1113 = vmatpush.msra.mxu0 %v322
    %1114 = vmatmul.f32.gmra.mxu0 %v1076
    %v1115 = vpop.f32.mrf.mxu0
    %v1116 = vadd.f32 %v1033, %v1115
    %1117 = vdwg.mxu0
    %1118 = vmatpush.msra.mxu0 %v383
    %1119 = vmatpush.msra.mxu0 %v379
    %1120 = vmatpush.msra.mxu0 %v375
    %1121 = vmatpush.msra.mxu0 %v371
    %1122 = vmatpush.msra.mxu0 %v367
    %1123 = vmatpush.msra.mxu0 %v363
    %1124 = vmatpush.msra.mxu0 %v359
    %1125 = vmatpush.msra.mxu0 %v355
    %1126 = vmatpush.msra.mxu0 %v351
    %1127 = vmatpush.msra.mxu0 %v347
    %1128 = vmatpush.msra.mxu0 %v343
    %1129 = vmatpush.msra.mxu0 %v339
    %1130 = vmatpush.msra.mxu0 %v335
    %1131 = vmatpush.msra.mxu0 %v331
    %1132 = vmatpush.msra.mxu0 %v327
    %1133 = vmatpush.msra.mxu0 %v323
    %1134 = vmatmul.f32.gmra.mxu0 %v1076
    %v1135 = vpop.f32.mrf.mxu0
    %v1136 = vadd.f32 %v1053, %v1135
    %1137 = vdwg.mxu0
    %1138 = vmatpush.msra.mxu0 %v384
    %1139 = vmatpush.msra.mxu0 %v380
    %1140 = vmatpush.msra.mxu0 %v376
    %1141 = vmatpush.msra.mxu0 %v372
    %1142 = vmatpush.msra.mxu0 %v368
    %1143 = vmatpush.msra.mxu0 %v364
    %1144 = vmatpush.msra.mxu0 %v360
    %1145 = vmatpush.msra.mxu0 %v356
    %1146 = vmatpush.msra.mxu0 %v352
    %1147 = vmatpush.msra.mxu0 %v348
    %1148 = vmatpush.msra.mxu0 %v344
    %1149 = vmatpush.msra.mxu0 %v340
    %1150 = vmatpush.msra.mxu0 %v336
    %1151 = vmatpush.msra.mxu0 %v332
    %1152 = vmatpush.msra.mxu0 %v328
    %1153 = vmatpush.msra.mxu0 %v324
    %1154 = vmatmul.f32.gmra.mxu0 %v1076
    %v1155 = vpop.f32.mrf.mxu0
    %v1156 = vadd.f32 %v1073, %v1155
    %1157 = vdwg.mxu0
    %v1158 = vadd.f32 %v1096, %v451
    %v1159 = vadd.f32 %v1116, %v452
    %v1160 = vadd.f32 %v1136, %v453
    %v1161 = vadd.f32 %v1156, %v454
    %v1162 = vxor.u32 %v1158, 2147483648
    %v1163 = vxor.u32 %v1159, 2147483648
    %v1164 = vxor.u32 %v1161, 2147483648
    %v1165 = vmul.f32 %v1162, 1.442695
    %v1166 = vpow.pop %v1165
    %v1167 = vmul.f32 %v1163, 1.442695
    %v1168 = vpow.pop %v1167
    %v1169 = vmul.f32 %v1164, 1.442695
    %v1170 = vpow.pop %v1169
    %v1171 = vadd.f32 %v1166, 1.0
    %v1172 = vadd.f32 %v1168, 1.0
    %v1173 = vadd.f32 %v1170, 1.0
    %v1174 = vrcp.pop %v1171
    %v1175 = vmul.f32 %v1171, %v1174
    %v1176 = vsub.f32 1.0, %v1175
    %v1177 = vmul.f32 %v1174, %v1176
    %v1178 = vadd.f32 %v1174, %v1177
    %vm1179 = vweird.f32 %v1171
    %vm1180 = vweird.f32 %v1174
    %vm1181 = vmor %vm1179, %vm1180
    %v1182 = vsel %vm1181, %v1174, %v1178
    %v1183 = vand.u32 2147483647, %v1171
    %vm1184 = vcmp.eq.f32.partialorder %v1183, 8.507059e+37
    %v1185 = vand.u32 %v1171, 2147483648
    %v1186 = vor.u32 1.1754944e-38, %v1185
    %v1187 = vsel %vm1184, %v1186, %v1182
    %v1188 = vmul.f32 1.0, %v1187
    %v1189 = vrcp.pop %v1172
    %v1190 = vmul.f32 %v1172, %v1189
    %v1191 = vsub.f32 1.0, %v1190
    %v1192 = vmul.f32 %v1189, %v1191
    %v1193 = vadd.f32 %v1189, %v1192
    %vm1194 = vweird.f32 %v1172
    %vm1195 = vweird.f32 %v1189
    %vm1196 = vmor %vm1194, %vm1195
    %v1197 = vsel %vm1196, %v1189, %v1193
    %v1198 = vand.u32 2147483647, %v1172
    %vm1199 = vcmp.eq.f32.partialorder %v1198, 8.507059e+37
    %v1200 = vand.u32 %v1172, 2147483648
    %v1201 = vor.u32 1.1754944e-38, %v1200
    %v1202 = vsel %vm1199, %v1201, %v1197
    %v1203 = vmul.f32 1.0, %v1202
    %v1204 = vrcp.pop %v1173
    %v1205 = vmul.f32 %v1173, %v1204
    %v1206 = vsub.f32 1.0, %v1205
    %v1207 = vmul.f32 %v1204, %v1206
    %v1208 = vadd.f32 %v1204, %v1207
    %vm1209 = vweird.f32 %v1173
    %vm1210 = vweird.f32 %v1204
    %vm1211 = vmor %vm1209, %vm1210
    %v1212 = vsel %vm1211, %v1204, %v1208
    %v1213 = vand.u32 2147483647, %v1173
    %vm1214 = vcmp.eq.f32.partialorder %v1213, 8.507059e+37
    %v1215 = vand.u32 %v1173, 2147483648
    %v1216 = vor.u32 1.1754944e-38, %v1215
    %v1217 = vsel %vm1214, %v1216, %v1212
    %v1218 = vmul.f32 1.0, %v1217
    %v1219 = vtanh.pop %v1160
    %v1220 = vmul.f32 %v1203, %v830
    %v1221 = vmul.f32 %v1188, %v1219
    %v1222 = vadd.f32 %v1220, %v1221
    %v1223 = vtanh.pop %v1222
    %v1224 = vmul.f32 %v1218, %v1223
    %v1225 = vmax.f32 %v832, %v1224
    %1226 = vmatpush.msra.mxu0 %v317
    %1227 = vmatpush.msra.mxu0 %v313
    %1228 = vmatpush.msra.mxu0 %v309
    %1229 = vmatpush.msra.mxu0 %v305
    %1230 = vmatpush.msra.mxu0 %v301
    %1231 = vmatpush.msra.mxu0 %v297
    %1232 = vmatpush.msra.mxu0 %v293
    %1233 = vmatpush.msra.mxu0 %v289
    %1234 = vmatpush.msra.mxu0 %v285
    %1235 = vmatpush.msra.mxu0 %v281
    %1236 = vmatpush.msra.mxu0 %v277
    %1237 = vmatpush.msra.mxu0 %v273
    %1238 = vmatpush.msra.mxu0 %v269
    %1239 = vmatpush.msra.mxu0 %v265
    %1240 = vmatpush.msra.mxu0 %v261
    %1241 = vmatpush.msra.mxu0 %v257
    %1242 = vmatmul.f32.gmra.mxu0 %v1076
    %v1243 = vpop.f32.mrf.mxu0
    %v1244 = vadd.f32 0.0, %v1243
    %1245 = vdwg.mxu0
    %1246 = vmatpush.msra.mxu0 %v318
    %1247 = vmatpush.msra.mxu0 %v314
    %1248 = vmatpush.msra.mxu0 %v310
    %1249 = vmatpush.msra.mxu0 %v306
    %1250 = vmatpush.msra.mxu0 %v302
    %1251 = vmatpush.msra.mxu0 %v298
    %1252 = vmatpush.msra.mxu0 %v294
    %1253 = vmatpush.msra.mxu0 %v290
    %1254 = vmatpush.msra.mxu0 %v286
    %1255 = vmatpush.msra.mxu0 %v282
    %1256 = vmatpush.msra.mxu0 %v278
    %1257 = vmatpush.msra.mxu0 %v274
    %1258 = vmatpush.msra.mxu0 %v270
    %1259 = vmatpush.msra.mxu0 %v266
    %1260 = vmatpush.msra.mxu0 %v262
    %1261 = vmatpush.msra.mxu0 %v258
    %1262 = vmatmul.f32.gmra.mxu0 %v1076
    %v1263 = vpop.f32.mrf.mxu0
    %v1264 = vadd.f32 0.0, %v1263
    %1265 = vdwg.mxu0
    %1266 = vmatpush.msra.mxu0 %v319
    %1267 = vmatpush.msra.mxu0 %v315
    %1268 = vmatpush.msra.mxu0 %v311
    %1269 = vmatpush.msra.mxu0 %v307
    %1270 = vmatpush.msra.mxu0 %v303
    %1271 = vmatpush.msra.mxu0 %v299
    %1272 = vmatpush.msra.mxu0 %v295
    %1273 = vmatpush.msra.mxu0 %v291
    %1274 = vmatpush.msra.mxu0 %v287
    %1275 = vmatpush.msra.mxu0 %v283
    %1276 = vmatpush.msra.mxu0 %v279
    %1277 = vmatpush.msra.mxu0 %v275
    %1278 = vmatpush.msra.mxu0 %v271
    %1279 = vmatpush.msra.mxu0 %v267
    %1280 = vmatpush.msra.mxu0 %v263
    %1281 = vmatpush.msra.mxu0 %v259
    %1282 = vmatmul.f32.gmra.mxu0 %v1076
    %v1283 = vpop.f32.mrf.mxu0
    %v1284 = vadd.f32 0.0, %v1283
    %1285 = vdwg.mxu0
    %1286 = vmatpush.msra.mxu0 %v320
    %1287 = vmatpush.msra.mxu0 %v316
    %1288 = vmatpush.msra.mxu0 %v312
    %1289 = vmatpush.msra.mxu0 %v308
    %1290 = vmatpush.msra.mxu0 %v304
    %1291 = vmatpush.msra.mxu0 %v300
    %1292 = vmatpush.msra.mxu0 %v296
    %1293 = vmatpush.msra.mxu0 %v292
    %1294 = vmatpush.msra.mxu0 %v288
    %1295 = vmatpush.msra.mxu0 %v284
    %1296 = vmatpush.msra.mxu0 %v280
    %1297 = vmatpush.msra.mxu0 %v276
    %1298 = vmatpush.msra.mxu0 %v272
    %1299 = vmatpush.msra.mxu0 %v268
    %1300 = vmatpush.msra.mxu0 %v264
    %1301 = vmatpush.msra.mxu0 %v260
    %1302 = vmatmul.f32.gmra.mxu0 %v1076
    %v1303 = vpop.f32.mrf.mxu0
    %v1304 = vadd.f32 0.0, %v1303
    %1305 = vdwg.mxu0
    %v1310 = vrot.slane %v1244, 4
    %v1311 = vrot.slane %v1264, 4
    %v1312 = vrot.slane %v1284, 4
    %v1313 = vrot.slane %v1304, 4
    %v1318 = vadd.f32 %v183, %v1310
    %v1319 = vadd.f32 %v206, %v1311
    %v1320 = vadd.f32 %v229, %v1312
    %v1321 = vadd.f32 %v252, %v1313
    %v1322 = vxor.u32 %v1318, 2147483648
    %v1323 = vxor.u32 %v1319, 2147483648
    %v1324 = vxor.u32 %v1321, 2147483648
    %v1325 = vmul.f32 %v1322, 1.442695
    %v1326 = vpow.pop %v1325
    %v1327 = vmul.f32 %v1323, 1.442695
    %v1328 = vpow.pop %v1327
    %v1329 = vmul.f32 %v1324, 1.442695
    %v1330 = vpow.pop %v1329
    %v1331 = vadd.f32 %v1326, 1.0
    %v1332 = vadd.f32 %v1328, 1.0
    %v1333 = vadd.f32 %v1330, 1.0
    %v1334 = vrcp.pop %v1331
    %v1335 = vmul.f32 %v1331, %v1334
    %v1336 = vsub.f32 1.0, %v1335
    %v1337 = vmul.f32 %v1334, %v1336
    %v1338 = vadd.f32 %v1334, %v1337
    %vm1339 = vweird.f32 %v1331
    %vm1340 = vweird.f32 %v1334
    %vm1341 = vmor %vm1339, %vm1340
    %v1342 = vsel %vm1341, %v1334, %v1338
    %v1343 = vand.u32 2147483647, %v1331
    %vm1344 = vcmp.eq.f32.partialorder %v1343, 8.507059e+37
    %v1345 = vand.u32 %v1331, 2147483648
    %v1346 = vor.u32 1.1754944e-38, %v1345
    %v1347 = vsel %vm1344, %v1346, %v1342
    %v1348 = vmul.f32 1.0, %v1347
    %v1349 = vrcp.pop %v1332
    %v1350 = vmul.f32 %v1332, %v1349
    %v1351 = vsub.f32 1.0, %v1350
    %v1352 = vmul.f32 %v1349, %v1351
    %v1353 = vadd.f32 %v1349, %v1352
    %vm1354 = vweird.f32 %v1332
    %vm1355 = vweird.f32 %v1349
    %vm1356 = vmor %vm1354, %vm1355
    %v1357 = vsel %vm1356, %v1349, %v1353
    %v1358 = vand.u32 2147483647, %v1332
    %vm1359 = vcmp.eq.f32.partialorder %v1358, 8.507059e+37
    %v1360 = vand.u32 %v1332, 2147483648
    %v1361 = vor.u32 1.1754944e-38, %v1360
    %v1362 = vsel %vm1359, %v1361, %v1357
    %v1363 = vmul.f32 1.0, %v1362
    %v1364 = vrcp.pop %v1333
    %v1365 = vmul.f32 %v1333, %v1364
    %v1366 = vsub.f32 1.0, %v1365
    %v1367 = vmul.f32 %v1364, %v1366
    %v1368 = vadd.f32 %v1364, %v1367
    %vm1369 = vweird.f32 %v1333
    %vm1370 = vweird.f32 %v1364
    %vm1371 = vmor %vm1369, %vm1370
    %v1372 = vsel %vm1371, %v1364, %v1368
    %v1373 = vand.u32 2147483647, %v1333
    %vm1374 = vcmp.eq.f32.partialorder %v1373, 8.507059e+37
    %v1375 = vand.u32 %v1333, 2147483648
    %v1376 = vor.u32 1.1754944e-38, %v1375
    %v1377 = vsel %vm1374, %v1376, %v1372
    %v1378 = vmul.f32 1.0, %v1377
    %v1379 = vtanh.pop %v1320
    %v1381 = vrot.slane %v992, 6
    %v1383 = vmul.f32 %v1363, %v1381
    %v1384 = vmul.f32 %v1348, %v1379
    %v1385 = vadd.f32 %v1383, %v1384
    %v1386 = vtanh.pop %v1385
    %v1387 = vmul.f32 %v1378, %v1386
    %1388 = vmatpush.msra.mxu0 %v445
    %1389 = vmatpush.msra.mxu0 %v441
    %1390 = vmatpush.msra.mxu0 %v437
    %1391 = vmatpush.msra.mxu0 %v433
    %1392 = vmatpush.msra.mxu0 %v429
    %1393 = vmatpush.msra.mxu0 %v425
    %1394 = vmatpush.msra.mxu0 %v421
    %1395 = vmatpush.msra.mxu0 %v417
    %1396 = vmatpush.msra.mxu0 %v413
    %1397 = vmatpush.msra.mxu0 %v409
    %1398 = vmatpush.msra.mxu0 %v405
    %1399 = vmatpush.msra.mxu0 %v401
    %1400 = vmatpush.msra.mxu0 %v397
    %1401 = vmatpush.msra.mxu0 %v393
    %1402 = vmatpush.msra.mxu0 %v389
    %1403 = vmatpush.msra.mxu0 %v385
    %1404 = vmatmul.f32.gmra.mxu0 %v1224
    %v1405 = vpop.f32.mrf.mxu0
    %v1406 = vadd.f32 0.0, %v1405
    %1407 = vdwg.mxu0
    %1408 = vmatpush.msra.mxu0 %v446
    %1409 = vmatpush.msra.mxu0 %v442
    %1410 = vmatpush.msra.mxu0 %v438
    %1411 = vmatpush.msra.mxu0 %v434
    %1412 = vmatpush.msra.mxu0 %v430
    %1413 = vmatpush.msra.mxu0 %v426
    %1414 = vmatpush.msra.mxu0 %v422
    %1415 = vmatpush.msra.mxu0 %v418
    %1416 = vmatpush.msra.mxu0 %v414
    %1417 = vmatpush.msra.mxu0 %v410
    %1418 = vmatpush.msra.mxu0 %v406
    %1419 = vmatpush.msra.mxu0 %v402
    %1420 = vmatpush.msra.mxu0 %v398
    %1421 = vmatpush.msra.mxu0 %v394
    %1422 = vmatpush.msra.mxu0 %v390
    %1423 = vmatpush.msra.mxu0 %v386
    %1424 = vmatmul.f32.gmra.mxu0 %v1224
    %v1425 = vpop.f32.mrf.mxu0
    %v1426 = vadd.f32 0.0, %v1425
    %1427 = vdwg.mxu0
    %1428 = vmatpush.msra.mxu0 %v447
    %1429 = vmatpush.msra.mxu0 %v443
    %1430 = vmatpush.msra.mxu0 %v439
    %1431 = vmatpush.msra.mxu0 %v435
    %1432 = vmatpush.msra.mxu0 %v431
    %1433 = vmatpush.msra.mxu0 %v427
    %1434 = vmatpush.msra.mxu0 %v423
    %1435 = vmatpush.msra.mxu0 %v419
    %1436 = vmatpush.msra.mxu0 %v415
    %1437 = vmatpush.msra.mxu0 %v411
    %1438 = vmatpush.msra.mxu0 %v407
    %1439 = vmatpush.msra.mxu0 %v403
    %1440 = vmatpush.msra.mxu0 %v399
    %1441 = vmatpush.msra.mxu0 %v395
    %1442 = vmatpush.msra.mxu0 %v391
    %1443 = vmatpush.msra.mxu0 %v387
    %1444 = vmatmul.f32.gmra.mxu0 %v1224
    %v1445 = vpop.f32.mrf.mxu0
    %v1446 = vadd.f32 0.0, %v1445
    %1447 = vdwg.mxu0
    %1448 = vmatpush.msra.mxu0 %v448
    %1449 = vmatpush.msra.mxu0 %v444
    %1450 = vmatpush.msra.mxu0 %v440
    %1451 = vmatpush.msra.mxu0 %v436
    %1452 = vmatpush.msra.mxu0 %v432
    %1453 = vmatpush.msra.mxu0 %v428
    %1454 = vmatpush.msra.mxu0 %v424
    %1455 = vmatpush.msra.mxu0 %v420
    %1456 = vmatpush.msra.mxu0 %v416
    %1457 = vmatpush.msra.mxu0 %v412
    %1458 = vmatpush.msra.mxu0 %v408
    %1459 = vmatpush.msra.mxu0 %v404
    %1460 = vmatpush.msra.mxu0 %v400
    %1461 = vmatpush.msra.mxu0 %v396
    %1462 = vmatpush.msra.mxu0 %v392
    %1463 = vmatpush.msra.mxu0 %v388
    %1464 = vmatmul.f32.gmra.mxu0 %v1224
    %v1465 = vpop.f32.mrf.mxu0
    %v1466 = vadd.f32 0.0, %v1465
    %1467 = vdwg.mxu0
    %v1469 = vrot.slane %v1387, 4
    %1471 = vmatpush.msra.mxu0 %v381
    %1472 = vmatpush.msra.mxu0 %v377
    %1473 = vmatpush.msra.mxu0 %v373
    %1474 = vmatpush.msra.mxu0 %v369
    %1475 = vmatpush.msra.mxu0 %v365
    %1476 = vmatpush.msra.mxu0 %v361
    %1477 = vmatpush.msra.mxu0 %v357
    %1478 = vmatpush.msra.mxu0 %v353
    %1479 = vmatpush.msra.mxu0 %v349
    %1480 = vmatpush.msra.mxu0 %v345
    %1481 = vmatpush.msra.mxu0 %v341
    %1482 = vmatpush.msra.mxu0 %v337
    %1483 = vmatpush.msra.mxu0 %v333
    %1484 = vmatpush.msra.mxu0 %v329
    %1485 = vmatpush.msra.mxu0 %v325
    %1486 = vmatpush.msra.mxu0 %v321
    %1487 = vmatmul.f32.gmra.mxu0 %v1469
    %v1488 = vpop.f32.mrf.mxu0
    %v1489 = vadd.f32 %v1406, %v1488
    %1490 = vdwg.mxu0
    %1491 = vmatpush.msra.mxu0 %v382
    %1492 = vmatpush.msra.mxu0 %v378
    %1493 = vmatpush.msra.mxu0 %v374
    %1494 = vmatpush.msra.mxu0 %v370
    %1495 = vmatpush.msra.mxu0 %v366
    %1496 = vmatpush.msra.mxu0 %v362
    %1497 = vmatpush.msra.mxu0 %v358
    %1498 = vmatpush.msra.mxu0 %v354
    %1499 = vmatpush.msra.mxu0 %v350
    %1500 = vmatpush.msra.mxu0 %v346
    %1501 = vmatpush.msra.mxu0 %v342
    %1502 = vmatpush.msra.mxu0 %v338
    %1503 = vmatpush.msra.mxu0 %v334
    %1504 = vmatpush.msra.mxu0 %v330
    %1505 = vmatpush.msra.mxu0 %v326
    %1506 = vmatpush.msra.mxu0 %v322
    %1507 = vmatmul.f32.gmra.mxu0 %v1469
    %v1508 = vpop.f32.mrf.mxu0
    %v1509 = vadd.f32 %v1426, %v1508
    %1510 = vdwg.mxu0
    %1511 = vmatpush.msra.mxu0 %v383
    %1512 = vmatpush.msra.mxu0 %v379
    %1513 = vmatpush.msra.mxu0 %v375
    %1514 = vmatpush.msra.mxu0 %v371
    %1515 = vmatpush.msra.mxu0 %v367
    %1516 = vmatpush.msra.mxu0 %v363
    %1517 = vmatpush.msra.mxu0 %v359
    %1518 = vmatpush.msra.mxu0 %v355
    %1519 = vmatpush.msra.mxu0 %v351
    %1520 = vmatpush.msra.mxu0 %v347
    %1521 = vmatpush.msra.mxu0 %v343
    %1522 = vmatpush.msra.mxu0 %v339
    %1523 = vmatpush.msra.mxu0 %v335
    %1524 = vmatpush.msra.mxu0 %v331
    %1525 = vmatpush.msra.mxu0 %v327
    %1526 = vmatpush.msra.mxu0 %v323
    %1527 = vmatmul.f32.gmra.mxu0 %v1469
    %v1528 = vpop.f32.mrf.mxu0
    %v1529 = vadd.f32 %v1446, %v1528
    %1530 = vdwg.mxu0
    %1531 = vmatpush.msra.mxu0 %v384
    %1532 = vmatpush.msra.mxu0 %v380
    %1533 = vmatpush.msra.mxu0 %v376
    %1534 = vmatpush.msra.mxu0 %v372
    %1535 = vmatpush.msra.mxu0 %v368
    %1536 = vmatpush.msra.mxu0 %v364
    %1537 = vmatpush.msra.mxu0 %v360
    %1538 = vmatpush.msra.mxu0 %v356
    %1539 = vmatpush.msra.mxu0 %v352
    %1540 = vmatpush.msra.mxu0 %v348
    %1541 = vmatpush.msra.mxu0 %v344
    %1542 = vmatpush.msra.mxu0 %v340
    %1543 = vmatpush.msra.mxu0 %v336
    %1544 = vmatpush.msra.mxu0 %v332
    %1545 = vmatpush.msra.mxu0 %v328
    %1546 = vmatpush.msra.mxu0 %v324
    %1547 = vmatmul.f32.gmra.mxu0 %v1469
    %v1548 = vpop.f32.mrf.mxu0
    %v1549 = vadd.f32 %v1466, %v1548
    %1550 = vdwg.mxu0
    %v1551 = vadd.f32 %v1489, %v451
    %v1552 = vadd.f32 %v1509, %v452
    %v1553 = vadd.f32 %v1529, %v453
    %v1554 = vadd.f32 %v1549, %v454
    %v1555 = vxor.u32 %v1551, 2147483648
    %v1556 = vxor.u32 %v1552, 2147483648
    %v1557 = vxor.u32 %v1554, 2147483648
    %v1558 = vmul.f32 %v1555, 1.442695
    %v1559 = vpow.pop %v1558
    %v1560 = vmul.f32 %v1556, 1.442695
    %v1561 = vpow.pop %v1560
    %v1562 = vmul.f32 %v1557, 1.442695
    %v1563 = vpow.pop %v1562
    %v1564 = vadd.f32 %v1559, 1.0
    %v1565 = vadd.f32 %v1561, 1.0
    %v1566 = vadd.f32 %v1563, 1.0
    %v1567 = vrcp.pop %v1564
    %v1568 = vmul.f32 %v1564, %v1567
    %v1569 = vsub.f32 1.0, %v1568
    %v1570 = vmul.f32 %v1567, %v1569
    %v1571 = vadd.f32 %v1567, %v1570
    %vm1572 = vweird.f32 %v1564
    %vm1573 = vweird.f32 %v1567
    %vm1574 = vmor %vm1572, %vm1573
    %v1575 = vsel %vm1574, %v1567, %v1571
    %v1576 = vand.u32 2147483647, %v1564
    %vm1577 = vcmp.eq.f32.partialorder %v1576, 8.507059e+37
    %v1578 = vand.u32 %v1564, 2147483648
    %v1579 = vor.u32 1.1754944e-38, %v1578
    %v1580 = vsel %vm1577, %v1579, %v1575
    %v1581 = vmul.f32 1.0, %v1580
    %v1582 = vrcp.pop %v1565
    %v1583 = vmul.f32 %v1565, %v1582
    %v1584 = vsub.f32 1.0, %v1583
    %v1585 = vmul.f32 %v1582, %v1584
    %v1586 = vadd.f32 %v1582, %v1585
    %vm1587 = vweird.f32 %v1565
    %vm1588 = vweird.f32 %v1582
    %vm1589 = vmor %vm1587, %vm1588
    %v1590 = vsel %vm1589, %v1582, %v1586
    %v1591 = vand.u32 2147483647, %v1565
    %vm1592 = vcmp.eq.f32.partialorder %v1591, 8.507059e+37
    %v1593 = vand.u32 %v1565, 2147483648
    %v1594 = vor.u32 1.1754944e-38, %v1593
    %v1595 = vsel %vm1592, %v1594, %v1590
    %v1596 = vmul.f32 1.0, %v1595
    %v1597 = vrcp.pop %v1566
    %v1598 = vmul.f32 %v1566, %v1597
    %v1599 = vsub.f32 1.0, %v1598
    %v1600 = vmul.f32 %v1597, %v1599
    %v1601 = vadd.f32 %v1597, %v1600
    %vm1602 = vweird.f32 %v1566
    %vm1603 = vweird.f32 %v1597
    %vm1604 = vmor %vm1602, %vm1603
    %v1605 = vsel %vm1604, %v1597, %v1601
    %v1606 = vand.u32 2147483647, %v1566
    %vm1607 = vcmp.eq.f32.partialorder %v1606, 8.507059e+37
    %v1608 = vand.u32 %v1566, 2147483648
    %v1609 = vor.u32 1.1754944e-38, %v1608
    %v1610 = vsel %vm1607, %v1609, %v1605
    %v1611 = vmul.f32 1.0, %v1610
    %v1612 = vtanh.pop %v1553
    %v1613 = vmul.f32 %v1596, %v1222
    %v1614 = vmul.f32 %v1581, %v1612
    %v1615 = vadd.f32 %v1613, %v1614
    %v1616 = vtanh.pop %v1615
    %v1617 = vmul.f32 %v1611, %v1616
    %v1618 = vmax.f32 %v1225, %v1617
    %1619 = vmatpush.msra.mxu0 %v317
    %1620 = vmatpush.msra.mxu0 %v313
    %1621 = vmatpush.msra.mxu0 %v309
    %1622 = vmatpush.msra.mxu0 %v305
    %1623 = vmatpush.msra.mxu0 %v301
    %1624 = vmatpush.msra.mxu0 %v297
    %1625 = vmatpush.msra.mxu0 %v293
    %1626 = vmatpush.msra.mxu0 %v289
    %1627 = vmatpush.msra.mxu0 %v285
    %1628 = vmatpush.msra.mxu0 %v281
    %1629 = vmatpush.msra.mxu0 %v277
    %1630 = vmatpush.msra.mxu0 %v273
    %1631 = vmatpush.msra.mxu0 %v269
    %1632 = vmatpush.msra.mxu0 %v265
    %1633 = vmatpush.msra.mxu0 %v261
    %1634 = vmatpush.msra.mxu0 %v257
    %1635 = vmatmul.f32.gmra.mxu0 %v1469
    %v1636 = vpop.f32.mrf.mxu0
    %v1637 = vadd.f32 0.0, %v1636
    %1638 = vdwg.mxu0
    %1639 = vmatpush.msra.mxu0 %v318
    %1640 = vmatpush.msra.mxu0 %v314
    %1641 = vmatpush.msra.mxu0 %v310
    %1642 = vmatpush.msra.mxu0 %v306
    %1643 = vmatpush.msra.mxu0 %v302
    %1644 = vmatpush.msra.mxu0 %v298
    %1645 = vmatpush.msra.mxu0 %v294
    %1646 = vmatpush.msra.mxu0 %v290
    %1647 = vmatpush.msra.mxu0 %v286
    %1648 = vmatpush.msra.mxu0 %v282
    %1649 = vmatpush.msra.mxu0 %v278
    %1650 = vmatpush.msra.mxu0 %v274
    %1651 = vmatpush.msra.mxu0 %v270
    %1652 = vmatpush.msra.mxu0 %v266
    %1653 = vmatpush.msra.mxu0 %v262
    %1654 = vmatpush.msra.mxu0 %v258
    %1655 = vmatmul.f32.gmra.mxu0 %v1469
    %v1656 = vpop.f32.mrf.mxu0
    %v1657 = vadd.f32 0.0, %v1656
    %1658 = vdwg.mxu0
    %1659 = vmatpush.msra.mxu0 %v319
    %1660 = vmatpush.msra.mxu0 %v315
    %1661 = vmatpush.msra.mxu0 %v311
    %1662 = vmatpush.msra.mxu0 %v307
    %1663 = vmatpush.msra.mxu0 %v303
    %1664 = vmatpush.msra.mxu0 %v299
    %1665 = vmatpush.msra.mxu0 %v295
    %1666 = vmatpush.msra.mxu0 %v291
    %1667 = vmatpush.msra.mxu0 %v287
    %1668 = vmatpush.msra.mxu0 %v283
    %1669 = vmatpush.msra.mxu0 %v279
    %1670 = vmatpush.msra.mxu0 %v275
    %1671 = vmatpush.msra.mxu0 %v271
    %1672 = vmatpush.msra.mxu0 %v267
    %1673 = vmatpush.msra.mxu0 %v263
    %1674 = vmatpush.msra.mxu0 %v259
    %1675 = vmatmul.f32.gmra.mxu0 %v1469
    %v1676 = vpop.f32.mrf.mxu0
    %v1677 = vadd.f32 0.0, %v1676
    %1678 = vdwg.mxu0
    %1679 = vmatpush.msra.mxu0 %v320
    %1680 = vmatpush.msra.mxu0 %v316
    %1681 = vmatpush.msra.mxu0 %v312
    %1682 = vmatpush.msra.mxu0 %v308
    %1683 = vmatpush.msra.mxu0 %v304
    %1684 = vmatpush.msra.mxu0 %v300
    %1685 = vmatpush.msra.mxu0 %v296
    %1686 = vmatpush.msra.mxu0 %v292
    %1687 = vmatpush.msra.mxu0 %v288
    %1688 = vmatpush.msra.mxu0 %v284
    %1689 = vmatpush.msra.mxu0 %v280
    %1690 = vmatpush.msra.mxu0 %v276
    %1691 = vmatpush.msra.mxu0 %v272
    %1692 = vmatpush.msra.mxu0 %v268
    %1693 = vmatpush.msra.mxu0 %v264
    %1694 = vmatpush.msra.mxu0 %v260
    %1695 = vmatmul.f32.gmra.mxu0 %v1469
    %v1696 = vpop.f32.mrf.mxu0
    %v1697 = vadd.f32 0.0, %v1696
    %1698 = vdwg.mxu0
    %v1703 = vrot.slane %v1637, 2
    %v1704 = vrot.slane %v1657, 2
    %v1705 = vrot.slane %v1677, 2
    %v1706 = vrot.slane %v1697, 2
    %v1711 = vadd.f32 %v183, %v1703
    %v1712 = vadd.f32 %v206, %v1704
    %v1713 = vadd.f32 %v229, %v1705
    %v1714 = vadd.f32 %v252, %v1706
    %v1715 = vxor.u32 %v1711, 2147483648
    %v1716 = vxor.u32 %v1712, 2147483648
    %v1717 = vxor.u32 %v1714, 2147483648
    %v1718 = vmul.f32 %v1715, 1.442695
    %v1719 = vpow.pop %v1718
    %v1720 = vmul.f32 %v1716, 1.442695
    %v1721 = vpow.pop %v1720
    %v1722 = vmul.f32 %v1717, 1.442695
    %v1723 = vpow.pop %v1722
    %v1724 = vadd.f32 %v1719, 1.0
    %v1725 = vadd.f32 %v1721, 1.0
    %v1726 = vadd.f32 %v1723, 1.0
    %v1727 = vrcp.pop %v1724
    %v1728 = vmul.f32 %v1724, %v1727
    %v1729 = vsub.f32 1.0, %v1728
    %v1730 = vmul.f32 %v1727, %v1729
    %v1731 = vadd.f32 %v1727, %v1730
    %vm1732 = vweird.f32 %v1724
    %vm1733 = vweird.f32 %v1727
    %vm1734 = vmor %vm1732, %vm1733
    %v1735 = vsel %vm1734, %v1727, %v1731
    %v1736 = vand.u32 2147483647, %v1724
    %vm1737 = vcmp.eq.f32.partialorder %v1736, 8.507059e+37
    %v1738 = vand.u32 %v1724, 2147483648
    %v1739 = vor.u32 1.1754944e-38, %v1738
    %v1740 = vsel %vm1737, %v1739, %v1735
    %v1741 = vmul.f32 1.0, %v1740
    %v1742 = vrcp.pop %v1725
    %v1743 = vmul.f32 %v1725, %v1742
    %v1744 = vsub.f32 1.0, %v1743
    %v1745 = vmul.f32 %v1742, %v1744
    %v1746 = vadd.f32 %v1742, %v1745
    %vm1747 = vweird.f32 %v1725
    %vm1748 = vweird.f32 %v1742
    %vm1749 = vmor %vm1747, %vm1748
    %v1750 = vsel %vm1749, %v1742, %v1746
    %v1751 = vand.u32 2147483647, %v1725
    %vm1752 = vcmp.eq.f32.partialorder %v1751, 8.507059e+37
    %v1753 = vand.u32 %v1725, 2147483648
    %v1754 = vor.u32 1.1754944e-38, %v1753
    %v1755 = vsel %vm1752, %v1754, %v1750
    %v1756 = vmul.f32 1.0, %v1755
    %v1757 = vrcp.pop %v1726
    %v1758 = vmul.f32 %v1726, %v1757
    %v1759 = vsub.f32 1.0, %v1758
    %v1760 = vmul.f32 %v1757, %v1759
    %v1761 = vadd.f32 %v1757, %v1760
    %vm1762 = vweird.f32 %v1726
    %vm1763 = vweird.f32 %v1757
    %vm1764 = vmor %vm1762, %vm1763
    %v1765 = vsel %vm1764, %v1757, %v1761
    %v1766 = vand.u32 2147483647, %v1726
    %vm1767 = vcmp.eq.f32.partialorder %v1766, 8.507059e+37
    %v1768 = vand.u32 %v1726, 2147483648
    %v1769 = vor.u32 1.1754944e-38, %v1768
    %v1770 = vsel %vm1767, %v1769, %v1765
    %v1771 = vmul.f32 1.0, %v1770
    %v1772 = vtanh.pop %v1713
    %v1774 = vrot.slane %v1385, 6
    %v1776 = vmul.f32 %v1756, %v1774
    %v1777 = vmul.f32 %v1741, %v1772
    %v1778 = vadd.f32 %v1776, %v1777
    %v1779 = vtanh.pop %v1778
    %v1780 = vmul.f32 %v1771, %v1779
    %1781 = vmatpush.msra.mxu0 %v445
    %1782 = vmatpush.msra.mxu0 %v441
    %1783 = vmatpush.msra.mxu0 %v437
    %1784 = vmatpush.msra.mxu0 %v433
    %1785 = vmatpush.msra.mxu0 %v429
    %1786 = vmatpush.msra.mxu0 %v425
    %1787 = vmatpush.msra.mxu0 %v421
    %1788 = vmatpush.msra.mxu0 %v417
    %1789 = vmatpush.msra.mxu0 %v413
    %1790 = vmatpush.msra.mxu0 %v409
    %1791 = vmatpush.msra.mxu0 %v405
    %1792 = vmatpush.msra.mxu0 %v401
    %1793 = vmatpush.msra.mxu0 %v397
    %1794 = vmatpush.msra.mxu0 %v393
    %1795 = vmatpush.msra.mxu0 %v389
    %1796 = vmatpush.msra.mxu0 %v385
    %1797 = vmatmul.f32.gmra.mxu0 %v1617
    %v1798 = vpop.f32.mrf.mxu0
    %v1799 = vadd.f32 0.0, %v1798
    %1800 = vdwg.mxu0
    %1801 = vmatpush.msra.mxu0 %v446
    %1802 = vmatpush.msra.mxu0 %v442
    %1803 = vmatpush.msra.mxu0 %v438
    %1804 = vmatpush.msra.mxu0 %v434
    %1805 = vmatpush.msra.mxu0 %v430
    %1806 = vmatpush.msra.mxu0 %v426
    %1807 = vmatpush.msra.mxu0 %v422
    %1808 = vmatpush.msra.mxu0 %v418
    %1809 = vmatpush.msra.mxu0 %v414
    %1810 = vmatpush.msra.mxu0 %v410
    %1811 = vmatpush.msra.mxu0 %v406
    %1812 = vmatpush.msra.mxu0 %v402
    %1813 = vmatpush.msra.mxu0 %v398
    %1814 = vmatpush.msra.mxu0 %v394
    %1815 = vmatpush.msra.mxu0 %v390
    %1816 = vmatpush.msra.mxu0 %v386
    %1817 = vmatmul.f32.gmra.mxu0 %v1617
    %v1818 = vpop.f32.mrf.mxu0
    %v1819 = vadd.f32 0.0, %v1818
    %1820 = vdwg.mxu0
    %1821 = vmatpush.msra.mxu0 %v447
    %1822 = vmatpush.msra.mxu0 %v443
    %1823 = vmatpush.msra.mxu0 %v439
    %1824 = vmatpush.msra.mxu0 %v435
    %1825 = vmatpush.msra.mxu0 %v431
    %1826 = vmatpush.msra.mxu0 %v427
    %1827 = vmatpush.msra.mxu0 %v423
    %1828 = vmatpush.msra.mxu0 %v419
    %1829 = vmatpush.msra.mxu0 %v415
    %1830 = vmatpush.msra.mxu0 %v411
    %1831 = vmatpush.msra.mxu0 %v407
    %1832 = vmatpush.msra.mxu0 %v403
    %1833 = vmatpush.msra.mxu0 %v399
    %1834 = vmatpush.msra.mxu0 %v395
    %1835 = vmatpush.msra.mxu0 %v391
    %1836 = vmatpush.msra.mxu0 %v387
    %1837 = vmatmul.f32.gmra.mxu0 %v1617
    %v1838 = vpop.f32.mrf.mxu0
    %v1839 = vadd.f32 0.0, %v1838
    %1840 = vdwg.mxu0
    %1841 = vmatpush.msra.mxu0 %v448
    %1842 = vmatpush.msra.mxu0 %v444
    %1843 = vmatpush.msra.mxu0 %v440
    %1844 = vmatpush.msra.mxu0 %v436
    %1845 = vmatpush.msra.mxu0 %v432
    %1846 = vmatpush.msra.mxu0 %v428
    %1847 = vmatpush.msra.mxu0 %v424
    %1848 = vmatpush.msra.mxu0 %v420
    %1849 = vmatpush.msra.mxu0 %v416
    %1850 = vmatpush.msra.mxu0 %v412
    %1851 = vmatpush.msra.mxu0 %v408
    %1852 = vmatpush.msra.mxu0 %v404
    %1853 = vmatpush.msra.mxu0 %v400
    %1854 = vmatpush.msra.mxu0 %v396
    %1855 = vmatpush.msra.mxu0 %v392
    %1856 = vmatpush.msra.mxu0 %v388
    %1857 = vmatmul.f32.gmra.mxu0 %v1617
    %v1858 = vpop.f32.mrf.mxu0
    %v1859 = vadd.f32 0.0, %v1858
    %1860 = vdwg.mxu0
    %v1862 = vrot.slane %v1780, 6
    %1864 = vmatpush.msra.mxu0 %v381
    %1865 = vmatpush.msra.mxu0 %v377
    %1866 = vmatpush.msra.mxu0 %v373
    %1867 = vmatpush.msra.mxu0 %v369
    %1868 = vmatpush.msra.mxu0 %v365
    %1869 = vmatpush.msra.mxu0 %v361
    %1870 = vmatpush.msra.mxu0 %v357
    %1871 = vmatpush.msra.mxu0 %v353
    %1872 = vmatpush.msra.mxu0 %v349
    %1873 = vmatpush.msra.mxu0 %v345
    %1874 = vmatpush.msra.mxu0 %v341
    %1875 = vmatpush.msra.mxu0 %v337
    %1876 = vmatpush.msra.mxu0 %v333
    %1877 = vmatpush.msra.mxu0 %v329
    %1878 = vmatpush.msra.mxu0 %v325
    %1879 = vmatpush.msra.mxu0 %v321
    %1880 = vmatmul.f32.gmra.mxu0 %v1862
    %v1881 = vpop.f32.mrf.mxu0
    %v1882 = vadd.f32 %v1799, %v1881
    %1883 = vdwg.mxu0
    %1884 = vmatpush.msra.mxu0 %v382
    %1885 = vmatpush.msra.mxu0 %v378
    %1886 = vmatpush.msra.mxu0 %v374
    %1887 = vmatpush.msra.mxu0 %v370
    %1888 = vmatpush.msra.mxu0 %v366
    %1889 = vmatpush.msra.mxu0 %v362
    %1890 = vmatpush.msra.mxu0 %v358
    %1891 = vmatpush.msra.mxu0 %v354
    %1892 = vmatpush.msra.mxu0 %v350
    %1893 = vmatpush.msra.mxu0 %v346
    %1894 = vmatpush.msra.mxu0 %v342
    %1895 = vmatpush.msra.mxu0 %v338
    %1896 = vmatpush.msra.mxu0 %v334
    %1897 = vmatpush.msra.mxu0 %v330
    %1898 = vmatpush.msra.mxu0 %v326
    %1899 = vmatpush.msra.mxu0 %v322
    %1900 = vmatmul.f32.gmra.mxu0 %v1862
    %v1901 = vpop.f32.mrf.mxu0
    %v1902 = vadd.f32 %v1819, %v1901
    %1903 = vdwg.mxu0
    %1904 = vmatpush.msra.mxu0 %v383
    %1905 = vmatpush.msra.mxu0 %v379
    %1906 = vmatpush.msra.mxu0 %v375
    %1907 = vmatpush.msra.mxu0 %v371
    %1908 = vmatpush.msra.mxu0 %v367
    %1909 = vmatpush.msra.mxu0 %v363
    %1910 = vmatpush.msra.mxu0 %v359
    %1911 = vmatpush.msra.mxu0 %v355
    %1912 = vmatpush.msra.mxu0 %v351
    %1913 = vmatpush.msra.mxu0 %v347
    %1914 = vmatpush.msra.mxu0 %v343
    %1915 = vmatpush.msra.mxu0 %v339
    %1916 = vmatpush.msra.mxu0 %v335
    %1917 = vmatpush.msra.mxu0 %v331
    %1918 = vmatpush.msra.mxu0 %v327
    %1919 = vmatpush.msra.mxu0 %v323
    %1920 = vmatmul.f32.gmra.mxu0 %v1862
    %v1921 = vpop.f32.mrf.mxu0
    %v1922 = vadd.f32 %v1839, %v1921
    %1923 = vdwg.mxu0
    %1924 = vmatpush.msra.mxu0 %v384
    %1925 = vmatpush.msra.mxu0 %v380
    %1926 = vmatpush.msra.mxu0 %v376
    %1927 = vmatpush.msra.mxu0 %v372
    %1928 = vmatpush.msra.mxu0 %v368
    %1929 = vmatpush.msra.mxu0 %v364
    %1930 = vmatpush.msra.mxu0 %v360
    %1931 = vmatpush.msra.mxu0 %v356
    %1932 = vmatpush.msra.mxu0 %v352
    %1933 = vmatpush.msra.mxu0 %v348
    %1934 = vmatpush.msra.mxu0 %v344
    %1935 = vmatpush.msra.mxu0 %v340
    %1936 = vmatpush.msra.mxu0 %v336
    %1937 = vmatpush.msra.mxu0 %v332
    %1938 = vmatpush.msra.mxu0 %v328
    %1939 = vmatpush.msra.mxu0 %v324
    %1940 = vmatmul.f32.gmra.mxu0 %v1862
    %v1941 = vpop.f32.mrf.mxu0
    %v1942 = vadd.f32 %v1859, %v1941
    %1943 = vdwg.mxu0
    %v1944 = vadd.f32 %v1882, %v451
    %v1945 = vadd.f32 %v1902, %v452
    %v1946 = vadd.f32 %v1922, %v453
    %v1947 = vadd.f32 %v1942, %v454
    %v1948 = vxor.u32 %v1944, 2147483648
    %v1949 = vxor.u32 %v1945, 2147483648
    %v1950 = vxor.u32 %v1947, 2147483648
    %v1951 = vmul.f32 %v1948, 1.442695
    %v1952 = vpow.pop %v1951
    %v1953 = vmul.f32 %v1949, 1.442695
    %v1954 = vpow.pop %v1953
    %v1955 = vmul.f32 %v1950, 1.442695
    %v1956 = vpow.pop %v1955
    %v1957 = vadd.f32 %v1952, 1.0
    %v1958 = vadd.f32 %v1954, 1.0
    %v1959 = vadd.f32 %v1956, 1.0
    %v1960 = vrcp.pop %v1957
    %v1961 = vmul.f32 %v1957, %v1960
    %v1962 = vsub.f32 1.0, %v1961
    %v1963 = vmul.f32 %v1960, %v1962
    %v1964 = vadd.f32 %v1960, %v1963
    %vm1965 = vweird.f32 %v1957
    %vm1966 = vweird.f32 %v1960
    %vm1967 = vmor %vm1965, %vm1966
    %v1968 = vsel %vm1967, %v1960, %v1964
    %v1969 = vand.u32 2147483647, %v1957
    %vm1970 = vcmp.eq.f32.partialorder %v1969, 8.507059e+37
    %v1971 = vand.u32 %v1957, 2147483648
    %v1972 = vor.u32 1.1754944e-38, %v1971
    %v1973 = vsel %vm1970, %v1972, %v1968
    %v1974 = vmul.f32 1.0, %v1973
    %v1975 = vrcp.pop %v1958
    %v1976 = vmul.f32 %v1958, %v1975
    %v1977 = vsub.f32 1.0, %v1976
    %v1978 = vmul.f32 %v1975, %v1977
    %v1979 = vadd.f32 %v1975, %v1978
    %vm1980 = vweird.f32 %v1958
    %vm1981 = vweird.f32 %v1975
    %vm1982 = vmor %vm1980, %vm1981
    %v1983 = vsel %vm1982, %v1975, %v1979
    %v1984 = vand.u32 2147483647, %v1958
    %vm1985 = vcmp.eq.f32.partialorder %v1984, 8.507059e+37
    %v1986 = vand.u32 %v1958, 2147483648
    %v1987 = vor.u32 1.1754944e-38, %v1986
    %v1988 = vsel %vm1985, %v1987, %v1983
    %v1989 = vmul.f32 1.0, %v1988
    %v1990 = vrcp.pop %v1959
    %v1991 = vmul.f32 %v1959, %v1990
    %v1992 = vsub.f32 1.0, %v1991
    %v1993 = vmul.f32 %v1990, %v1992
    %v1994 = vadd.f32 %v1990, %v1993
    %vm1995 = vweird.f32 %v1959
    %vm1996 = vweird.f32 %v1990
    %vm1997 = vmor %vm1995, %vm1996
    %v1998 = vsel %vm1997, %v1990, %v1994
    %v1999 = vand.u32 2147483647, %v1959
    %vm2000 = vcmp.eq.f32.partialorder %v1999, 8.507059e+37
    %v2001 = vand.u32 %v1959, 2147483648
    %v2002 = vor.u32 1.1754944e-38, %v2001
    %v2003 = vsel %vm2000, %v2002, %v1998
    %v2004 = vmul.f32 1.0, %v2003
    %v2005 = vtanh.pop %v1946
    %v2006 = vmul.f32 %v1989, %v1615
    %v2007 = vmul.f32 %v1974, %v2005
    %v2008 = vadd.f32 %v2006, %v2007
    %v2009 = vtanh.pop %v2008
    %v2010 = vmul.f32 %v2004, %v2009
    %v2011 = vmax.f32 %v1618, %v2010
    %2012 = vmatpush.msra.mxu0 %v317
    %2013 = vmatpush.msra.mxu0 %v313
    %2014 = vmatpush.msra.mxu0 %v309
    %2015 = vmatpush.msra.mxu0 %v305
    %2016 = vmatpush.msra.mxu0 %v301
    %2017 = vmatpush.msra.mxu0 %v297
    %2018 = vmatpush.msra.mxu0 %v293
    %2019 = vmatpush.msra.mxu0 %v289
    %2020 = vmatpush.msra.mxu0 %v285
    %2021 = vmatpush.msra.mxu0 %v281
    %2022 = vmatpush.msra.mxu0 %v277
    %2023 = vmatpush.msra.mxu0 %v273
    %2024 = vmatpush.msra.mxu0 %v269
    %2025 = vmatpush.msra.mxu0 %v265
    %2026 = vmatpush.msra.mxu0 %v261
    %2027 = vmatpush.msra.mxu0 %v257
    %2028 = vmatmul.f32.gmra.mxu0 %v1862
    %v2029 = vpop.f32.mrf.mxu0
    %v2030 = vadd.f32 0.0, %v2029
    %2031 = vdwg.mxu0
    %2032 = vmatpush.msra.mxu0 %v318
    %2033 = vmatpush.msra.mxu0 %v314
    %2034 = vmatpush.msra.mxu0 %v310
    %2035 = vmatpush.msra.mxu0 %v306
    %2036 = vmatpush.msra.mxu0 %v302
    %2037 = vmatpush.msra.mxu0 %v298
    %2038 = vmatpush.msra.mxu0 %v294
    %2039 = vmatpush.msra.mxu0 %v290
    %2040 = vmatpush.msra.mxu0 %v286
    %2041 = vmatpush.msra.mxu0 %v282
    %2042 = vmatpush.msra.mxu0 %v278
    %2043 = vmatpush.msra.mxu0 %v274
    %2044 = vmatpush.msra.mxu0 %v270
    %2045 = vmatpush.msra.mxu0 %v266
    %2046 = vmatpush.msra.mxu0 %v262
    %2047 = vmatpush.msra.mxu0 %v258
    %2048 = vmatmul.f32.gmra.mxu0 %v1862
    %v2049 = vpop.f32.mrf.mxu0
    %v2050 = vadd.f32 0.0, %v2049
    %2051 = vdwg.mxu0
    %2052 = vmatpush.msra.mxu0 %v319
    %2053 = vmatpush.msra.mxu0 %v315
    %2054 = vmatpush.msra.mxu0 %v311
    %2055 = vmatpush.msra.mxu0 %v307
    %2056 = vmatpush.msra.mxu0 %v303
    %2057 = vmatpush.msra.mxu0 %v299
    %2058 = vmatpush.msra.mxu0 %v295
    %2059 = vmatpush.msra.mxu0 %v291
    %2060 = vmatpush.msra.mxu0 %v287
    %2061 = vmatpush.msra.mxu0 %v283
    %2062 = vmatpush.msra.mxu0 %v279
    %2063 = vmatpush.msra.mxu0 %v275
    %2064 = vmatpush.msra.mxu0 %v271
    %2065 = vmatpush.msra.mxu0 %v267
    %2066 = vmatpush.msra.mxu0 %v263
    %2067 = vmatpush.msra.mxu0 %v259
    %2068 = vmatmul.f32.gmra.mxu0 %v1862
    %v2069 = vpop.f32.mrf.mxu0
    %v2070 = vadd.f32 0.0, %v2069
    %2071 = vdwg.mxu0
    %2072 = vmatpush.msra.mxu0 %v320
    %2073 = vmatpush.msra.mxu0 %v316
    %2074 = vmatpush.msra.mxu0 %v312
    %2075 = vmatpush.msra.mxu0 %v308
    %2076 = vmatpush.msra.mxu0 %v304
    %2077 = vmatpush.msra.mxu0 %v300
    %2078 = vmatpush.msra.mxu0 %v296
    %2079 = vmatpush.msra.mxu0 %v292
    %2080 = vmatpush.msra.mxu0 %v288
    %2081 = vmatpush.msra.mxu0 %v284
    %2082 = vmatpush.msra.mxu0 %v280
    %2083 = vmatpush.msra.mxu0 %v276
    %2084 = vmatpush.msra.mxu0 %v272
    %2085 = vmatpush.msra.mxu0 %v268
    %2086 = vmatpush.msra.mxu0 %v264
    %2087 = vmatpush.msra.mxu0 %v260
    %2088 = vmatmul.f32.gmra.mxu0 %v1862
    %v2089 = vpop.f32.mrf.mxu0
    %v2090 = vadd.f32 0.0, %v2089
    %2091 = vdwg.mxu0
    %v2092 = vadd.f32 %v186, %v2030
    %v2093 = vadd.f32 %v209, %v2050
    %v2094 = vadd.f32 %v232, %v2070
    %v2095 = vadd.f32 %v255, %v2090
    %v2096 = vxor.u32 %v2092, 2147483648
    %v2097 = vxor.u32 %v2093, 2147483648
    %v2098 = vxor.u32 %v2095, 2147483648
    %v2099 = vmul.f32 %v2096, 1.442695
    %v2100 = vpow.pop %v2099
    %v2101 = vmul.f32 %v2097, 1.442695
    %v2102 = vpow.pop %v2101
    %v2103 = vmul.f32 %v2098, 1.442695
    %v2104 = vpow.pop %v2103
    %v2105 = vadd.f32 %v2100, 1.0
    %v2106 = vadd.f32 %v2102, 1.0
    %v2107 = vadd.f32 %v2104, 1.0
    %v2108 = vrcp.pop %v2105
    %v2109 = vmul.f32 %v2105, %v2108
    %v2110 = vsub.f32 1.0, %v2109
    %v2111 = vmul.f32 %v2108, %v2110
    %v2112 = vadd.f32 %v2108, %v2111
    %vm2113 = vweird.f32 %v2105
    %vm2114 = vweird.f32 %v2108
    %vm2115 = vmor %vm2113, %vm2114
    %v2116 = vsel %vm2115, %v2108, %v2112
    %v2117 = vand.u32 2147483647, %v2105
    %vm2118 = vcmp.eq.f32.partialorder %v2117, 8.507059e+37
    %v2119 = vand.u32 %v2105, 2147483648
    %v2120 = vor.u32 1.1754944e-38, %v2119
    %v2121 = vsel %vm2118, %v2120, %v2116
    %v2122 = vmul.f32 1.0, %v2121
    %v2123 = vrcp.pop %v2106
    %v2124 = vmul.f32 %v2106, %v2123
    %v2125 = vsub.f32 1.0, %v2124
    %v2126 = vmul.f32 %v2123, %v2125
    %v2127 = vadd.f32 %v2123, %v2126
    %vm2128 = vweird.f32 %v2106
    %vm2129 = vweird.f32 %v2123
    %vm2130 = vmor %vm2128, %vm2129
    %v2131 = vsel %vm2130, %v2123, %v2127
    %v2132 = vand.u32 2147483647, %v2106
    %vm2133 = vcmp.eq.f32.partialorder %v2132, 8.507059e+37
    %v2134 = vand.u32 %v2106, 2147483648
    %v2135 = vor.u32 1.1754944e-38, %v2134
    %v2136 = vsel %vm2133, %v2135, %v2131
    %v2137 = vmul.f32 1.0, %v2136
    %v2138 = vrcp.pop %v2107
    %v2139 = vmul.f32 %v2107, %v2138
    %v2140 = vsub.f32 1.0, %v2139
    %v2141 = vmul.f32 %v2138, %v2140
    %v2142 = vadd.f32 %v2138, %v2141
    %vm2143 = vweird.f32 %v2107
    %vm2144 = vweird.f32 %v2138
    %vm2145 = vmor %vm2143, %vm2144
    %v2146 = vsel %vm2145, %v2138, %v2142
    %v2147 = vand.u32 2147483647, %v2107
    %vm2148 = vcmp.eq.f32.partialorder %v2147, 8.507059e+37
    %v2149 = vand.u32 %v2107, 2147483648
    %v2150 = vor.u32 1.1754944e-38, %v2149
    %v2151 = vsel %vm2148, %v2150, %v2146
    %v2152 = vmul.f32 1.0, %v2151
    %v2153 = vtanh.pop %v2094
    %v2155 = vrot.slane %v1778, 6
    %v2157 = vmul.f32 %v2137, %v2155
    %v2158 = vmul.f32 %v2122, %v2153
    %v2159 = vadd.f32 %v2157, %v2158
    %v2160 = vtanh.pop %v2159
    %v2161 = vmul.f32 %v2152, %v2160
    %2162 = vmatpush.msra.mxu0 %v445
    %2163 = vmatpush.msra.mxu0 %v441
    %2164 = vmatpush.msra.mxu0 %v437
    %2165 = vmatpush.msra.mxu0 %v433
    %2166 = vmatpush.msra.mxu0 %v429
    %2167 = vmatpush.msra.mxu0 %v425
    %2168 = vmatpush.msra.mxu0 %v421
    %2169 = vmatpush.msra.mxu0 %v417
    %2170 = vmatpush.msra.mxu0 %v413
    %2171 = vmatpush.msra.mxu0 %v409
    %2172 = vmatpush.msra.mxu0 %v405
    %2173 = vmatpush.msra.mxu0 %v401
    %2174 = vmatpush.msra.mxu0 %v397
    %2175 = vmatpush.msra.mxu0 %v393
    %2176 = vmatpush.msra.mxu0 %v389
    %2177 = vmatpush.msra.mxu0 %v385
    %2178 = vmatmul.f32.gmra.mxu0 %v2010
    %v2179 = vpop.f32.mrf.mxu0
    %v2180 = vadd.f32 0.0, %v2179
    %2181 = vdwg.mxu0
    %2182 = vmatpush.msra.mxu0 %v446
    %2183 = vmatpush.msra.mxu0 %v442
    %2184 = vmatpush.msra.mxu0 %v438
    %2185 = vmatpush.msra.mxu0 %v434
    %2186 = vmatpush.msra.mxu0 %v430
    %2187 = vmatpush.msra.mxu0 %v426
    %2188 = vmatpush.msra.mxu0 %v422
    %2189 = vmatpush.msra.mxu0 %v418
    %2190 = vmatpush.msra.mxu0 %v414
    %2191 = vmatpush.msra.mxu0 %v410
    %2192 = vmatpush.msra.mxu0 %v406
    %2193 = vmatpush.msra.mxu0 %v402
    %2194 = vmatpush.msra.mxu0 %v398
    %2195 = vmatpush.msra.mxu0 %v394
    %2196 = vmatpush.msra.mxu0 %v390
    %2197 = vmatpush.msra.mxu0 %v386
    %2198 = vmatmul.f32.gmra.mxu0 %v2010
    %v2199 = vpop.f32.mrf.mxu0
    %v2200 = vadd.f32 0.0, %v2199
    %2201 = vdwg.mxu0
    %2202 = vmatpush.msra.mxu0 %v447
    %2203 = vmatpush.msra.mxu0 %v443
    %2204 = vmatpush.msra.mxu0 %v439
    %2205 = vmatpush.msra.mxu0 %v435
    %2206 = vmatpush.msra.mxu0 %v431
    %2207 = vmatpush.msra.mxu0 %v427
    %2208 = vmatpush.msra.mxu0 %v423
    %2209 = vmatpush.msra.mxu0 %v419
    %2210 = vmatpush.msra.mxu0 %v415
    %2211 = vmatpush.msra.mxu0 %v411
    %2212 = vmatpush.msra.mxu0 %v407
    %2213 = vmatpush.msra.mxu0 %v403
    %2214 = vmatpush.msra.mxu0 %v399
    %2215 = vmatpush.msra.mxu0 %v395
    %2216 = vmatpush.msra.mxu0 %v391
    %2217 = vmatpush.msra.mxu0 %v387
    %2218 = vmatmul.f32.gmra.mxu0 %v2010
    %v2219 = vpop.f32.mrf.mxu0
    %v2220 = vadd.f32 0.0, %v2219
    %2221 = vdwg.mxu0
    %2222 = vmatpush.msra.mxu0 %v448
    %2223 = vmatpush.msra.mxu0 %v444
    %2224 = vmatpush.msra.mxu0 %v440
    %2225 = vmatpush.msra.mxu0 %v436
    %2226 = vmatpush.msra.mxu0 %v432
    %2227 = vmatpush.msra.mxu0 %v428
    %2228 = vmatpush.msra.mxu0 %v424
    %2229 = vmatpush.msra.mxu0 %v420
    %2230 = vmatpush.msra.mxu0 %v416
    %2231 = vmatpush.msra.mxu0 %v412
    %2232 = vmatpush.msra.mxu0 %v408
    %2233 = vmatpush.msra.mxu0 %v404
    %2234 = vmatpush.msra.mxu0 %v400
    %2235 = vmatpush.msra.mxu0 %v396
    %2236 = vmatpush.msra.mxu0 %v392
    %2237 = vmatpush.msra.mxu0 %v388
    %2238 = vmatmul.f32.gmra.mxu0 %v2010
    %v2239 = vpop.f32.mrf.mxu0
    %v2240 = vadd.f32 0.0, %v2239
    %2241 = vdwg.mxu0
    %2242 = vmatpush.msra.mxu0 %v381
    %2243 = vmatpush.msra.mxu0 %v377
    %2244 = vmatpush.msra.mxu0 %v373
    %2245 = vmatpush.msra.mxu0 %v369
    %2246 = vmatpush.msra.mxu0 %v365
    %2247 = vmatpush.msra.mxu0 %v361
    %2248 = vmatpush.msra.mxu0 %v357
    %2249 = vmatpush.msra.mxu0 %v353
    %2250 = vmatpush.msra.mxu0 %v349
    %2251 = vmatpush.msra.mxu0 %v345
    %2252 = vmatpush.msra.mxu0 %v341
    %2253 = vmatpush.msra.mxu0 %v337
    %2254 = vmatpush.msra.mxu0 %v333
    %2255 = vmatpush.msra.mxu0 %v329
    %2256 = vmatpush.msra.mxu0 %v325
    %2257 = vmatpush.msra.mxu0 %v321
    %2258 = vmatmul.f32.gmra.mxu0 %v2161
    %v2259 = vpop.f32.mrf.mxu0
    %v2260 = vadd.f32 %v2180, %v2259
    %2261 = vdwg.mxu0
    %2262 = vmatpush.msra.mxu0 %v382
    %2263 = vmatpush.msra.mxu0 %v378
    %2264 = vmatpush.msra.mxu0 %v374
    %2265 = vmatpush.msra.mxu0 %v370
    %2266 = vmatpush.msra.mxu0 %v366
    %2267 = vmatpush.msra.mxu0 %v362
    %2268 = vmatpush.msra.mxu0 %v358
    %2269 = vmatpush.msra.mxu0 %v354
    %2270 = vmatpush.msra.mxu0 %v350
    %2271 = vmatpush.msra.mxu0 %v346
    %2272 = vmatpush.msra.mxu0 %v342
    %2273 = vmatpush.msra.mxu0 %v338
    %2274 = vmatpush.msra.mxu0 %v334
    %2275 = vmatpush.msra.mxu0 %v330
    %2276 = vmatpush.msra.mxu0 %v326
    %2277 = vmatpush.msra.mxu0 %v322
    %2278 = vmatmul.f32.gmra.mxu0 %v2161
    %v2279 = vpop.f32.mrf.mxu0
    %v2280 = vadd.f32 %v2200, %v2279
    %2281 = vdwg.mxu0
    %2282 = vmatpush.msra.mxu0 %v383
    %2283 = vmatpush.msra.mxu0 %v379
    %2284 = vmatpush.msra.mxu0 %v375
    %2285 = vmatpush.msra.mxu0 %v371
    %2286 = vmatpush.msra.mxu0 %v367
    %2287 = vmatpush.msra.mxu0 %v363
    %2288 = vmatpush.msra.mxu0 %v359
    %2289 = vmatpush.msra.mxu0 %v355
    %2290 = vmatpush.msra.mxu0 %v351
    %2291 = vmatpush.msra.mxu0 %v347
    %2292 = vmatpush.msra.mxu0 %v343
    %2293 = vmatpush.msra.mxu0 %v339
    %2294 = vmatpush.msra.mxu0 %v335
    %2295 = vmatpush.msra.mxu0 %v331
    %2296 = vmatpush.msra.mxu0 %v327
    %2297 = vmatpush.msra.mxu0 %v323
    %2298 = vmatmul.f32.gmra.mxu0 %v2161
    %v2299 = vpop.f32.mrf.mxu0
    %v2300 = vadd.f32 %v2220, %v2299
    %2301 = vdwg.mxu0
    %2302 = vmatpush.msra.mxu0 %v384
    %2303 = vmatpush.msra.mxu0 %v380
    %2304 = vmatpush.msra.mxu0 %v376
    %2305 = vmatpush.msra.mxu0 %v372
    %2306 = vmatpush.msra.mxu0 %v368
    %2307 = vmatpush.msra.mxu0 %v364
    %2308 = vmatpush.msra.mxu0 %v360
    %2309 = vmatpush.msra.mxu0 %v356
    %2310 = vmatpush.msra.mxu0 %v352
    %2311 = vmatpush.msra.mxu0 %v348
    %2312 = vmatpush.msra.mxu0 %v344
    %2313 = vmatpush.msra.mxu0 %v340
    %2314 = vmatpush.msra.mxu0 %v336
    %2315 = vmatpush.msra.mxu0 %v332
    %2316 = vmatpush.msra.mxu0 %v328
    %2317 = vmatpush.msra.mxu0 %v324
    %2318 = vmatmul.f32.gmra.mxu0 %v2161
    %v2319 = vpop.f32.mrf.mxu0
    %v2320 = vadd.f32 %v2240, %v2319
    %2321 = vdwg.mxu0
    %v2322 = vadd.f32 %v2260, %v451
    %v2323 = vadd.f32 %v2280, %v452
    %v2324 = vadd.f32 %v2300, %v453
    %v2325 = vadd.f32 %v2320, %v454
    %v2326 = vxor.u32 %v2322, 2147483648
    %v2327 = vxor.u32 %v2323, 2147483648
    %v2328 = vxor.u32 %v2325, 2147483648
    %v2329 = vmul.f32 %v2326, 1.442695
    %v2330 = vpow.pop %v2329
    %v2331 = vmul.f32 %v2327, 1.442695
    %v2332 = vpow.pop %v2331
    %v2333 = vmul.f32 %v2328, 1.442695
    %v2334 = vpow.pop %v2333
    %v2335 = vadd.f32 %v2330, 1.0
    %v2336 = vadd.f32 %v2332, 1.0
    %v2337 = vadd.f32 %v2334, 1.0
    %v2338 = vrcp.pop %v2335
    %v2339 = vmul.f32 %v2335, %v2338
    %v2340 = vsub.f32 1.0, %v2339
    %v2341 = vmul.f32 %v2338, %v2340
    %v2342 = vadd.f32 %v2338, %v2341
    %vm2343 = vweird.f32 %v2335
    %vm2344 = vweird.f32 %v2338
    %vm2345 = vmor %vm2343, %vm2344
    %v2346 = vsel %vm2345, %v2338, %v2342
    %v2347 = vand.u32 2147483647, %v2335
    %vm2348 = vcmp.eq.f32.partialorder %v2347, 8.507059e+37
    %v2349 = vand.u32 %v2335, 2147483648
    %v2350 = vor.u32 1.1754944e-38, %v2349
    %v2351 = vsel %vm2348, %v2350, %v2346
    %v2352 = vmul.f32 1.0, %v2351
    %v2353 = vrcp.pop %v2336
    %v2354 = vmul.f32 %v2336, %v2353
    %v2355 = vsub.f32 1.0, %v2354
    %v2356 = vmul.f32 %v2353, %v2355
    %v2357 = vadd.f32 %v2353, %v2356
    %vm2358 = vweird.f32 %v2336
    %vm2359 = vweird.f32 %v2353
    %vm2360 = vmor %vm2358, %vm2359
    %v2361 = vsel %vm2360, %v2353, %v2357
    %v2362 = vand.u32 2147483647, %v2336
    %vm2363 = vcmp.eq.f32.partialorder %v2362, 8.507059e+37
    %v2364 = vand.u32 %v2336, 2147483648
    %v2365 = vor.u32 1.1754944e-38, %v2364
    %v2366 = vsel %vm2363, %v2365, %v2361
    %v2367 = vmul.f32 1.0, %v2366
    %v2368 = vrcp.pop %v2337
    %v2369 = vmul.f32 %v2337, %v2368
    %v2370 = vsub.f32 1.0, %v2369
    %v2371 = vmul.f32 %v2368, %v2370
    %v2372 = vadd.f32 %v2368, %v2371
    %vm2373 = vweird.f32 %v2337
    %vm2374 = vweird.f32 %v2368
    %vm2375 = vmor %vm2373, %vm2374
    %v2376 = vsel %vm2375, %v2368, %v2372
    %v2377 = vand.u32 2147483647, %v2337
    %vm2378 = vcmp.eq.f32.partialorder %v2377, 8.507059e+37
    %v2379 = vand.u32 %v2337, 2147483648
    %v2380 = vor.u32 1.1754944e-38, %v2379
    %v2381 = vsel %vm2378, %v2380, %v2376
    %v2382 = vmul.f32 1.0, %v2381
    %v2383 = vtanh.pop %v2324
    %v2384 = vmul.f32 %v2367, %v2008
    %v2385 = vmul.f32 %v2352, %v2383
    %v2386 = vadd.f32 %v2384, %v2385
    %v2387 = vtanh.pop %v2386
    %v2388 = vmul.f32 %v2382, %v2387
    %v2389 = vmax.f32 %v2011, %v2388
    %2390 = vmatpush.msra.mxu0 %v317
    %2391 = vmatpush.msra.mxu0 %v313
    %2392 = vmatpush.msra.mxu0 %v309
    %2393 = vmatpush.msra.mxu0 %v305
    %2394 = vmatpush.msra.mxu0 %v301
    %2395 = vmatpush.msra.mxu0 %v297
    %2396 = vmatpush.msra.mxu0 %v293
    %2397 = vmatpush.msra.mxu0 %v289
    %2398 = vmatpush.msra.mxu0 %v285
    %2399 = vmatpush.msra.mxu0 %v281
    %2400 = vmatpush.msra.mxu0 %v277
    %2401 = vmatpush.msra.mxu0 %v273
    %2402 = vmatpush.msra.mxu0 %v269
    %2403 = vmatpush.msra.mxu0 %v265
    %2404 = vmatpush.msra.mxu0 %v261
    %2405 = vmatpush.msra.mxu0 %v257
    %2406 = vmatmul.f32.gmra.mxu0 %v2161
    %v2407 = vpop.f32.mrf.mxu0
    %v2408 = vadd.f32 0.0, %v2407
    %2409 = vdwg.mxu0
    %2410 = vmatpush.msra.mxu0 %v318
    %2411 = vmatpush.msra.mxu0 %v314
    %2412 = vmatpush.msra.mxu0 %v310
    %2413 = vmatpush.msra.mxu0 %v306
    %2414 = vmatpush.msra.mxu0 %v302
    %2415 = vmatpush.msra.mxu0 %v298
    %2416 = vmatpush.msra.mxu0 %v294
    %2417 = vmatpush.msra.mxu0 %v290
    %2418 = vmatpush.msra.mxu0 %v286
    %2419 = vmatpush.msra.mxu0 %v282
    %2420 = vmatpush.msra.mxu0 %v278
    %2421 = vmatpush.msra.mxu0 %v274
    %2422 = vmatpush.msra.mxu0 %v270
    %2423 = vmatpush.msra.mxu0 %v266
    %2424 = vmatpush.msra.mxu0 %v262
    %2425 = vmatpush.msra.mxu0 %v258
    %2426 = vmatmul.f32.gmra.mxu0 %v2161
    %v2427 = vpop.f32.mrf.mxu0
    %v2428 = vadd.f32 0.0, %v2427
    %2429 = vdwg.mxu0
    %2430 = vmatpush.msra.mxu0 %v319
    %2431 = vmatpush.msra.mxu0 %v315
    %2432 = vmatpush.msra.mxu0 %v311
    %2433 = vmatpush.msra.mxu0 %v307
    %2434 = vmatpush.msra.mxu0 %v303
    %2435 = vmatpush.msra.mxu0 %v299
    %2436 = vmatpush.msra.mxu0 %v295
    %2437 = vmatpush.msra.mxu0 %v291
    %2438 = vmatpush.msra.mxu0 %v287
    %2439 = vmatpush.msra.mxu0 %v283
    %2440 = vmatpush.msra.mxu0 %v279
    %2441 = vmatpush.msra.mxu0 %v275
    %2442 = vmatpush.msra.mxu0 %v271
    %2443 = vmatpush.msra.mxu0 %v267
    %2444 = vmatpush.msra.mxu0 %v263
    %2445 = vmatpush.msra.mxu0 %v259
    %2446 = vmatmul.f32.gmra.mxu0 %v2161
    %v2447 = vpop.f32.mrf.mxu0
    %v2448 = vadd.f32 0.0, %v2447
    %2449 = vdwg.mxu0
    %2450 = vmatpush.msra.mxu0 %v320
    %2451 = vmatpush.msra.mxu0 %v316
    %2452 = vmatpush.msra.mxu0 %v312
    %2453 = vmatpush.msra.mxu0 %v308
    %2454 = vmatpush.msra.mxu0 %v304
    %2455 = vmatpush.msra.mxu0 %v300
    %2456 = vmatpush.msra.mxu0 %v296
    %2457 = vmatpush.msra.mxu0 %v292
    %2458 = vmatpush.msra.mxu0 %v288
    %2459 = vmatpush.msra.mxu0 %v284
    %2460 = vmatpush.msra.mxu0 %v280
    %2461 = vmatpush.msra.mxu0 %v276
    %2462 = vmatpush.msra.mxu0 %v272
    %2463 = vmatpush.msra.mxu0 %v268
    %2464 = vmatpush.msra.mxu0 %v264
    %2465 = vmatpush.msra.mxu0 %v260
    %2466 = vmatmul.f32.gmra.mxu0 %v2161
    %v2467 = vpop.f32.mrf.mxu0
    %v2468 = vadd.f32 0.0, %v2467
    %2469 = vdwg.mxu0
    %v2474 = vrot.slane %v2408, 6
    %v2475 = vrot.slane %v2428, 6
    %v2476 = vrot.slane %v2448, 6
    %v2477 = vrot.slane %v2468, 6
    %v2482 = vadd.f32 %v186, %v2474
    %v2483 = vadd.f32 %v209, %v2475
    %v2484 = vadd.f32 %v232, %v2476
    %v2485 = vadd.f32 %v255, %v2477
    %v2486 = vxor.u32 %v2482, 2147483648
    %v2487 = vxor.u32 %v2483, 2147483648
    %v2488 = vxor.u32 %v2485, 2147483648
    %v2489 = vmul.f32 %v2486, 1.442695
    %v2490 = vpow.pop %v2489
    %v2491 = vmul.f32 %v2487, 1.442695
    %v2492 = vpow.pop %v2491
    %v2493 = vmul.f32 %v2488, 1.442695
    %v2494 = vpow.pop %v2493
    %v2495 = vadd.f32 %v2490, 1.0
    %v2496 = vadd.f32 %v2492, 1.0
    %v2497 = vadd.f32 %v2494, 1.0
    %v2498 = vrcp.pop %v2495
    %v2499 = vmul.f32 %v2495, %v2498
    %v2500 = vsub.f32 1.0, %v2499
    %v2501 = vmul.f32 %v2498, %v2500
    %v2502 = vadd.f32 %v2498, %v2501
    %vm2503 = vweird.f32 %v2495
    %vm2504 = vweird.f32 %v2498
    %vm2505 = vmor %vm2503, %vm2504
    %v2506 = vsel %vm2505, %v2498, %v2502
    %v2507 = vand.u32 2147483647, %v2495
    %vm2508 = vcmp.eq.f32.partialorder %v2507, 8.507059e+37
    %v2509 = vand.u32 %v2495, 2147483648
    %v2510 = vor.u32 1.1754944e-38, %v2509
    %v2511 = vsel %vm2508, %v2510, %v2506
    %v2512 = vmul.f32 1.0, %v2511
    %v2513 = vrcp.pop %v2496
    %v2514 = vmul.f32 %v2496, %v2513
    %v2515 = vsub.f32 1.0, %v2514
    %v2516 = vmul.f32 %v2513, %v2515
    %v2517 = vadd.f32 %v2513, %v2516
    %vm2518 = vweird.f32 %v2496
    %vm2519 = vweird.f32 %v2513
    %vm2520 = vmor %vm2518, %vm2519
    %v2521 = vsel %vm2520, %v2513, %v2517
    %v2522 = vand.u32 2147483647, %v2496
    %vm2523 = vcmp.eq.f32.partialorder %v2522, 8.507059e+37
    %v2524 = vand.u32 %v2496, 2147483648
    %v2525 = vor.u32 1.1754944e-38, %v2524
    %v2526 = vsel %vm2523, %v2525, %v2521
    %v2527 = vmul.f32 1.0, %v2526
    %v2528 = vrcp.pop %v2497
    %v2529 = vmul.f32 %v2497, %v2528
    %v2530 = vsub.f32 1.0, %v2529
    %v2531 = vmul.f32 %v2528, %v2530
    %v2532 = vadd.f32 %v2528, %v2531
    %vm2533 = vweird.f32 %v2497
    %vm2534 = vweird.f32 %v2528
    %vm2535 = vmor %vm2533, %vm2534
    %v2536 = vsel %vm2535, %v2528, %v2532
    %v2537 = vand.u32 2147483647, %v2497
    %vm2538 = vcmp.eq.f32.partialorder %v2537, 8.507059e+37
    %v2539 = vand.u32 %v2497, 2147483648
    %v2540 = vor.u32 1.1754944e-38, %v2539
    %v2541 = vsel %vm2538, %v2540, %v2536
    %v2542 = vmul.f32 1.0, %v2541
    %v2543 = vtanh.pop %v2484
    %v2545 = vrot.slane %v2159, 6
    %v2547 = vmul.f32 %v2527, %v2545
    %v2548 = vmul.f32 %v2512, %v2543
    %v2549 = vadd.f32 %v2547, %v2548
    %v2550 = vtanh.pop %v2549
    %v2551 = vmul.f32 %v2542, %v2550
    %2552 = vmatpush.msra.mxu0 %v445
    %2553 = vmatpush.msra.mxu0 %v441
    %2554 = vmatpush.msra.mxu0 %v437
    %2555 = vmatpush.msra.mxu0 %v433
    %2556 = vmatpush.msra.mxu0 %v429
    %2557 = vmatpush.msra.mxu0 %v425
    %2558 = vmatpush.msra.mxu0 %v421
    %2559 = vmatpush.msra.mxu0 %v417
    %2560 = vmatpush.msra.mxu0 %v413
    %2561 = vmatpush.msra.mxu0 %v409
    %2562 = vmatpush.msra.mxu0 %v405
    %2563 = vmatpush.msra.mxu0 %v401
    %2564 = vmatpush.msra.mxu0 %v397
    %2565 = vmatpush.msra.mxu0 %v393
    %2566 = vmatpush.msra.mxu0 %v389
    %2567 = vmatpush.msra.mxu0 %v385
    %2568 = vmatmul.f32.gmra.mxu0 %v2388
    %v2569 = vpop.f32.mrf.mxu0
    %v2570 = vadd.f32 0.0, %v2569
    %2571 = vdwg.mxu0
    %2572 = vmatpush.msra.mxu0 %v446
    %2573 = vmatpush.msra.mxu0 %v442
    %2574 = vmatpush.msra.mxu0 %v438
    %2575 = vmatpush.msra.mxu0 %v434
    %2576 = vmatpush.msra.mxu0 %v430
    %2577 = vmatpush.msra.mxu0 %v426
    %2578 = vmatpush.msra.mxu0 %v422
    %2579 = vmatpush.msra.mxu0 %v418
    %2580 = vmatpush.msra.mxu0 %v414
    %2581 = vmatpush.msra.mxu0 %v410
    %2582 = vmatpush.msra.mxu0 %v406
    %2583 = vmatpush.msra.mxu0 %v402
    %2584 = vmatpush.msra.mxu0 %v398
    %2585 = vmatpush.msra.mxu0 %v394
    %2586 = vmatpush.msra.mxu0 %v390
    %2587 = vmatpush.msra.mxu0 %v386
    %2588 = vmatmul.f32.gmra.mxu0 %v2388
    %v2589 = vpop.f32.mrf.mxu0
    %v2590 = vadd.f32 0.0, %v2589
    %2591 = vdwg.mxu0
    %2592 = vmatpush.msra.mxu0 %v447
    %2593 = vmatpush.msra.mxu0 %v443
    %2594 = vmatpush.msra.mxu0 %v439
    %2595 = vmatpush.msra.mxu0 %v435
    %2596 = vmatpush.msra.mxu0 %v431
    %2597 = vmatpush.msra.mxu0 %v427
    %2598 = vmatpush.msra.mxu0 %v423
    %2599 = vmatpush.msra.mxu0 %v419
    %2600 = vmatpush.msra.mxu0 %v415
    %2601 = vmatpush.msra.mxu0 %v411
    %2602 = vmatpush.msra.mxu0 %v407
    %2603 = vmatpush.msra.mxu0 %v403
    %2604 = vmatpush.msra.mxu0 %v399
    %2605 = vmatpush.msra.mxu0 %v395
    %2606 = vmatpush.msra.mxu0 %v391
    %2607 = vmatpush.msra.mxu0 %v387
    %2608 = vmatmul.f32.gmra.mxu0 %v2388
    %v2609 = vpop.f32.mrf.mxu0
    %v2610 = vadd.f32 0.0, %v2609
    %2611 = vdwg.mxu0
    %2612 = vmatpush.msra.mxu0 %v448
    %2613 = vmatpush.msra.mxu0 %v444
    %2614 = vmatpush.msra.mxu0 %v440
    %2615 = vmatpush.msra.mxu0 %v436
    %2616 = vmatpush.msra.mxu0 %v432
    %2617 = vmatpush.msra.mxu0 %v428
    %2618 = vmatpush.msra.mxu0 %v424
    %2619 = vmatpush.msra.mxu0 %v420
    %2620 = vmatpush.msra.mxu0 %v416
    %2621 = vmatpush.msra.mxu0 %v412
    %2622 = vmatpush.msra.mxu0 %v408
    %2623 = vmatpush.msra.mxu0 %v404
    %2624 = vmatpush.msra.mxu0 %v400
    %2625 = vmatpush.msra.mxu0 %v396
    %2626 = vmatpush.msra.mxu0 %v392
    %2627 = vmatpush.msra.mxu0 %v388
    %2628 = vmatmul.f32.gmra.mxu0 %v2388
    %v2629 = vpop.f32.mrf.mxu0
    %v2630 = vadd.f32 0.0, %v2629
    %2631 = vdwg.mxu0
    %v2633 = vrot.slane %v2551, 2
    %2635 = vmatpush.msra.mxu0 %v381
    %2636 = vmatpush.msra.mxu0 %v377
    %2637 = vmatpush.msra.mxu0 %v373
    %2638 = vmatpush.msra.mxu0 %v369
    %2639 = vmatpush.msra.mxu0 %v365
    %2640 = vmatpush.msra.mxu0 %v361
    %2641 = vmatpush.msra.mxu0 %v357
    %2642 = vmatpush.msra.mxu0 %v353
    %2643 = vmatpush.msra.mxu0 %v349
    %2644 = vmatpush.msra.mxu0 %v345
    %2645 = vmatpush.msra.mxu0 %v341
    %2646 = vmatpush.msra.mxu0 %v337
    %2647 = vmatpush.msra.mxu0 %v333
    %2648 = vmatpush.msra.mxu0 %v329
    %2649 = vmatpush.msra.mxu0 %v325
    %2650 = vmatpush.msra.mxu0 %v321
    %2651 = vmatmul.f32.gmra.mxu0 %v2633
    %v2652 = vpop.f32.mrf.mxu0
    %v2653 = vadd.f32 %v2570, %v2652
    %2654 = vdwg.mxu0
    %2655 = vmatpush.msra.mxu0 %v382
    %2656 = vmatpush.msra.mxu0 %v378
    %2657 = vmatpush.msra.mxu0 %v374
    %2658 = vmatpush.msra.mxu0 %v370
    %2659 = vmatpush.msra.mxu0 %v366
    %2660 = vmatpush.msra.mxu0 %v362
    %2661 = vmatpush.msra.mxu0 %v358
    %2662 = vmatpush.msra.mxu0 %v354
    %2663 = vmatpush.msra.mxu0 %v350
    %2664 = vmatpush.msra.mxu0 %v346
    %2665 = vmatpush.msra.mxu0 %v342
    %2666 = vmatpush.msra.mxu0 %v338
    %2667 = vmatpush.msra.mxu0 %v334
    %2668 = vmatpush.msra.mxu0 %v330
    %2669 = vmatpush.msra.mxu0 %v326
    %2670 = vmatpush.msra.mxu0 %v322
    %2671 = vmatmul.f32.gmra.mxu0 %v2633
    %v2672 = vpop.f32.mrf.mxu0
    %v2673 = vadd.f32 %v2590, %v2672
    %2674 = vdwg.mxu0
    %2675 = vmatpush.msra.mxu0 %v383
    %2676 = vmatpush.msra.mxu0 %v379
    %2677 = vmatpush.msra.mxu0 %v375
    %2678 = vmatpush.msra.mxu0 %v371
    %2679 = vmatpush.msra.mxu0 %v367
    %2680 = vmatpush.msra.mxu0 %v363
    %2681 = vmatpush.msra.mxu0 %v359
    %2682 = vmatpush.msra.mxu0 %v355
    %2683 = vmatpush.msra.mxu0 %v351
    %2684 = vmatpush.msra.mxu0 %v347
    %2685 = vmatpush.msra.mxu0 %v343
    %2686 = vmatpush.msra.mxu0 %v339
    %2687 = vmatpush.msra.mxu0 %v335
    %2688 = vmatpush.msra.mxu0 %v331
    %2689 = vmatpush.msra.mxu0 %v327
    %2690 = vmatpush.msra.mxu0 %v323
    %2691 = vmatmul.f32.gmra.mxu0 %v2633
    %v2692 = vpop.f32.mrf.mxu0
    %v2693 = vadd.f32 %v2610, %v2692
    %2694 = vdwg.mxu0
    %2695 = vmatpush.msra.mxu0 %v384
    %2696 = vmatpush.msra.mxu0 %v380
    %2697 = vmatpush.msra.mxu0 %v376
    %2698 = vmatpush.msra.mxu0 %v372
    %2699 = vmatpush.msra.mxu0 %v368
    %2700 = vmatpush.msra.mxu0 %v364
    %2701 = vmatpush.msra.mxu0 %v360
    %2702 = vmatpush.msra.mxu0 %v356
    %2703 = vmatpush.msra.mxu0 %v352
    %2704 = vmatpush.msra.mxu0 %v348
    %2705 = vmatpush.msra.mxu0 %v344
    %2706 = vmatpush.msra.mxu0 %v340
    %2707 = vmatpush.msra.mxu0 %v336
    %2708 = vmatpush.msra.mxu0 %v332
    %2709 = vmatpush.msra.mxu0 %v328
    %2710 = vmatpush.msra.mxu0 %v324
    %2711 = vmatmul.f32.gmra.mxu0 %v2633
    %v2712 = vpop.f32.mrf.mxu0
    %v2713 = vadd.f32 %v2630, %v2712
    %2714 = vdwg.mxu0
    %v2715 = vadd.f32 %v2653, %v451
    %v2716 = vadd.f32 %v2673, %v452
    %v2717 = vadd.f32 %v2693, %v453
    %v2718 = vadd.f32 %v2713, %v454
    %v2719 = vxor.u32 %v2715, 2147483648
    %v2720 = vxor.u32 %v2716, 2147483648
    %v2721 = vxor.u32 %v2718, 2147483648
    %v2722 = vmul.f32 %v2719, 1.442695
    %v2723 = vpow.pop %v2722
    %v2724 = vmul.f32 %v2720, 1.442695
    %v2725 = vpow.pop %v2724
    %v2726 = vmul.f32 %v2721, 1.442695
    %v2727 = vpow.pop %v2726
    %v2728 = vadd.f32 %v2723, 1.0
    %v2729 = vadd.f32 %v2725, 1.0
    %v2730 = vadd.f32 %v2727, 1.0
    %v2731 = vrcp.pop %v2728
    %v2732 = vmul.f32 %v2728, %v2731
    %v2733 = vsub.f32 1.0, %v2732
    %v2734 = vmul.f32 %v2731, %v2733
    %v2735 = vadd.f32 %v2731, %v2734
    %vm2736 = vweird.f32 %v2728
    %vm2737 = vweird.f32 %v2731
    %vm2738 = vmor %vm2736, %vm2737
    %v2739 = vsel %vm2738, %v2731, %v2735
    %v2740 = vand.u32 2147483647, %v2728
    %vm2741 = vcmp.eq.f32.partialorder %v2740, 8.507059e+37
    %v2742 = vand.u32 %v2728, 2147483648
    %v2743 = vor.u32 1.1754944e-38, %v2742
    %v2744 = vsel %vm2741, %v2743, %v2739
    %v2745 = vmul.f32 1.0, %v2744
    %v2746 = vrcp.pop %v2729
    %v2747 = vmul.f32 %v2729, %v2746
    %v2748 = vsub.f32 1.0, %v2747
    %v2749 = vmul.f32 %v2746, %v2748
    %v2750 = vadd.f32 %v2746, %v2749
    %vm2751 = vweird.f32 %v2729
    %vm2752 = vweird.f32 %v2746
    %vm2753 = vmor %vm2751, %vm2752
    %v2754 = vsel %vm2753, %v2746, %v2750
    %v2755 = vand.u32 2147483647, %v2729
    %vm2756 = vcmp.eq.f32.partialorder %v2755, 8.507059e+37
    %v2757 = vand.u32 %v2729, 2147483648
    %v2758 = vor.u32 1.1754944e-38, %v2757
    %v2759 = vsel %vm2756, %v2758, %v2754
    %v2760 = vmul.f32 1.0, %v2759
    %v2761 = vrcp.pop %v2730
    %v2762 = vmul.f32 %v2730, %v2761
    %v2763 = vsub.f32 1.0, %v2762
    %v2764 = vmul.f32 %v2761, %v2763
    %v2765 = vadd.f32 %v2761, %v2764
    %vm2766 = vweird.f32 %v2730
    %vm2767 = vweird.f32 %v2761
    %vm2768 = vmor %vm2766, %vm2767
    %v2769 = vsel %vm2768, %v2761, %v2765
    %v2770 = vand.u32 2147483647, %v2730
    %vm2771 = vcmp.eq.f32.partialorder %v2770, 8.507059e+37
    %v2772 = vand.u32 %v2730, 2147483648
    %v2773 = vor.u32 1.1754944e-38, %v2772
    %v2774 = vsel %vm2771, %v2773, %v2769
    %v2775 = vmul.f32 1.0, %v2774
    %v2776 = vtanh.pop %v2717
    %v2777 = vmul.f32 %v2760, %v2386
    %v2778 = vmul.f32 %v2745, %v2776
    %v2779 = vadd.f32 %v2777, %v2778
    %v2780 = vtanh.pop %v2779
    %v2781 = vmul.f32 %v2775, %v2780
    %v2782 = vmax.f32 %v2389, %v2781
    %2783 = vmatpush.msra.mxu0 %v317
    %2784 = vmatpush.msra.mxu0 %v313
    %2785 = vmatpush.msra.mxu0 %v309
    %2786 = vmatpush.msra.mxu0 %v305
    %2787 = vmatpush.msra.mxu0 %v301
    %2788 = vmatpush.msra.mxu0 %v297
    %2789 = vmatpush.msra.mxu0 %v293
    %2790 = vmatpush.msra.mxu0 %v289
    %2791 = vmatpush.msra.mxu0 %v285
    %2792 = vmatpush.msra.mxu0 %v281
    %2793 = vmatpush.msra.mxu0 %v277
    %2794 = vmatpush.msra.mxu0 %v273
    %2795 = vmatpush.msra.mxu0 %v269
    %2796 = vmatpush.msra.mxu0 %v265
    %2797 = vmatpush.msra.mxu0 %v261
    %2798 = vmatpush.msra.mxu0 %v257
    %2799 = vmatmul.f32.gmra.mxu0 %v2633
    %v2800 = vpop.f32.mrf.mxu0
    %v2801 = vadd.f32 0.0, %v2800
    %2802 = vdwg.mxu0
    %2803 = vmatpush.msra.mxu0 %v318
    %2804 = vmatpush.msra.mxu0 %v314
    %2805 = vmatpush.msra.mxu0 %v310
    %2806 = vmatpush.msra.mxu0 %v306
    %2807 = vmatpush.msra.mxu0 %v302
    %2808 = vmatpush.msra.mxu0 %v298
    %2809 = vmatpush.msra.mxu0 %v294
    %2810 = vmatpush.msra.mxu0 %v290
    %2811 = vmatpush.msra.mxu0 %v286
    %2812 = vmatpush.msra.mxu0 %v282
    %2813 = vmatpush.msra.mxu0 %v278
    %2814 = vmatpush.msra.mxu0 %v274
    %2815 = vmatpush.msra.mxu0 %v270
    %2816 = vmatpush.msra.mxu0 %v266
    %2817 = vmatpush.msra.mxu0 %v262
    %2818 = vmatpush.msra.mxu0 %v258
    %2819 = vmatmul.f32.gmra.mxu0 %v2633
    %v2820 = vpop.f32.mrf.mxu0
    %v2821 = vadd.f32 0.0, %v2820
    %2822 = vdwg.mxu0
    %2823 = vmatpush.msra.mxu0 %v319
    %2824 = vmatpush.msra.mxu0 %v315
    %2825 = vmatpush.msra.mxu0 %v311
    %2826 = vmatpush.msra.mxu0 %v307
    %2827 = vmatpush.msra.mxu0 %v303
    %2828 = vmatpush.msra.mxu0 %v299
    %2829 = vmatpush.msra.mxu0 %v295
    %2830 = vmatpush.msra.mxu0 %v291
    %2831 = vmatpush.msra.mxu0 %v287
    %2832 = vmatpush.msra.mxu0 %v283
    %2833 = vmatpush.msra.mxu0 %v279
    %2834 = vmatpush.msra.mxu0 %v275
    %2835 = vmatpush.msra.mxu0 %v271
    %2836 = vmatpush.msra.mxu0 %v267
    %2837 = vmatpush.msra.mxu0 %v263
    %2838 = vmatpush.msra.mxu0 %v259
    %2839 = vmatmul.f32.gmra.mxu0 %v2633
    %v2840 = vpop.f32.mrf.mxu0
    %v2841 = vadd.f32 0.0, %v2840
    %2842 = vdwg.mxu0
    %2843 = vmatpush.msra.mxu0 %v320
    %2844 = vmatpush.msra.mxu0 %v316
    %2845 = vmatpush.msra.mxu0 %v312
    %2846 = vmatpush.msra.mxu0 %v308
    %2847 = vmatpush.msra.mxu0 %v304
    %2848 = vmatpush.msra.mxu0 %v300
    %2849 = vmatpush.msra.mxu0 %v296
    %2850 = vmatpush.msra.mxu0 %v292
    %2851 = vmatpush.msra.mxu0 %v288
    %2852 = vmatpush.msra.mxu0 %v284
    %2853 = vmatpush.msra.mxu0 %v280
    %2854 = vmatpush.msra.mxu0 %v276
    %2855 = vmatpush.msra.mxu0 %v272
    %2856 = vmatpush.msra.mxu0 %v268
    %2857 = vmatpush.msra.mxu0 %v264
    %2858 = vmatpush.msra.mxu0 %v260
    %2859 = vmatmul.f32.gmra.mxu0 %v2633
    %v2860 = vpop.f32.mrf.mxu0
    %v2861 = vadd.f32 0.0, %v2860
    %2862 = vdwg.mxu0
    %v2867 = vrot.slane %v2801, 4
    %v2868 = vrot.slane %v2821, 4
    %v2869 = vrot.slane %v2841, 4
    %v2870 = vrot.slane %v2861, 4
    %v2875 = vadd.f32 %v186, %v2867
    %v2876 = vadd.f32 %v209, %v2868
    %v2877 = vadd.f32 %v232, %v2869
    %v2878 = vadd.f32 %v255, %v2870
    %v2879 = vxor.u32 %v2875, 2147483648
    %v2880 = vxor.u32 %v2876, 2147483648
    %v2881 = vxor.u32 %v2878, 2147483648
    %v2882 = vmul.f32 %v2879, 1.442695
    %v2883 = vpow.pop %v2882
    %v2884 = vmul.f32 %v2880, 1.442695
    %v2885 = vpow.pop %v2884
    %v2886 = vmul.f32 %v2881, 1.442695
    %v2887 = vpow.pop %v2886
    %v2888 = vadd.f32 %v2883, 1.0
    %v2889 = vadd.f32 %v2885, 1.0
    %v2890 = vadd.f32 %v2887, 1.0
    %v2891 = vrcp.pop %v2888
    %v2892 = vmul.f32 %v2888, %v2891
    %v2893 = vsub.f32 1.0, %v2892
    %v2894 = vmul.f32 %v2891, %v2893
    %v2895 = vadd.f32 %v2891, %v2894
    %vm2896 = vweird.f32 %v2888
    %vm2897 = vweird.f32 %v2891
    %vm2898 = vmor %vm2896, %vm2897
    %v2899 = vsel %vm2898, %v2891, %v2895
    %v2900 = vand.u32 2147483647, %v2888
    %vm2901 = vcmp.eq.f32.partialorder %v2900, 8.507059e+37
    %v2902 = vand.u32 %v2888, 2147483648
    %v2903 = vor.u32 1.1754944e-38, %v2902
    %v2904 = vsel %vm2901, %v2903, %v2899
    %v2905 = vmul.f32 1.0, %v2904
    %v2906 = vrcp.pop %v2889
    %v2907 = vmul.f32 %v2889, %v2906
    %v2908 = vsub.f32 1.0, %v2907
    %v2909 = vmul.f32 %v2906, %v2908
    %v2910 = vadd.f32 %v2906, %v2909
    %vm2911 = vweird.f32 %v2889
    %vm2912 = vweird.f32 %v2906
    %vm2913 = vmor %vm2911, %vm2912
    %v2914 = vsel %vm2913, %v2906, %v2910
    %v2915 = vand.u32 2147483647, %v2889
    %vm2916 = vcmp.eq.f32.partialorder %v2915, 8.507059e+37
    %v2917 = vand.u32 %v2889, 2147483648
    %v2918 = vor.u32 1.1754944e-38, %v2917
    %v2919 = vsel %vm2916, %v2918, %v2914
    %v2920 = vmul.f32 1.0, %v2919
    %v2921 = vrcp.pop %v2890
    %v2922 = vmul.f32 %v2890, %v2921
    %v2923 = vsub.f32 1.0, %v2922
    %v2924 = vmul.f32 %v2921, %v2923
    %v2925 = vadd.f32 %v2921, %v2924
    %vm2926 = vweird.f32 %v2890
    %vm2927 = vweird.f32 %v2921
    %vm2928 = vmor %vm2926, %vm2927
    %v2929 = vsel %vm2928, %v2921, %v2925
    %v2930 = vand.u32 2147483647, %v2890
    %vm2931 = vcmp.eq.f32.partialorder %v2930, 8.507059e+37
    %v2932 = vand.u32 %v2890, 2147483648
    %v2933 = vor.u32 1.1754944e-38, %v2932
    %v2934 = vsel %vm2931, %v2933, %v2929
    %v2935 = vmul.f32 1.0, %v2934
    %v2936 = vtanh.pop %v2877
    %v2938 = vrot.slane %v2549, 6
    %v2940 = vmul.f32 %v2920, %v2938
    %v2941 = vmul.f32 %v2905, %v2936
    %v2942 = vadd.f32 %v2940, %v2941
    %v2943 = vtanh.pop %v2942
    %v2944 = vmul.f32 %v2935, %v2943
    %2945 = vmatpush.msra.mxu0 %v445
    %2946 = vmatpush.msra.mxu0 %v441
    %2947 = vmatpush.msra.mxu0 %v437
    %2948 = vmatpush.msra.mxu0 %v433
    %2949 = vmatpush.msra.mxu0 %v429
    %2950 = vmatpush.msra.mxu0 %v425
    %2951 = vmatpush.msra.mxu0 %v421
    %2952 = vmatpush.msra.mxu0 %v417
    %2953 = vmatpush.msra.mxu0 %v413
    %2954 = vmatpush.msra.mxu0 %v409
    %2955 = vmatpush.msra.mxu0 %v405
    %2956 = vmatpush.msra.mxu0 %v401
    %2957 = vmatpush.msra.mxu0 %v397
    %2958 = vmatpush.msra.mxu0 %v393
    %2959 = vmatpush.msra.mxu0 %v389
    %2960 = vmatpush.msra.mxu0 %v385
    %2961 = vmatmul.f32.gmra.mxu0 %v2781
    %v2962 = vpop.f32.mrf.mxu0
    %v2963 = vadd.f32 0.0, %v2962
    %2964 = vdwg.mxu0
    %2965 = vmatpush.msra.mxu0 %v446
    %2966 = vmatpush.msra.mxu0 %v442
    %2967 = vmatpush.msra.mxu0 %v438
    %2968 = vmatpush.msra.mxu0 %v434
    %2969 = vmatpush.msra.mxu0 %v430
    %2970 = vmatpush.msra.mxu0 %v426
    %2971 = vmatpush.msra.mxu0 %v422
    %2972 = vmatpush.msra.mxu0 %v418
    %2973 = vmatpush.msra.mxu0 %v414
    %2974 = vmatpush.msra.mxu0 %v410
    %2975 = vmatpush.msra.mxu0 %v406
    %2976 = vmatpush.msra.mxu0 %v402
    %2977 = vmatpush.msra.mxu0 %v398
    %2978 = vmatpush.msra.mxu0 %v394
    %2979 = vmatpush.msra.mxu0 %v390
    %2980 = vmatpush.msra.mxu0 %v386
    %2981 = vmatmul.f32.gmra.mxu0 %v2781
    %v2982 = vpop.f32.mrf.mxu0
    %v2983 = vadd.f32 0.0, %v2982
    %2984 = vdwg.mxu0
    %2985 = vmatpush.msra.mxu0 %v447
    %2986 = vmatpush.msra.mxu0 %v443
    %2987 = vmatpush.msra.mxu0 %v439
    %2988 = vmatpush.msra.mxu0 %v435
    %2989 = vmatpush.msra.mxu0 %v431
    %2990 = vmatpush.msra.mxu0 %v427
    %2991 = vmatpush.msra.mxu0 %v423
    %2992 = vmatpush.msra.mxu0 %v419
    %2993 = vmatpush.msra.mxu0 %v415
    %2994 = vmatpush.msra.mxu0 %v411
    %2995 = vmatpush.msra.mxu0 %v407
    %2996 = vmatpush.msra.mxu0 %v403
    %2997 = vmatpush.msra.mxu0 %v399
    %2998 = vmatpush.msra.mxu0 %v395
    %2999 = vmatpush.msra.mxu0 %v391
    %3000 = vmatpush.msra.mxu0 %v387
    %3001 = vmatmul.f32.gmra.mxu0 %v2781
    %v3002 = vpop.f32.mrf.mxu0
    %v3003 = vadd.f32 0.0, %v3002
    %3004 = vdwg.mxu0
    %3005 = vmatpush.msra.mxu0 %v448
    %3006 = vmatpush.msra.mxu0 %v444
    %3007 = vmatpush.msra.mxu0 %v440
    %3008 = vmatpush.msra.mxu0 %v436
    %3009 = vmatpush.msra.mxu0 %v432
    %3010 = vmatpush.msra.mxu0 %v428
    %3011 = vmatpush.msra.mxu0 %v424
    %3012 = vmatpush.msra.mxu0 %v420
    %3013 = vmatpush.msra.mxu0 %v416
    %3014 = vmatpush.msra.mxu0 %v412
    %3015 = vmatpush.msra.mxu0 %v408
    %3016 = vmatpush.msra.mxu0 %v404
    %3017 = vmatpush.msra.mxu0 %v400
    %3018 = vmatpush.msra.mxu0 %v396
    %3019 = vmatpush.msra.mxu0 %v392
    %3020 = vmatpush.msra.mxu0 %v388
    %3021 = vmatmul.f32.gmra.mxu0 %v2781
    %v3022 = vpop.f32.mrf.mxu0
    %v3023 = vadd.f32 0.0, %v3022
    %3024 = vdwg.mxu0
    %v3026 = vrot.slane %v2944, 4
    %3028 = vmatpush.msra.mxu0 %v381
    %3029 = vmatpush.msra.mxu0 %v377
    %3030 = vmatpush.msra.mxu0 %v373
    %3031 = vmatpush.msra.mxu0 %v369
    %3032 = vmatpush.msra.mxu0 %v365
    %3033 = vmatpush.msra.mxu0 %v361
    %3034 = vmatpush.msra.mxu0 %v357
    %3035 = vmatpush.msra.mxu0 %v353
    %3036 = vmatpush.msra.mxu0 %v349
    %3037 = vmatpush.msra.mxu0 %v345
    %3038 = vmatpush.msra.mxu0 %v341
    %3039 = vmatpush.msra.mxu0 %v337
    %3040 = vmatpush.msra.mxu0 %v333
    %3041 = vmatpush.msra.mxu0 %v329
    %3042 = vmatpush.msra.mxu0 %v325
    %3043 = vmatpush.msra.mxu0 %v321
    %3044 = vmatmul.f32.gmra.mxu0 %v3026
    %v3045 = vpop.f32.mrf.mxu0
    %v3046 = vadd.f32 %v2963, %v3045
    %3047 = vdwg.mxu0
    %3048 = vmatpush.msra.mxu0 %v382
    %3049 = vmatpush.msra.mxu0 %v378
    %3050 = vmatpush.msra.mxu0 %v374
    %3051 = vmatpush.msra.mxu0 %v370
    %3052 = vmatpush.msra.mxu0 %v366
    %3053 = vmatpush.msra.mxu0 %v362
    %3054 = vmatpush.msra.mxu0 %v358
    %3055 = vmatpush.msra.mxu0 %v354
    %3056 = vmatpush.msra.mxu0 %v350
    %3057 = vmatpush.msra.mxu0 %v346
    %3058 = vmatpush.msra.mxu0 %v342
    %3059 = vmatpush.msra.mxu0 %v338
    %3060 = vmatpush.msra.mxu0 %v334
    %3061 = vmatpush.msra.mxu0 %v330
    %3062 = vmatpush.msra.mxu0 %v326
    %3063 = vmatpush.msra.mxu0 %v322
    %3064 = vmatmul.f32.gmra.mxu0 %v3026
    %v3065 = vpop.f32.mrf.mxu0
    %v3066 = vadd.f32 %v2983, %v3065
    %3067 = vdwg.mxu0
    %3068 = vmatpush.msra.mxu0 %v383
    %3069 = vmatpush.msra.mxu0 %v379
    %3070 = vmatpush.msra.mxu0 %v375
    %3071 = vmatpush.msra.mxu0 %v371
    %3072 = vmatpush.msra.mxu0 %v367
    %3073 = vmatpush.msra.mxu0 %v363
    %3074 = vmatpush.msra.mxu0 %v359
    %3075 = vmatpush.msra.mxu0 %v355
    %3076 = vmatpush.msra.mxu0 %v351
    %3077 = vmatpush.msra.mxu0 %v347
    %3078 = vmatpush.msra.mxu0 %v343
    %3079 = vmatpush.msra.mxu0 %v339
    %3080 = vmatpush.msra.mxu0 %v335
    %3081 = vmatpush.msra.mxu0 %v331
    %3082 = vmatpush.msra.mxu0 %v327
    %3083 = vmatpush.msra.mxu0 %v323
    %3084 = vmatmul.f32.gmra.mxu0 %v3026
    %v3085 = vpop.f32.mrf.mxu0
    %v3086 = vadd.f32 %v3003, %v3085
    %3087 = vdwg.mxu0
    %3088 = vmatpush.msra.mxu0 %v384
    %3089 = vmatpush.msra.mxu0 %v380
    %3090 = vmatpush.msra.mxu0 %v376
    %3091 = vmatpush.msra.mxu0 %v372
    %3092 = vmatpush.msra.mxu0 %v368
    %3093 = vmatpush.msra.mxu0 %v364
    %3094 = vmatpush.msra.mxu0 %v360
    %3095 = vmatpush.msra.mxu0 %v356
    %3096 = vmatpush.msra.mxu0 %v352
    %3097 = vmatpush.msra.mxu0 %v348
    %3098 = vmatpush.msra.mxu0 %v344
    %3099 = vmatpush.msra.mxu0 %v340
    %3100 = vmatpush.msra.mxu0 %v336
    %3101 = vmatpush.msra.mxu0 %v332
    %3102 = vmatpush.msra.mxu0 %v328
    %3103 = vmatpush.msra.mxu0 %v324
    %3104 = vmatmul.f32.gmra.mxu0 %v3026
    %v3105 = vpop.f32.mrf.mxu0
    %v3106 = vadd.f32 %v3023, %v3105
    %3107 = vdwg.mxu0
    %v3108 = vadd.f32 %v3046, %v451
    %v3109 = vadd.f32 %v3066, %v452
    %v3110 = vadd.f32 %v3086, %v453
    %v3111 = vadd.f32 %v3106, %v454
    %v3112 = vxor.u32 %v3108, 2147483648
    %v3113 = vxor.u32 %v3109, 2147483648
    %v3114 = vxor.u32 %v3111, 2147483648
    %v3115 = vmul.f32 %v3112, 1.442695
    %v3116 = vpow.pop %v3115
    %v3117 = vmul.f32 %v3113, 1.442695
    %v3118 = vpow.pop %v3117
    %v3119 = vmul.f32 %v3114, 1.442695
    %v3120 = vpow.pop %v3119
    %v3121 = vadd.f32 %v3116, 1.0
    %v3122 = vadd.f32 %v3118, 1.0
    %v3123 = vadd.f32 %v3120, 1.0
    %v3124 = vrcp.pop %v3121
    %v3125 = vmul.f32 %v3121, %v3124
    %v3126 = vsub.f32 1.0, %v3125
    %v3127 = vmul.f32 %v3124, %v3126
    %v3128 = vadd.f32 %v3124, %v3127
    %vm3129 = vweird.f32 %v3121
    %vm3130 = vweird.f32 %v3124
    %vm3131 = vmor %vm3129, %vm3130
    %v3132 = vsel %vm3131, %v3124, %v3128
    %v3133 = vand.u32 2147483647, %v3121
    %vm3134 = vcmp.eq.f32.partialorder %v3133, 8.507059e+37
    %v3135 = vand.u32 %v3121, 2147483648
    %v3136 = vor.u32 1.1754944e-38, %v3135
    %v3137 = vsel %vm3134, %v3136, %v3132
    %v3138 = vmul.f32 1.0, %v3137
    %v3139 = vrcp.pop %v3122
    %v3140 = vmul.f32 %v3122, %v3139
    %v3141 = vsub.f32 1.0, %v3140
    %v3142 = vmul.f32 %v3139, %v3141
    %v3143 = vadd.f32 %v3139, %v3142
    %vm3144 = vweird.f32 %v3122
    %vm3145 = vweird.f32 %v3139
    %vm3146 = vmor %vm3144, %vm3145
    %v3147 = vsel %vm3146, %v3139, %v3143
    %v3148 = vand.u32 2147483647, %v3122
    %vm3149 = vcmp.eq.f32.partialorder %v3148, 8.507059e+37
    %v3150 = vand.u32 %v3122, 2147483648
    %v3151 = vor.u32 1.1754944e-38, %v3150
    %v3152 = vsel %vm3149, %v3151, %v3147
    %v3153 = vmul.f32 1.0, %v3152
    %v3154 = vrcp.pop %v3123
    %v3155 = vmul.f32 %v3123, %v3154
    %v3156 = vsub.f32 1.0, %v3155
    %v3157 = vmul.f32 %v3154, %v3156
    %v3158 = vadd.f32 %v3154, %v3157
    %vm3159 = vweird.f32 %v3123
    %vm3160 = vweird.f32 %v3154
    %vm3161 = vmor %vm3159, %vm3160
    %v3162 = vsel %vm3161, %v3154, %v3158
    %v3163 = vand.u32 2147483647, %v3123
    %vm3164 = vcmp.eq.f32.partialorder %v3163, 8.507059e+37
    %v3165 = vand.u32 %v3123, 2147483648
    %v3166 = vor.u32 1.1754944e-38, %v3165
    %v3167 = vsel %vm3164, %v3166, %v3162
    %v3168 = vmul.f32 1.0, %v3167
    %v3169 = vtanh.pop %v3110
    %v3170 = vmul.f32 %v3153, %v2779
    %v3171 = vmul.f32 %v3138, %v3169
    %v3172 = vadd.f32 %v3170, %v3171
    %v3173 = vtanh.pop %v3172
    %v3174 = vmul.f32 %v3168, %v3173
    %v3175 = vmax.f32 %v2782, %v3174
    %3176 = vmatpush.msra.mxu0 %v317
    %3177 = vmatpush.msra.mxu0 %v313
    %3178 = vmatpush.msra.mxu0 %v309
    %3179 = vmatpush.msra.mxu0 %v305
    %3180 = vmatpush.msra.mxu0 %v301
    %3181 = vmatpush.msra.mxu0 %v297
    %3182 = vmatpush.msra.mxu0 %v293
    %3183 = vmatpush.msra.mxu0 %v289
    %3184 = vmatpush.msra.mxu0 %v285
    %3185 = vmatpush.msra.mxu0 %v281
    %3186 = vmatpush.msra.mxu0 %v277
    %3187 = vmatpush.msra.mxu0 %v273
    %3188 = vmatpush.msra.mxu0 %v269
    %3189 = vmatpush.msra.mxu0 %v265
    %3190 = vmatpush.msra.mxu0 %v261
    %3191 = vmatpush.msra.mxu0 %v257
    %3192 = vmatmul.f32.gmra.mxu0 %v3026
    %v3193 = vpop.f32.mrf.mxu0
    %v3194 = vadd.f32 0.0, %v3193
    %3195 = vdwg.mxu0
    %3196 = vmatpush.msra.mxu0 %v318
    %3197 = vmatpush.msra.mxu0 %v314
    %3198 = vmatpush.msra.mxu0 %v310
    %3199 = vmatpush.msra.mxu0 %v306
    %3200 = vmatpush.msra.mxu0 %v302
    %3201 = vmatpush.msra.mxu0 %v298
    %3202 = vmatpush.msra.mxu0 %v294
    %3203 = vmatpush.msra.mxu0 %v290
    %3204 = vmatpush.msra.mxu0 %v286
    %3205 = vmatpush.msra.mxu0 %v282
    %3206 = vmatpush.msra.mxu0 %v278
    %3207 = vmatpush.msra.mxu0 %v274
    %3208 = vmatpush.msra.mxu0 %v270
    %3209 = vmatpush.msra.mxu0 %v266
    %3210 = vmatpush.msra.mxu0 %v262
    %3211 = vmatpush.msra.mxu0 %v258
    %3212 = vmatmul.f32.gmra.mxu0 %v3026
    %v3213 = vpop.f32.mrf.mxu0
    %v3214 = vadd.f32 0.0, %v3213
    %3215 = vdwg.mxu0
    %3216 = vmatpush.msra.mxu0 %v319
    %3217 = vmatpush.msra.mxu0 %v315
    %3218 = vmatpush.msra.mxu0 %v311
    %3219 = vmatpush.msra.mxu0 %v307
    %3220 = vmatpush.msra.mxu0 %v303
    %3221 = vmatpush.msra.mxu0 %v299
    %3222 = vmatpush.msra.mxu0 %v295
    %3223 = vmatpush.msra.mxu0 %v291
    %3224 = vmatpush.msra.mxu0 %v287
    %3225 = vmatpush.msra.mxu0 %v283
    %3226 = vmatpush.msra.mxu0 %v279
    %3227 = vmatpush.msra.mxu0 %v275
    %3228 = vmatpush.msra.mxu0 %v271
    %3229 = vmatpush.msra.mxu0 %v267
    %3230 = vmatpush.msra.mxu0 %v263
    %3231 = vmatpush.msra.mxu0 %v259
    %3232 = vmatmul.f32.gmra.mxu0 %v3026
    %v3233 = vpop.f32.mrf.mxu0
    %v3234 = vadd.f32 0.0, %v3233
    %3235 = vdwg.mxu0
    %3236 = vmatpush.msra.mxu0 %v320
    %3237 = vmatpush.msra.mxu0 %v316
    %3238 = vmatpush.msra.mxu0 %v312
    %3239 = vmatpush.msra.mxu0 %v308
    %3240 = vmatpush.msra.mxu0 %v304
    %3241 = vmatpush.msra.mxu0 %v300
    %3242 = vmatpush.msra.mxu0 %v296
    %3243 = vmatpush.msra.mxu0 %v292
    %3244 = vmatpush.msra.mxu0 %v288
    %3245 = vmatpush.msra.mxu0 %v284
    %3246 = vmatpush.msra.mxu0 %v280
    %3247 = vmatpush.msra.mxu0 %v276
    %3248 = vmatpush.msra.mxu0 %v272
    %3249 = vmatpush.msra.mxu0 %v268
    %3250 = vmatpush.msra.mxu0 %v264
    %3251 = vmatpush.msra.mxu0 %v260
    %3252 = vmatmul.f32.gmra.mxu0 %v3026
    %v3253 = vpop.f32.mrf.mxu0
    %v3254 = vadd.f32 0.0, %v3253
    %3255 = vdwg.mxu0
    %v3260 = vrot.slane %v3194, 2
    %v3261 = vrot.slane %v3214, 2
    %v3262 = vrot.slane %v3234, 2
    %v3263 = vrot.slane %v3254, 2
    %v3268 = vadd.f32 %v186, %v3260
    %v3269 = vadd.f32 %v209, %v3261
    %v3270 = vadd.f32 %v232, %v3262
    %v3271 = vadd.f32 %v255, %v3263
    %v3272 = vxor.u32 %v3268, 2147483648
    %v3273 = vxor.u32 %v3269, 2147483648
    %v3274 = vxor.u32 %v3271, 2147483648
    %v3275 = vmul.f32 %v3272, 1.442695
    %v3276 = vpow.pop %v3275
    %v3277 = vmul.f32 %v3273, 1.442695
    %v3278 = vpow.pop %v3277
    %v3279 = vmul.f32 %v3274, 1.442695
    %v3280 = vpow.pop %v3279
    %v3281 = vadd.f32 %v3276, 1.0
    %v3282 = vadd.f32 %v3278, 1.0
    %v3283 = vadd.f32 %v3280, 1.0
    %v3284 = vrcp.pop %v3281
    %v3285 = vmul.f32 %v3281, %v3284
    %v3286 = vsub.f32 1.0, %v3285
    %v3287 = vmul.f32 %v3284, %v3286
    %v3288 = vadd.f32 %v3284, %v3287
    %vm3289 = vweird.f32 %v3281
    %vm3290 = vweird.f32 %v3284
    %vm3291 = vmor %vm3289, %vm3290
    %v3292 = vsel %vm3291, %v3284, %v3288
    %v3293 = vand.u32 2147483647, %v3281
    %vm3294 = vcmp.eq.f32.partialorder %v3293, 8.507059e+37
    %v3295 = vand.u32 %v3281, 2147483648
    %v3296 = vor.u32 1.1754944e-38, %v3295
    %v3297 = vsel %vm3294, %v3296, %v3292
    %v3298 = vmul.f32 1.0, %v3297
    %v3299 = vrcp.pop %v3282
    %v3300 = vmul.f32 %v3282, %v3299
    %v3301 = vsub.f32 1.0, %v3300
    %v3302 = vmul.f32 %v3299, %v3301
    %v3303 = vadd.f32 %v3299, %v3302
    %vm3304 = vweird.f32 %v3282
    %vm3305 = vweird.f32 %v3299
    %vm3306 = vmor %vm3304, %vm3305
    %v3307 = vsel %vm3306, %v3299, %v3303
    %v3308 = vand.u32 2147483647, %v3282
    %vm3309 = vcmp.eq.f32.partialorder %v3308, 8.507059e+37
    %v3310 = vand.u32 %v3282, 2147483648
    %v3311 = vor.u32 1.1754944e-38, %v3310
    %v3312 = vsel %vm3309, %v3311, %v3307
    %v3313 = vmul.f32 1.0, %v3312
    %v3314 = vrcp.pop %v3283
    %v3315 = vmul.f32 %v3283, %v3314
    %v3316 = vsub.f32 1.0, %v3315
    %v3317 = vmul.f32 %v3314, %v3316
    %v3318 = vadd.f32 %v3314, %v3317
    %vm3319 = vweird.f32 %v3283
    %vm3320 = vweird.f32 %v3314
    %vm3321 = vmor %vm3319, %vm3320
    %v3322 = vsel %vm3321, %v3314, %v3318
    %v3323 = vand.u32 2147483647, %v3283
    %vm3324 = vcmp.eq.f32.partialorder %v3323, 8.507059e+37
    %v3325 = vand.u32 %v3283, 2147483648
    %v3326 = vor.u32 1.1754944e-38, %v3325
    %v3327 = vsel %vm3324, %v3326, %v3322
    %v3328 = vmul.f32 1.0, %v3327
    %v3329 = vtanh.pop %v3270
    %v3331 = vrot.slane %v2942, 6
    %v3333 = vmul.f32 %v3313, %v3331
    %v3334 = vmul.f32 %v3298, %v3329
    %v3335 = vadd.f32 %v3333, %v3334
    %v3336 = vtanh.pop %v3335
    %v3337 = vmul.f32 %v3328, %v3336
    %3338 = vmatpush.msra.mxu0 %v445
    %3339 = vmatpush.msra.mxu0 %v441
    %3340 = vmatpush.msra.mxu0 %v437
    %3341 = vmatpush.msra.mxu0 %v433
    %3342 = vmatpush.msra.mxu0 %v429
    %3343 = vmatpush.msra.mxu0 %v425
    %3344 = vmatpush.msra.mxu0 %v421
    %3345 = vmatpush.msra.mxu0 %v417
    %3346 = vmatpush.msra.mxu0 %v413
    %3347 = vmatpush.msra.mxu0 %v409
    %3348 = vmatpush.msra.mxu0 %v405
    %3349 = vmatpush.msra.mxu0 %v401
    %3350 = vmatpush.msra.mxu0 %v397
    %3351 = vmatpush.msra.mxu0 %v393
    %3352 = vmatpush.msra.mxu0 %v389
    %3353 = vmatpush.msra.mxu0 %v385
    %3354 = vmatmul.f32.gmra.mxu0 %v3174
    %v3355 = vpop.f32.mrf.mxu0
    %v3356 = vadd.f32 0.0, %v3355
    %3357 = vdwg.mxu0
    %3358 = vmatpush.msra.mxu0 %v446
    %3359 = vmatpush.msra.mxu0 %v442
    %3360 = vmatpush.msra.mxu0 %v438
    %3361 = vmatpush.msra.mxu0 %v434
    %3362 = vmatpush.msra.mxu0 %v430
    %3363 = vmatpush.msra.mxu0 %v426
    %3364 = vmatpush.msra.mxu0 %v422
    %3365 = vmatpush.msra.mxu0 %v418
    %3366 = vmatpush.msra.mxu0 %v414
    %3367 = vmatpush.msra.mxu0 %v410
    %3368 = vmatpush.msra.mxu0 %v406
    %3369 = vmatpush.msra.mxu0 %v402
    %3370 = vmatpush.msra.mxu0 %v398
    %3371 = vmatpush.msra.mxu0 %v394
    %3372 = vmatpush.msra.mxu0 %v390
    %3373 = vmatpush.msra.mxu0 %v386
    %3374 = vmatmul.f32.gmra.mxu0 %v3174
    %v3375 = vpop.f32.mrf.mxu0
    %v3376 = vadd.f32 0.0, %v3375
    %3377 = vdwg.mxu0
    %3378 = vmatpush.msra.mxu0 %v447
    %3379 = vmatpush.msra.mxu0 %v443
    %3380 = vmatpush.msra.mxu0 %v439
    %3381 = vmatpush.msra.mxu0 %v435
    %3382 = vmatpush.msra.mxu0 %v431
    %3383 = vmatpush.msra.mxu0 %v427
    %3384 = vmatpush.msra.mxu0 %v423
    %3385 = vmatpush.msra.mxu0 %v419
    %3386 = vmatpush.msra.mxu0 %v415
    %3387 = vmatpush.msra.mxu0 %v411
    %3388 = vmatpush.msra.mxu0 %v407
    %3389 = vmatpush.msra.mxu0 %v403
    %3390 = vmatpush.msra.mxu0 %v399
    %3391 = vmatpush.msra.mxu0 %v395
    %3392 = vmatpush.msra.mxu0 %v391
    %3393 = vmatpush.msra.mxu0 %v387
    %3394 = vmatmul.f32.gmra.mxu0 %v3174
    %v3395 = vpop.f32.mrf.mxu0
    %v3396 = vadd.f32 0.0, %v3395
    %3397 = vdwg.mxu0
    %3398 = vmatpush.msra.mxu0 %v448
    %3399 = vmatpush.msra.mxu0 %v444
    %3400 = vmatpush.msra.mxu0 %v440
    %3401 = vmatpush.msra.mxu0 %v436
    %3402 = vmatpush.msra.mxu0 %v432
    %3403 = vmatpush.msra.mxu0 %v428
    %3404 = vmatpush.msra.mxu0 %v424
    %3405 = vmatpush.msra.mxu0 %v420
    %3406 = vmatpush.msra.mxu0 %v416
    %3407 = vmatpush.msra.mxu0 %v412
    %3408 = vmatpush.msra.mxu0 %v408
    %3409 = vmatpush.msra.mxu0 %v404
    %3410 = vmatpush.msra.mxu0 %v400
    %3411 = vmatpush.msra.mxu0 %v396
    %3412 = vmatpush.msra.mxu0 %v392
    %3413 = vmatpush.msra.mxu0 %v388
    %3414 = vmatmul.f32.gmra.mxu0 %v3174
    %v3415 = vpop.f32.mrf.mxu0
    %v3416 = vadd.f32 0.0, %v3415
    %3417 = vdwg.mxu0
    %v3419 = vrot.slane %v3337, 6
    %3421 = vmatpush.msra.mxu0 %v381
    %3422 = vmatpush.msra.mxu0 %v377
    %3423 = vmatpush.msra.mxu0 %v373
    %3424 = vmatpush.msra.mxu0 %v369
    %3425 = vmatpush.msra.mxu0 %v365
    %3426 = vmatpush.msra.mxu0 %v361
    %3427 = vmatpush.msra.mxu0 %v357
    %3428 = vmatpush.msra.mxu0 %v353
    %3429 = vmatpush.msra.mxu0 %v349
    %3430 = vmatpush.msra.mxu0 %v345
    %3431 = vmatpush.msra.mxu0 %v341
    %3432 = vmatpush.msra.mxu0 %v337
    %3433 = vmatpush.msra.mxu0 %v333
    %3434 = vmatpush.msra.mxu0 %v329
    %3435 = vmatpush.msra.mxu0 %v325
    %3436 = vmatpush.msra.mxu0 %v321
    %3437 = vmatmul.f32.gmra.mxu0 %v3419
    %v3438 = vpop.f32.mrf.mxu0
    %v3439 = vadd.f32 %v3356, %v3438
    %3440 = vdwg.mxu0
    %3441 = vmatpush.msra.mxu0 %v382
    %3442 = vmatpush.msra.mxu0 %v378
    %3443 = vmatpush.msra.mxu0 %v374
    %3444 = vmatpush.msra.mxu0 %v370
    %3445 = vmatpush.msra.mxu0 %v366
    %3446 = vmatpush.msra.mxu0 %v362
    %3447 = vmatpush.msra.mxu0 %v358
    %3448 = vmatpush.msra.mxu0 %v354
    %3449 = vmatpush.msra.mxu0 %v350
    %3450 = vmatpush.msra.mxu0 %v346
    %3451 = vmatpush.msra.mxu0 %v342
    %3452 = vmatpush.msra.mxu0 %v338
    %3453 = vmatpush.msra.mxu0 %v334
    %3454 = vmatpush.msra.mxu0 %v330
    %3455 = vmatpush.msra.mxu0 %v326
    %3456 = vmatpush.msra.mxu0 %v322
    %3457 = vmatmul.f32.gmra.mxu0 %v3419
    %v3458 = vpop.f32.mrf.mxu0
    %v3459 = vadd.f32 %v3376, %v3458
    %3460 = vdwg.mxu0
    %3461 = vmatpush.msra.mxu0 %v383
    %3462 = vmatpush.msra.mxu0 %v379
    %3463 = vmatpush.msra.mxu0 %v375
    %3464 = vmatpush.msra.mxu0 %v371
    %3465 = vmatpush.msra.mxu0 %v367
    %3466 = vmatpush.msra.mxu0 %v363
    %3467 = vmatpush.msra.mxu0 %v359
    %3468 = vmatpush.msra.mxu0 %v355
    %3469 = vmatpush.msra.mxu0 %v351
    %3470 = vmatpush.msra.mxu0 %v347
    %3471 = vmatpush.msra.mxu0 %v343
    %3472 = vmatpush.msra.mxu0 %v339
    %3473 = vmatpush.msra.mxu0 %v335
    %3474 = vmatpush.msra.mxu0 %v331
    %3475 = vmatpush.msra.mxu0 %v327
    %3476 = vmatpush.msra.mxu0 %v323
    %3477 = vmatmul.f32.gmra.mxu0 %v3419
    %v3478 = vpop.f32.mrf.mxu0
    %v3479 = vadd.f32 %v3396, %v3478
    %3480 = vdwg.mxu0
    %3481 = vmatpush.msra.mxu0 %v384
    %3482 = vmatpush.msra.mxu0 %v380
    %3483 = vmatpush.msra.mxu0 %v376
    %3484 = vmatpush.msra.mxu0 %v372
    %3485 = vmatpush.msra.mxu0 %v368
    %3486 = vmatpush.msra.mxu0 %v364
    %3487 = vmatpush.msra.mxu0 %v360
    %3488 = vmatpush.msra.mxu0 %v356
    %3489 = vmatpush.msra.mxu0 %v352
    %3490 = vmatpush.msra.mxu0 %v348
    %3491 = vmatpush.msra.mxu0 %v344
    %3492 = vmatpush.msra.mxu0 %v340
    %3493 = vmatpush.msra.mxu0 %v336
    %3494 = vmatpush.msra.mxu0 %v332
    %3495 = vmatpush.msra.mxu0 %v328
    %3496 = vmatpush.msra.mxu0 %v324
    %3497 = vmatmul.f32.gmra.mxu0 %v3419
    %v3498 = vpop.f32.mrf.mxu0
    %v3499 = vadd.f32 %v3416, %v3498
    %3500 = vdwg.mxu0
    %v3501 = vadd.f32 %v3439, %v451
    %v3502 = vadd.f32 %v3459, %v452
    %v3503 = vadd.f32 %v3479, %v453
    %v3504 = vadd.f32 %v3499, %v454
    %v3505 = vxor.u32 %v3501, 2147483648
    %v3506 = vxor.u32 %v3502, 2147483648
    %v3507 = vxor.u32 %v3504, 2147483648
    %v3508 = vmul.f32 %v3505, 1.442695
    %v3509 = vpow.pop %v3508
    %v3510 = vmul.f32 %v3506, 1.442695
    %v3511 = vpow.pop %v3510
    %v3512 = vmul.f32 %v3507, 1.442695
    %v3513 = vpow.pop %v3512
    %v3514 = vadd.f32 %v3509, 1.0
    %v3515 = vadd.f32 %v3511, 1.0
    %v3516 = vadd.f32 %v3513, 1.0
    %v3517 = vrcp.pop %v3514
    %v3518 = vmul.f32 %v3514, %v3517
    %v3519 = vsub.f32 1.0, %v3518
    %v3520 = vmul.f32 %v3517, %v3519
    %v3521 = vadd.f32 %v3517, %v3520
    %vm3522 = vweird.f32 %v3514
    %vm3523 = vweird.f32 %v3517
    %vm3524 = vmor %vm3522, %vm3523
    %v3525 = vsel %vm3524, %v3517, %v3521
    %v3526 = vand.u32 2147483647, %v3514
    %vm3527 = vcmp.eq.f32.partialorder %v3526, 8.507059e+37
    %v3528 = vand.u32 %v3514, 2147483648
    %v3529 = vor.u32 1.1754944e-38, %v3528
    %v3530 = vsel %vm3527, %v3529, %v3525
    %v3531 = vmul.f32 1.0, %v3530
    %v3532 = vrcp.pop %v3515
    %v3533 = vmul.f32 %v3515, %v3532
    %v3534 = vsub.f32 1.0, %v3533
    %v3535 = vmul.f32 %v3532, %v3534
    %v3536 = vadd.f32 %v3532, %v3535
    %vm3537 = vweird.f32 %v3515
    %vm3538 = vweird.f32 %v3532
    %vm3539 = vmor %vm3537, %vm3538
    %v3540 = vsel %vm3539, %v3532, %v3536
    %v3541 = vand.u32 2147483647, %v3515
    %vm3542 = vcmp.eq.f32.partialorder %v3541, 8.507059e+37
    %v3543 = vand.u32 %v3515, 2147483648
    %v3544 = vor.u32 1.1754944e-38, %v3543
    %v3545 = vsel %vm3542, %v3544, %v3540
    %v3546 = vmul.f32 1.0, %v3545
    %v3547 = vrcp.pop %v3516
    %v3548 = vmul.f32 %v3516, %v3547
    %v3549 = vsub.f32 1.0, %v3548
    %v3550 = vmul.f32 %v3547, %v3549
    %v3551 = vadd.f32 %v3547, %v3550
    %vm3552 = vweird.f32 %v3516
    %vm3553 = vweird.f32 %v3547
    %vm3554 = vmor %vm3552, %vm3553
    %v3555 = vsel %vm3554, %v3547, %v3551
    %v3556 = vand.u32 2147483647, %v3516
    %vm3557 = vcmp.eq.f32.partialorder %v3556, 8.507059e+37
    %v3558 = vand.u32 %v3516, 2147483648
    %v3559 = vor.u32 1.1754944e-38, %v3558
    %v3560 = vsel %vm3557, %v3559, %v3555
    %v3561 = vmul.f32 1.0, %v3560
    %v3562 = vtanh.pop %v3503
    %v3563 = vmul.f32 %v3546, %v3172
    %v3564 = vmul.f32 %v3531, %v3562
    %v3565 = vadd.f32 %v3563, %v3564
    %v3566 = vtanh.pop %v3565
    %v3567 = vmul.f32 %v3561, %v3566
    %v3568 = vmax.f32 %v3175, %v3567
    %v3569 = vld [vmem:[%s8] sm:$0xff]
    %v3570 = vld [vmem:[%s8 + $0x8] sm:$0xff]
    %v3571 = vld [vmem:[%s8 + $0x10] sm:$0xff]
    %v3572 = vld [vmem:[%s8 + $0x18] sm:$0xff]
    %v3573 = vld [vmem:[%s8 + $0x20] sm:$0xff]
    %v3574 = vld [vmem:[%s8 + $0x28] sm:$0xff]
    %v3575 = vld [vmem:[%s8 + $0x30] sm:$0xff]
    %v3576 = vld [vmem:[%s8 + $0x38] sm:$0xff]
    %v3577 = vld [vmem:[%s8 + $0x40] sm:$0xff]
    %v3578 = vld [vmem:[%s8 + $0x48] sm:$0xff]
    %v3579 = vld [vmem:[%s8 + $0x50] sm:$0xff]
    %v3580 = vld [vmem:[%s8 + $0x58] sm:$0xff]
    %v3581 = vld [vmem:[%s8 + $0x60] sm:$0xff]
    %v3582 = vld [vmem:[%s8 + $0x68] sm:$0xff]
    %v3583 = vld [vmem:[%s8 + $0x70] sm:$0xff]
    %v3584 = vld [vmem:[%s8 + $0x78] sm:$0xff]
    %v3585 = vld [vmem:[%s9] sm:$0x1]
    %v3587 = vperm.slane %v3585, 0
    %3589 = vmatpush.msra.mxu0 %v3584
    %3590 = vmatpush.msra.mxu0 %v3583
    %3591 = vmatpush.msra.mxu0 %v3582
    %3592 = vmatpush.msra.mxu0 %v3581
    %3593 = vmatpush.msra.mxu0 %v3580
    %3594 = vmatpush.msra.mxu0 %v3579
    %3595 = vmatpush.msra.mxu0 %v3578
    %3596 = vmatpush.msra.mxu0 %v3577
    %3597 = vmatpush.msra.mxu0 %v3576
    %3598 = vmatpush.msra.mxu0 %v3575
    %3599 = vmatpush.msra.mxu0 %v3574
    %3600 = vmatpush.msra.mxu0 %v3573
    %3601 = vmatpush.msra.mxu0 %v3572
    %3602 = vmatpush.msra.mxu0 %v3571
    %3603 = vmatpush.msra.mxu0 %v3570
    %3604 = vmatpush.msra.mxu0 %v3569
    %3605 = vmatmul.f32.gmra.mxu0 %v3568
    %v3606 = vpop.f32.mrf.mxu0
    %v3607 = vadd.f32 %v3587, %v3606
    %3608 = vdwg.mxu0
    %vm3609 = vcmask 74752
    %3610 = vst.msk [vmem:[#allocation8] sm:$0x3] %vm3609, %v3607
    // Predicated region
    $region54: #{lstm_model_forward.1} parent=1 // pred_check
      _
    $region55: #{lstm_model_forward.1} parent=1 // pred_check_branch
      %3612 = sbr.rel (0) target = $region57
    $region56: #{lstm_model_forward.1} parent=1 // pred_region
      %3614 = vsyncadd [#allocation4], 0
      %s3616 = sshll.u32 [#allocation8], 4
      %s3617 = int_to_ptr.vmem [resolvable:$true] %s3616
      %s3618 = sshll.u32 %s10, 4
      %s3619 = int_to_ptr.hbm [resolvable:$true] %s3618
      %3621 = dma.vmem_to_hbm [thread:$0]  %s3617, 32, %s3619, [#allocation4]
    $region57: #{lstm_model_forward.1} parent=1 // pred_fallthru
      _
    // Predicated region
    $region58: #{lstm_model_forward.1} parent=1 // pred_check
      _
    $region59: #{lstm_model_forward.1} parent=1 // pred_check_branch
      %3623 = sbr.rel (0) target = $region61
    $region60: #{lstm_model_forward.1} parent=1 // pred_region
      %3625 = dma.done [#allocation4], 32
    $region61: #{lstm_model_forward.1} parent=1 // pred_fallthru
      _
    %3626 = vsyncpa [#allocation3], 1
    %3627 = vsyncpa [#allocation6], 1
    %3628 = vsyncpa [#allocation4], 1

</llo_original>
